<compile_context>
chip_gen: v6e
topology: v6e:2x2x1
jax: 0.10.0
libtpu: 0.0.40
codegen_flags: <defaults>
</compile_context>

<pallas_src>
import math
import functools

import numpy as np
import jax
import jax.numpy as jnp
from jax import lax
from jax.experimental import pallas as pl
from jax.experimental.pallas import tpu as pltpu


def _round_up(x, m):
    return ((x + m - 1) // m) * m


def _tpu_vmem_capacity_bytes():
    try:
        info = pltpu.get_tpu_info()
        for name in ("vmem_capacity_bytes", "vmem_size_bytes", "vmem_bytes"):
            cap = getattr(info, name, None)
            if cap:
                return int(cap)
    except Exception:
        pass
    return 128 * 1024 * 1024


def _device_kind():
    try:
        return jax.devices()[0].device_kind.lower()
    except Exception:
        return ""


# ---------------------------------------------------------------------------
# Pallas kernel: one (batch element, head) grid step.
# ---------------------------------------------------------------------------
def _transformer_kernel(x_ref, cos_ref, sin_ref,
                        wqkv_ref, bqkv_ref, wout_ref, bout_ref,
                        w1x_ref, w1m_ref, b1_ref, g_ref, beta_ref,
                        w2_ref, b2_ref,
                        o_ref,
                        ctx_ref, q_scr, kT_scr, v_scr,
                        *, num_heads, head_dim, q_tile, n_valid, exp_bf16):
    D = head_dim
    H = num_heads
    h_idx = pl.program_id(1)

    Npad = x_ref.shape[1]
    n_row_blocks = Npad // q_tile
    x_bf = x_ref[0].astype(jnp.bfloat16)                                  # (Npad, E)

    # --- fused per-head projection: columns are [q | rot(q) | k | rot(k) | v | 0-pad] -
    # (q columns pre-scaled by 1/sqrt(D), rotate_half folded into the weights)
    proj = jnp.dot(x_bf, wqkv_ref[0],
                   preferred_element_type=jnp.float32) + bqkv_ref[0]      # (Npad, Wpad)
    cos = cos_ref[0]                                                      # (Npad, D)
    sin = sin_ref[0]
    q = proj[:, 0:D] * cos + proj[:, D:2 * D] * sin
    k = proj[:, 2 * D:3 * D] * cos + proj[:, 3 * D:4 * D] * sin
    q_scr[...] = q.astype(jnp.bfloat16)
    kT_scr[...] = k.T.astype(jnp.bfloat16)        # transpose hoisted: once per head
    v_scr[...] = proj[:, 4 * D:5 * D].astype(jnp.bfloat16)

    # mask bias for zero-padded keys (N padded up to a multiple of 128 in the wrapper)
    if n_valid < Npad:
        key_ids = lax.broadcasted_iota(jnp.int32, (1, Npad), 1)
        key_bias = jnp.where(key_ids < n_valid, 0.0, -1e30).astype(jnp.float32)
    else:
        key_bias = None

    # --- attention over query row tiles (full-key softmax per row block) --------------
    def attn_step(qi, carry):
        lo = pl.multiple_of(qi * q_tile, q_tile)
        qb = q_scr[pl.ds(lo, q_tile), :]                                  # (tq, D) bf16
        s = jnp.dot(qb, kT_scr[...],
                    preferred_element_type=jnp.float32)                   # (tq, Npad)
        if key_bias is not None:
            s = s + key_bias
        m = jnp.max(s, axis=-1, keepdims=True)
        sm = s - m                                                        # f32
        if exp_bf16:
            # bf16 exp (v6e/v7x EUP); row-max / sum / reciprocal stay f32
            p_bf = jnp.exp(sm.astype(jnp.bfloat16))
            denom = jnp.sum(p_bf, axis=-1, keepdims=True, dtype=jnp.float32)
        else:
            p = jnp.exp(sm)
            denom = jnp.sum(p, axis=-1, keepdims=True)
            p_bf = p.astype(jnp.bfloat16)
        ctx = jnp.dot(p_bf, v_scr[...], preferred_element_type=jnp.float32)
        ctx = ctx * pl.reciprocal(denom)          # exact; normalisation after PV matmul
        ctx_ref[h_idx, pl.ds(lo, q_tile), :] = ctx.astype(jnp.bfloat16)
        return carry

    lax.fori_loop(0, n_row_blocks, attn_step, 0)

    # --- last head: fused out_proj (K=E) + FFN + LayerNorm + GELU + residual ----------
    # Row-tiled epilogue so no full (N, 2E) f32 intermediate is ever live.
    @pl.when(h_idx == H - 1)
    def _():
        wout = wout_ref[...]                      # (E, E) bf16
        bout = bout_ref[...]                      # (1, E) f32
        w1x = w1x_ref[...]                        # (E, 2E) bf16
        w1m = w1m_ref[...]                        # (E, 2E) bf16
        b1 = b1_ref[...]
        g = g_ref[...]
        beta = beta_ref[...]
        w2 = w2_ref[...]                          # (2E, E) bf16
        b2 = b2_ref[...]

        def ffn_step(ri, carry):
            lo = pl.multiple_of(ri * q_tile, q_tile)
            xt = x_ref[0, pl.ds(lo, q_tile), :]                           # (tq, E) f32
            # static per-head slices -> lane-static concat into (tq, E) bf16
            ctx_t = jnp.concatenate(
                [ctx_ref[hh, pl.ds(lo, q_tile), :] for hh in range(H)], axis=-1)
            msg = jnp.dot(ctx_t, wout,
                          preferred_element_type=jnp.float32) + bout      # (tq, E) f32
            h1 = (jnp.dot(xt.astype(jnp.bfloat16), w1x,
                          preferred_element_type=jnp.float32)
                  + jnp.dot(msg.astype(jnp.bfloat16), w1m,
                            preferred_element_type=jnp.float32)
                  + b1)                                                   # (tq, 2E) f32
            mu = jnp.mean(h1, axis=-1, keepdims=True)
            var = jnp.mean(jnp.square(h1 - mu), axis=-1, keepdims=True)
            hn = (h1 - mu) * lax.rsqrt(var + 1e-5) * g + beta
            # exact-erf GELU to match torch nn.GELU() default
            ge = 0.5 * hn * (1.0 + lax.erf(hn * (1.0 / math.sqrt(2.0))))
            out = jnp.dot(ge.astype(jnp.bfloat16), w2,
                          preferred_element_type=jnp.float32) + b2
            o_ref[0, pl.ds(lo, q_tile), :] = (xt + out).astype(o_ref.dtype)
            return carry

        lax.fori_loop(0, n_row_blocks, ffn_step, 0)


# ---------------------------------------------------------------------------
# Wrapper: pallas_call with (batch, head) grid
# ---------------------------------------------------------------------------
def _transformer_block_pallas(x, cos, sin, kp, n_valid):
    B2, Npad, E = x.shape
    H = kp["num_heads"]
    D = E // H
    Wpad = kp["wqkv"].shape[-1]

    # generation-aware budgets
    vmem_cap = _tpu_vmem_capacity_bytes()
    kind = _device_kind()
    small_vmem = (vmem_cap <= 64 * 1024 * 1024) or ("v7" in kind)   # v7x-class part
    vmem_limit = (44 if small_vmem else 100) * 1024 * 1024
    exp_bf16 = "v5" not in kind                    # bf16 EUP only on v6e / v7x

    # q-tile: biggest of {512,256,128} that divides Npad, capped on small-VMEM parts
    cap = 256 if (small_vmem and Npad >= 2048) else 512
    q_tile = 128
    for cand in (512, 256, 128):
        if cand <= cap and Npad % cand == 0:
            q_tile = cand
            break

    kernel = functools.partial(_transformer_kernel, num_heads=H, head_dim=D,
                               q_tile=q_tile, n_valid=n_valid, exp_bf16=exp_bf16)

    def const_spec(a):
        return pl.BlockSpec(a.shape, lambda b, h, _nd=a.ndim: (0,) * _nd)

    seq_spec = pl.BlockSpec((1, Npad, E), lambda b, h: (b, 0, 0))
    rope_spec = pl.BlockSpec((1, Npad, D), lambda b, h: (b, 0, 0))
    head_w_spec = pl.BlockSpec((1, E, Wpad), lambda b, h: (h, 0, 0))
    head_b_spec = pl.BlockSpec((1, 1, Wpad), lambda b, h: (h, 0, 0))

    # NOTE: pipeline_mode=pl.Buffered(1) on the constant specs would recover a little
    # more VMEM headroom on v7x; omitted here to keep the lowering maximally portable.
    in_specs = [
        seq_spec,                          # x
        rope_spec,                         # cos (per head_dim)
        rope_spec,                         # sin
        head_w_spec,                       # fused per-head qkv(+rot) weights
        head_b_spec,                       # fused per-head qkv(+rot) bias
        const_spec(kp["wout"]),            # full (E, E) out_proj weight
        const_spec(kp["bout"]),
        const_spec(kp["w1x"]), const_spec(kp["w1m"]), const_spec(kp["b1"]),
        const_spec(kp["ln_g"]), const_spec(kp["ln_b"]),
        const_spec(kp["w2"]), const_spec(kp["b2"]),
    ]

    scratch_shapes = [
        pltpu.VMEM((H, Npad, D), jnp.bfloat16),    # per-head context (bf16, not f32)
        pltpu.VMEM((Npad, D), jnp.bfloat16),       # q (post-RoPE, pre-scaled)
        pltpu.VMEM((D, Npad), jnp.bfloat16),       # k^T (transpose hoisted)
        pltpu.VMEM((Npad, D), jnp.bfloat16),       # v
    ]

    return pl.pallas_call(
        kernel,
        out_shape=jax.ShapeDtypeStruct((B2, Npad, E), x.dtype),
        grid_spec=pltpu.PrefetchScalarGridSpec(
            num_scalar_prefetch=0,
            grid=(B2, H),
            in_specs=in_specs,
            out_specs=seq_spec,
            scratch_shapes=scratch_shapes,
        ),
        compiler_params=pltpu.CompilerParams(
            dimension_semantics=("parallel", "arbitrary"),
            vmem_limit_bytes=vmem_limit,
        ),
    )(x, cos, sin,
      kp["wqkv"], kp["bqkv"], kp["wout"], kp["bout"],
      kp["w1x"], kp["w1m"], kp["b1"], kp["ln_g"], kp["ln_b"],
      kp["w2"], kp["b2"])


# ---------------------------------------------------------------------------
# Parameter construction (deterministic, torch-layout)
# ---------------------------------------------------------------------------
def init_params(key, E, H):
    ks = jax.random.split(key, 4)

    def lin(k, out_f, in_f):
        kw, kb = jax.random.split(k)
        bound = 1.0 / math.sqrt(in_f)
        w = jax.random.uniform(kw, (out_f, in_f), jnp.float32, -bound, bound)
        b = jax.random.uniform(kb, (out_f,), jnp.float32, -bound, bound)
        return w, b

    Wqkv_w, Wqkv_b = lin(ks[0], 3 * E, E)
    out_w, out_b = lin(ks[1], E, E)
    f1_w, f1_b = lin(ks[2], 2 * E, 2 * E)
    f2_w, f2_b = lin(ks[3], E, 2 * E)
    return dict(
        Wqkv_w=Wqkv_w, Wqkv_b=Wqkv_b,
        out_w=out_w, out_b=out_b,
        ffn1_w=f1_w, ffn1_b=f1_b,
        ln_g=jnp.ones((2 * E,), jnp.float32),
        ln_b=jnp.zeros((2 * E,), jnp.float32),
        ffn2_w=f2_w, ffn2_b=f2_b,
    )


# ---------------------------------------------------------------------------
# One-time kernel-layout prep (hoisted out of the forward pass and cached)
# ---------------------------------------------------------------------------
def prep_kernel_params(p, E, H):
    D = E // H
    scale = 1.0 / math.sqrt(D)
    Wpad = _round_up(5 * D, 128)       # lane-dense fused projection width

    # rotate_half as a right-multiply (D, D) permutation-with-sign matrix
    R = np.zeros((D, D), np.float32)
    for i in range(D // 2):
        R[2 * i + 1, 2 * i] = -1.0
        R[2 * i, 2 * i + 1] = 1.0

    Wqkv = np.asarray(p["Wqkv_w"], np.float32)      # (3E, E)  torch layout
    bqkv = np.asarray(p["Wqkv_b"], np.float32)      # (3E,)

    w_heads = np.zeros((H, E, Wpad), np.float32)
    b_heads = np.zeros((H, 1, Wpad), np.float32)
    for h in range(H):
        # torch output channel o = h*(3D) + 3d + c   (from unflatten(-1, (H, D, 3)))
        rows_q = [h * 3 * D + 3 * d + 0 for d in range(D)]
        rows_k = [h * 3 * D + 3 * d + 1 for d in range(D)]
        rows_v = [h * 3 * D + 3 * d + 2 for d in range(D)]
        wq = Wqkv[rows_q, :].T * scale              # fold 1/sqrt(D) into q
        wk = Wqkv[rows_k, :].T
        wv = Wqkv[rows_v, :].T
        bq = bqkv[rows_q] * scale
        bk = bqkv[rows_k]
        bv = bqkv[rows_v]
        # [q | rotate_half(q) | k | rotate_half(k) | v | 0-pad]
        w_heads[h, :, :5 * D] = np.concatenate([wq, wq @ R, wk, wk @ R, wv], axis=1)
        b_heads[h, 0, :5 * D] = np.concatenate([bq, bq @ R, bk, bk @ R, bv])

    W1T = np.asarray(p["ffn1_w"], np.float32).T     # (2E, 2E)

    return dict(
        num_heads=H,
        wqkv=jnp.asarray(w_heads, jnp.bfloat16),                            # (H, E, Wpad)
        bqkv=jnp.asarray(b_heads, jnp.float32),                             # (H, 1, Wpad)
        wout=jnp.asarray(np.asarray(p["out_w"], np.float32).T, jnp.bfloat16),  # (E, E)
        bout=jnp.asarray(np.asarray(p["out_b"])[None, :], jnp.float32),     # (1, E)
        w1x=jnp.asarray(W1T[:E, :], jnp.bfloat16),                          # (E, 2E)
        w1m=jnp.asarray(W1T[E:, :], jnp.bfloat16),                          # (E, 2E)
        b1=jnp.asarray(np.asarray(p["ffn1_b"])[None, :], jnp.float32),
        ln_g=jnp.asarray(np.asarray(p["ln_g"])[None, :], jnp.float32),
        ln_b=jnp.asarray(np.asarray(p["ln_b"])[None, :], jnp.float32),
        w2=jnp.asarray(np.asarray(p["ffn2_w"]).T, jnp.bfloat16),            # (2E, E)
        b2=jnp.asarray(np.asarray(p["ffn2_b"])[None, :], jnp.float32),
    )


def encoding_to_cos_sin(enc, B, N, D):
    if enc is None:
        return (jnp.ones((B, N, D), jnp.float32),
                jnp.zeros((B, N, D), jnp.float32))
    return enc[0].reshape(B, N, D), enc[1].reshape(B, N, D)


def transformer_forward(x0, x1, encoding0, encoding1, kp):
    """Pallas equivalent of Transformer.forward(x0, x1, encoding0, encoding1)."""
    B, N, E = x0.shape
    H = kp["num_heads"]
    D = E // H
    Npad = _round_up(N, 128)

    cos0, sin0 = encoding_to_cos_sin(encoding0, B, N, D)
    cos1, sin1 = encoding_to_cos_sin(encoding1, B, N, D)
    # fuse x0/x1 into one stacked batch -> one pallas_call, 2B parallel grid steps
    x = jnp.concatenate([x0, x1], axis=0)
    cos = jnp.concatenate([cos0, cos1], axis=0)
    sin = jnp.concatenate([sin0, sin1], axis=0)

    if Npad != N:   # pad N to a multiple of 128; padded keys masked inside the kernel
        pad = ((0, 0), (0, Npad - N), (0, 0))
        x = jnp.pad(x, pad)
        cos = jnp.pad(cos, pad, constant_values=1.0)
        sin = jnp.pad(sin, pad)

    y = _transformer_block_pallas(x, cos, sin, kp, n_valid=N)
    y = y[:, :N, :]
    return y[:B], y[B:]


# ---------------------------------------------------------------------------
# Pure-JAX f32 reference mirroring the PyTorch semantics (correctness check)
# ---------------------------------------------------------------------------
def _reference_forward(x, enc, p, H):
    B, N, E = x.shape
    D = E // H
    qkv = x @ p["Wqkv_w"].T + p["Wqkv_b"]                      # (B, N, 3E)
    qkv = qkv.reshape(B, N, H, D, 3).transpose(0, 2, 1, 3, 4)  # (B, H, N, D, 3)
    q, k, v = qkv[..., 0], qkv[..., 1], qkv[..., 2]

    def rot_half(t):
        shp = t.shape
        t2 = t.reshape(shp[:-1] + (shp[-1] // 2, 2))
        return jnp.stack((-t2[..., 1], t2[..., 0]), axis=-1).reshape(shp)

    if enc is not None:
        cos, sin = enc[0], enc[1]                              # (B, 1, N, D)
        q = q * cos + rot_half(q) * sin
        k = k * cos + rot_half(k) * sin

    s = jnp.einsum("bhid,bhjd->bhij", q, k) / math.sqrt(D)
    a = jax.nn.softmax(s, axis=-1)
    ctx = jnp.einsum("bhij,bhjd->bhid", a, v)
    ctx = ctx.transpose(0, 2, 1, 3).reshape(B, N, E)
    msg = ctx @ p["out_w"].T + p["out_b"]
    cat = jnp.concatenate([x, msg], axis=-1)
    h1 = cat @ p["ffn1_w"].T + p["ffn1_b"]
    mu = h1.mean(-1, keepdims=True)
    var = jnp.square(h1 - mu).mean(-1, keepdims=True)
    hn = (h1 - mu) * jax.lax.rsqrt(var + 1e-5) * p["ln_g"] + p["ln_b"]
    ge = 0.5 * hn * (1.0 + jax.lax.erf(hn / math.sqrt(2.0)))
    return x + ge @ p["ffn2_w"].T + p["ffn2_b"]


# ---------------------------------------------------------------------------
if __name__ == "__main__":
    B, N, E, H = 2, 8, 32, 2
    D = E // H

    key = jax.random.PRNGKey(0)
    k_par, k_x0, k_x1, k_e0, k_e1 = jax.random.split(key, 5)

    params = init_params(k_par, E, H)
    kp = prep_kernel_params(params, E, H)      # hoisted + cached (one-time prep)

    x0 = jax.random.normal(k_x0, (B, N, E), jnp.float32)
    x1 = jax.random.normal(k_x1, (B, N, E), jnp.float32)
    phase0 = jax.random.uniform(k_e0, (B, 1, N, D), jnp.float32, 0.0, 2.0 * math.pi)
    phase1 = jax.random.uniform(k_e1, (B, 1, N, D), jnp.float32, 0.0, 2.0 * math.pi)
    encoding0 = jnp.stack([jnp.cos(phase0), jnp.sin(phase0)], axis=0)  # (2, B, 1, N, D)
    encoding1 = jnp.stack([jnp.cos(phase1), jnp.sin(phase1)], axis=0)

    y0, y1 = transformer_forward(x0, x1, encoding0, encoding1, kp)
    jax.block_until_ready((y0, y1))

    r0 = _reference_forward(x0, encoding0, params, H)
    r1 = _reference_forward(x1, encoding1, params, H)

    # bf16 matmuls / bf16 exp (f32 accumulation) vs f32 reference -> loosened tolerance.
    assert np.allclose(np.asarray(y0), np.asarray(r0), atol=5e-2, rtol=5e-2), "x0 mismatch"
    assert np.allclose(np.asarray(y1), np.asarray(r1), atol=5e-2, rtol=5e-2), "x1 mismatch"

    print("KERNEL_OK")
</pallas_src>

<mosaic_0001>
module attributes {stable_mosaic.version = 11 : i64} {
  func.func @_transformer_kernel(%arg0: i32, %arg1: i32, %arg2: memref<1x128x32xf32, #tpu.memory_space<vmem>>, %arg3: memref<1x128x16xf32, #tpu.memory_space<vmem>>, %arg4: memref<1x128x16xf32, #tpu.memory_space<vmem>>, %arg5: memref<1x32x128xbf16, #tpu.memory_space<vmem>>, %arg6: memref<1x1x128xf32, #tpu.memory_space<vmem>>, %arg7: memref<32x32xbf16, #tpu.memory_space<vmem>>, %arg8: memref<1x32xf32, #tpu.memory_space<vmem>>, %arg9: memref<32x64xbf16, #tpu.memory_space<vmem>>, %arg10: memref<32x64xbf16, #tpu.memory_space<vmem>>, %arg11: memref<1x64xf32, #tpu.memory_space<vmem>>, %arg12: memref<1x64xf32, #tpu.memory_space<vmem>>, %arg13: memref<1x64xf32, #tpu.memory_space<vmem>>, %arg14: memref<64x32xbf16, #tpu.memory_space<vmem>>, %arg15: memref<1x32xf32, #tpu.memory_space<vmem>>, %arg16: memref<1x128x32xf32, #tpu.memory_space<vmem>>, %arg17: memref<2x128x16xbf16, #tpu.memory_space<vmem>>, %arg18: memref<128x16xbf16, #tpu.memory_space<vmem>>, %arg19: memref<16x128xbf16, #tpu.memory_space<vmem>>, %arg20: memref<128x16xbf16, #tpu.memory_space<vmem>>) attributes {dimension_semantics = [#tpu.dimension_semantics<parallel>, #tpu.dimension_semantics<arbitrary>], iteration_bounds = array<i64: 4, 2>, scalar_prefetch = 0 : i64, scratch_operands = 4 : i64, tpu.core_type = #tpu.core_type<tc>, window_params = [{transform_indices = @transform_0, window_bounds = array<i64: 1, 128, 32>}, {transform_indices = @transform_1, window_bounds = array<i64: 1, 128, 16>}, {transform_indices = @transform_2, window_bounds = array<i64: 1, 128, 16>}, {transform_indices = @transform_3, window_bounds = array<i64: 1, 32, 128>}, {transform_indices = @transform_4, window_bounds = array<i64: 1, 1, 128>}, {pipeline_mode = #tpu.pipeline_mode<synchronous>, transform_indices = @transform_5, window_bounds = array<i64: 32, 32>}, {pipeline_mode = #tpu.pipeline_mode<synchronous>, transform_indices = @transform_6, window_bounds = array<i64: 1, 32>}, {pipeline_mode = #tpu.pipeline_mode<synchronous>, transform_indices = @transform_7, window_bounds = array<i64: 32, 64>}, {pipeline_mode = #tpu.pipeline_mode<synchronous>, transform_indices = @transform_8, window_bounds = array<i64: 32, 64>}, {pipeline_mode = #tpu.pipeline_mode<synchronous>, transform_indices = @transform_9, window_bounds = array<i64: 1, 64>}, {pipeline_mode = #tpu.pipeline_mode<synchronous>, transform_indices = @transform_10, window_bounds = array<i64: 1, 64>}, {pipeline_mode = #tpu.pipeline_mode<synchronous>, transform_indices = @transform_11, window_bounds = array<i64: 1, 64>}, {pipeline_mode = #tpu.pipeline_mode<synchronous>, transform_indices = @transform_12, window_bounds = array<i64: 64, 32>}, {pipeline_mode = #tpu.pipeline_mode<synchronous>, transform_indices = @transform_13, window_bounds = array<i64: 1, 32>}, {transform_indices = @transform_14, window_bounds = array<i64: 1, 128, 32>}]} {
    %c0 = arith.constant 0 : index
    %c0_0 = arith.constant 0 : index
    %c0_1 = arith.constant 0 : index
    %0 = vector.load %arg2[%c0, %c0_0, %c0_1] : memref<1x128x32xf32, #tpu.memory_space<vmem>>, vector<1x128x32xf32>
    %1 = vector.shape_cast %0 : vector<1x128x32xf32> to vector<128x32xf32>
    %2 = arith.truncf %1 : vector<128x32xf32> to vector<128x32xbf16>
    %c0_2 = arith.constant 0 : index
    %c0_3 = arith.constant 0 : index
    %c0_4 = arith.constant 0 : index
    %3 = vector.load %arg5[%c0_2, %c0_3, %c0_4] : memref<1x32x128xbf16, #tpu.memory_space<vmem>>, vector<1x32x128xbf16>
    %4 = vector.shape_cast %3 : vector<1x32x128xbf16> to vector<32x128xbf16>
    %cst = arith.constant dense<0.000000e+00> : vector<128x128xf32>
    %5 = tpu.matmul %2, %4, %cst {dimension_numbers = #tpu.dot_dimension_numbers<[1], [0], [0], [1], [0, 0, 1, 1], [], []>} : vector<128x32xbf16>, vector<32x128xbf16>, vector<128x128xf32> -> vector<128x128xf32>
    %c0_5 = arith.constant 0 : index
    %c0_6 = arith.constant 0 : index
    %c0_7 = arith.constant 0 : index
    %6 = vector.load %arg6[%c0_5, %c0_6, %c0_7] : memref<1x1x128xf32, #tpu.memory_space<vmem>>, vector<1x1x128xf32>
    %7 = vector.shape_cast %6 : vector<1x1x128xf32> to vector<1x128xf32>
    %8 = vector.broadcast %7 : vector<1x128xf32> to vector<128x128xf32>
    %9 = arith.addf %5, %8 : vector<128x128xf32>
    %c0_8 = arith.constant 0 : index
    %c0_9 = arith.constant 0 : index
    %c0_10 = arith.constant 0 : index
    %10 = vector.load %arg3[%c0_8, %c0_9, %c0_10] : memref<1x128x16xf32, #tpu.memory_space<vmem>>, vector<1x128x16xf32>
    %11 = vector.shape_cast %10 : vector<1x128x16xf32> to vector<128x16xf32>
    %c0_11 = arith.constant 0 : index
    %c0_12 = arith.constant 0 : index
    %c0_13 = arith.constant 0 : index
    %12 = vector.load %arg4[%c0_11, %c0_12, %c0_13] : memref<1x128x16xf32, #tpu.memory_space<vmem>>, vector<1x128x16xf32>
    %13 = vector.shape_cast %12 : vector<1x128x16xf32> to vector<128x16xf32>
    %14 = vector.extract_strided_slice %9 {offsets = [0, 0], sizes = [128, 16], strides = [1, 1]} : vector<128x128xf32> to vector<128x16xf32>
    %15 = arith.mulf %14, %11 : vector<128x16xf32>
    %16 = vector.extract_strided_slice %9 {offsets = [0, 16], sizes = [128, 16], strides = [1, 1]} : vector<128x128xf32> to vector<128x16xf32>
    %17 = arith.mulf %16, %13 : vector<128x16xf32>
    %18 = arith.addf %15, %17 : vector<128x16xf32>
    %19 = vector.extract_strided_slice %9 {offsets = [0, 32], sizes = [128, 16], strides = [1, 1]} : vector<128x128xf32> to vector<128x16xf32>
    %20 = arith.mulf %19, %11 : vector<128x16xf32>
    %21 = vector.extract_strided_slice %9 {offsets = [0, 48], sizes = [128, 16], strides = [1, 1]} : vector<128x128xf32> to vector<128x16xf32>
    %22 = arith.mulf %21, %13 : vector<128x16xf32>
    %23 = arith.addf %20, %22 : vector<128x16xf32>
    %24 = arith.truncf %18 : vector<128x16xf32> to vector<128x16xbf16>
    %c0_14 = arith.constant 0 : index
    %c0_15 = arith.constant 0 : index
    %25 = vector.load %arg18[%c0_14, %c0_15] : memref<128x16xbf16, #tpu.memory_space<vmem>>, vector<128x16xbf16>
    tpu.vector_store %arg18[%c0_14, %c0_15], %24 {strides = array<i32>} : memref<128x16xbf16, #tpu.memory_space<vmem>>, vector<128x16xbf16>,
    %26 = tpu.transpose %23, [1, 0] : vector<128x16xf32> -> vector<16x128xf32>
    %27 = arith.truncf %26 : vector<16x128xf32> to vector<16x128xbf16>
    %c0_16 = arith.constant 0 : index
    %c0_17 = arith.constant 0 : index
    %28 = vector.load %arg19[%c0_16, %c0_17] : memref<16x128xbf16, #tpu.memory_space<vmem>>, vector<16x128xbf16>
    tpu.vector_store %arg19[%c0_16, %c0_17], %27 {strides = array<i32>} : memref<16x128xbf16, #tpu.memory_space<vmem>>, vector<16x128xbf16>,
    %29 = vector.extract_strided_slice %9 {offsets = [0, 64], sizes = [128, 16], strides = [1, 1]} : vector<128x128xf32> to vector<128x16xf32>
    %30 = arith.truncf %29 : vector<128x16xf32> to vector<128x16xbf16>
    %c0_18 = arith.constant 0 : index
    %c0_19 = arith.constant 0 : index
    %31 = vector.load %arg20[%c0_18, %c0_19] : memref<128x16xbf16, #tpu.memory_space<vmem>>, vector<128x16xbf16>
    tpu.vector_store %arg20[%c0_18, %c0_19], %30 {strides = array<i32>} : memref<128x16xbf16, #tpu.memory_space<vmem>>, vector<128x16xbf16>,
    %32 = tpu.iota {dimensions = array<i32: 1>} : vector<1x128xi32>
    %c8_i32 = arith.constant 8 : i32
    %33 = vector.broadcast %c8_i32 : i32 to vector<1x128xi32>
    %34 = arith.cmpi slt, %32, %33 : vector<1x128xi32>
    %cst_20 = arith.constant 0.000000e+00 : f32
    %cst_21 = arith.constant -1.000000e+30 : f32
    %35 = vector.broadcast %cst_20 : f32 to vector<1x128xf32>
    %36 = vector.broadcast %cst_21 : f32 to vector<1x128xf32>
    %37 = arith.select %34, %35, %36 : vector<1x128xi1>, vector<1x128xf32>
    %c0_i32 = arith.constant 0 : i32
    %c128_i32 = arith.constant 128 : i32
    %38 = arith.muli %c0_i32, %c128_i32 : i32
    %39 = tpu.assume_multiple %38, 128 : i32
    %40 = arith.index_cast %39 : i32 to index
    %c0_22 = arith.constant 0 : index
    %41 = vector.load %arg18[%40, %c0_22] : memref<128x16xbf16, #tpu.memory_space<vmem>>, vector<128x16xbf16>
    %c0_23 = arith.constant 0 : index
    %c0_24 = arith.constant 0 : index
    %42 = vector.load %arg19[%c0_23, %c0_24] : memref<16x128xbf16, #tpu.memory_space<vmem>>, vector<16x128xbf16>
    %cst_25 = arith.constant dense<0.000000e+00> : vector<128x128xf32>
    %43 = tpu.matmul %41, %42, %cst_25 {dimension_numbers = #tpu.dot_dimension_numbers<[1], [0], [0], [1], [0, 0, 1, 1], [], []>} : vector<128x16xbf16>, vector<16x128xbf16>, vector<128x128xf32> -> vector<128x128xf32>
    %44 = vector.broadcast %37 : vector<1x128xf32> to vector<128x128xf32>
    %45 = arith.addf %43, %44 : vector<128x128xf32>
    %cst_26 = arith.constant dense<0xFF800000> : vector<128xf32>
    %46 = vector.multi_reduction <maximumf>, %45, %cst_26 [1] : vector<128x128xf32> to vector<128xf32>
    %47 = vector.shape_cast %46 : vector<128xf32> to vector<128x1xf32>
    %48 = vector.broadcast %47 : vector<128x1xf32> to vector<128x128xf32>
    %49 = arith.subf %45, %48 : vector<128x128xf32>
    %50 = arith.truncf %49 : vector<128x128xf32> to vector<128x128xbf16>
    %51 = math.exp %50 : vector<128x128xbf16>
    %52 = arith.extf %51 : vector<128x128xbf16> to vector<128x128xf32>
    %cst_27 = arith.constant dense<0.000000e+00> : vector<128xf32>
    %53 = vector.multi_reduction <add>, %52, %cst_27 [1] : vector<128x128xf32> to vector<128xf32>
    %54 = vector.shape_cast %53 : vector<128xf32> to vector<128x1xf32>
    %c0_28 = arith.constant 0 : index
    %c0_29 = arith.constant 0 : index
    %55 = vector.load %arg20[%c0_28, %c0_29] : memref<128x16xbf16, #tpu.memory_space<vmem>>, vector<128x16xbf16>
    %cst_30 = arith.constant dense<0.000000e+00> : vector<128x16xf32>
    %56 = tpu.matmul %51, %55, %cst_30 {dimension_numbers = #tpu.dot_dimension_numbers<[1], [0], [0], [1], [0, 0, 1, 1], [], []>} : vector<128x128xbf16>, vector<128x16xbf16>, vector<128x16xf32> -> vector<128x16xf32>
    %57 = tpu.reciprocal %54 : vector<128x1xf32> -> vector<128x1xf32>
    %58 = vector.broadcast %57 : vector<128x1xf32> to vector<128x16xf32>
    %59 = arith.mulf %56, %58 : vector<128x16xf32>
    %60 = arith.truncf %59 : vector<128x16xf32> to vector<128x16xbf16>
    %61 = arith.index_cast %arg1 : i32 to index
    %62 = arith.index_cast %39 : i32 to index
    %c0_31 = arith.constant 0 : index
    %63 = vector.load %arg17[%61, %62, %c0_31] : memref<2x128x16xbf16, #tpu.memory_space<vmem>>, vector<1x128x16xbf16>
    %64 = vector.shape_cast %63 : vector<1x128x16xbf16> to vector<128x16xbf16>
    %65 = vector.shape_cast %60 : vector<128x16xbf16> to vector<1x128x16xbf16>
    tpu.vector_store %arg17[%61, %62, %c0_31], %65 {strides = array<i32>} : memref<2x128x16xbf16, #tpu.memory_space<vmem>>, vector<1x128x16xbf16>,
    %c1_i32 = arith.constant 1 : i32
    %c1_i32_32 = arith.constant 1 : i32
    %66 = arith.cmpi eq, %arg1, %c1_i32_32 : i32
    %67 = arith.extui %66 : i1 to i32
    %c0_i32_33 = arith.constant 0 : i32
    %68 = arith.cmpi ne, %67, %c0_i32_33 : i32
    scf.if %68 {
      %c0_34 = arith.constant 0 : index
      %c0_35 = arith.constant 0 : index
      %69 = vector.load %arg7[%c0_34, %c0_35] : memref<32x32xbf16, #tpu.memory_space<vmem>>, vector<32x32xbf16>
      %c0_36 = arith.constant 0 : index
      %c0_37 = arith.constant 0 : index
      %70 = vector.load %arg8[%c0_36, %c0_37] : memref<1x32xf32, #tpu.memory_space<vmem>>, vector<1x32xf32>
      %c0_38 = arith.constant 0 : index
      %c0_39 = arith.constant 0 : index
      %71 = vector.load %arg9[%c0_38, %c0_39] : memref<32x64xbf16, #tpu.memory_space<vmem>>, vector<32x64xbf16>
      %c0_40 = arith.constant 0 : index
      %c0_41 = arith.constant 0 : index
      %72 = vector.load %arg10[%c0_40, %c0_41] : memref<32x64xbf16, #tpu.memory_space<vmem>>, vector<32x64xbf16>
      %c0_42 = arith.constant 0 : index
      %c0_43 = arith.constant 0 : index
      %73 = vector.load %arg11[%c0_42, %c0_43] : memref<1x64xf32, #tpu.memory_space<vmem>>, vector<1x64xf32>
      %c0_44 = arith.constant 0 : index
      %c0_45 = arith.constant 0 : index
      %74 = vector.load %arg12[%c0_44, %c0_45] : memref<1x64xf32, #tpu.memory_space<vmem>>, vector<1x64xf32>
      %c0_46 = arith.constant 0 : index
      %c0_47 = arith.constant 0 : index
      %75 = vector.load %arg13[%c0_46, %c0_47] : memref<1x64xf32, #tpu.memory_space<vmem>>, vector<1x64xf32>
      %c0_48 = arith.constant 0 : index
      %c0_49 = arith.constant 0 : index
      %76 = vector.load %arg14[%c0_48, %c0_49] : memref<64x32xbf16, #tpu.memory_space<vmem>>, vector<64x32xbf16>
      %c0_50 = arith.constant 0 : index
      %c0_51 = arith.constant 0 : index
      %77 = vector.load %arg15[%c0_50, %c0_51] : memref<1x32xf32, #tpu.memory_space<vmem>>, vector<1x32xf32>
      %c0_i32_52 = arith.constant 0 : i32
      %c128_i32_53 = arith.constant 128 : i32
      %78 = arith.muli %c0_i32_52, %c128_i32_53 : i32
      %79 = tpu.assume_multiple %78, 128 : i32
      %c0_54 = arith.constant 0 : index
      %80 = arith.index_cast %79 : i32 to index
      %c0_55 = arith.constant 0 : index
      %81 = vector.load %arg2[%c0_54, %80, %c0_55] : memref<1x128x32xf32, #tpu.memory_space<vmem>>, vector<1x128x32xf32>
      %82 = vector.shape_cast %81 : vector<1x128x32xf32> to vector<128x32xf32>
      %c0_56 = arith.constant 0 : index
      %83 = arith.index_cast %79 : i32 to index
      %c0_57 = arith.constant 0 : index
      %84 = vector.load %arg17[%c0_56, %83, %c0_57] : memref<2x128x16xbf16, #tpu.memory_space<vmem>>, vector<1x128x16xbf16>
      %85 = vector.shape_cast %84 : vector<1x128x16xbf16> to vector<128x16xbf16>
      %c1 = arith.constant 1 : index
      %86 = arith.index_cast %79 : i32 to index
      %c0_58 = arith.constant 0 : index
      %87 = vector.load %arg17[%c1, %86, %c0_58] : memref<2x128x16xbf16, #tpu.memory_space<vmem>>, vector<1x128x16xbf16>
      %88 = vector.shape_cast %87 : vector<1x128x16xbf16> to vector<128x16xbf16>
      %89 = tpu.concatenate %85, %88 in 1 : vector<128x16xbf16>, vector<128x16xbf16> -> vector<128x32xbf16>
      %cst_59 = arith.constant dense<0.000000e+00> : vector<128x32xf32>
      %90 = tpu.matmul %89, %69, %cst_59 {dimension_numbers = #tpu.dot_dimension_numbers<[1], [0], [0], [1], [0, 0, 1, 1], [], []>} : vector<128x32xbf16>, vector<32x32xbf16>, vector<128x32xf32> -> vector<128x32xf32>
      %91 = vector.broadcast %70 : vector<1x32xf32> to vector<128x32xf32>
      %92 = arith.addf %90, %91 : vector<128x32xf32>
      %93 = arith.truncf %82 : vector<128x32xf32> to vector<128x32xbf16>
      %cst_60 = arith.constant dense<0.000000e+00> : vector<128x64xf32>
      %94 = tpu.matmul %93, %71, %cst_60 {dimension_numbers = #tpu.dot_dimension_numbers<[1], [0], [0], [1], [0, 0, 1, 1], [], []>} : vector<128x32xbf16>, vector<32x64xbf16>, vector<128x64xf32> -> vector<128x64xf32>
      %95 = arith.truncf %92 : vector<128x32xf32> to vector<128x32xbf16>
      %cst_61 = arith.constant dense<0.000000e+00> : vector<128x64xf32>
      %96 = tpu.matmul %95, %72, %cst_61 {dimension_numbers = #tpu.dot_dimension_numbers<[1], [0], [0], [1], [0, 0, 1, 1], [], []>} : vector<128x32xbf16>, vector<32x64xbf16>, vector<128x64xf32> -> vector<128x64xf32>
      %97 = arith.addf %94, %96 : vector<128x64xf32>
      %98 = vector.broadcast %73 : vector<1x64xf32> to vector<128x64xf32>
      %99 = arith.addf %97, %98 : vector<128x64xf32>
      %cst_62 = arith.constant dense<0.000000e+00> : vector<128xf32>
      %100 = vector.multi_reduction <add>, %99, %cst_62 [1] : vector<128x64xf32> to vector<128xf32>
      %101 = vector.shape_cast %100 : vector<128xf32> to vector<128x1xf32>
      %cst_63 = arith.constant 6.400000e+01 : f32
      %102 = vector.broadcast %cst_63 : f32 to vector<128x1xf32>
      %103 = arith.divf %101, %102 : vector<128x1xf32>
      %104 = vector.broadcast %103 : vector<128x1xf32> to vector<128x64xf32>
      %105 = arith.subf %99, %104 : vector<128x64xf32>
      %106 = arith.mulf %105, %105 : vector<128x64xf32>
      %cst_64 = arith.constant dense<0.000000e+00> : vector<128xf32>
      %107 = vector.multi_reduction <add>, %106, %cst_64 [1] : vector<128x64xf32> to vector<128xf32>
      %108 = vector.shape_cast %107 : vector<128xf32> to vector<128x1xf32>
      %cst_65 = arith.constant 6.400000e+01 : f32
      %109 = vector.broadcast %cst_65 : f32 to vector<128x1xf32>
      %110 = arith.divf %108, %109 : vector<128x1xf32>
      %111 = vector.broadcast %103 : vector<128x1xf32> to vector<128x64xf32>
      %112 = arith.subf %99, %111 : vector<128x64xf32>
      %cst_66 = arith.constant 9.99999974E-6 : f32
      %113 = vector.broadcast %cst_66 : f32 to vector<128x1xf32>
      %114 = arith.addf %110, %113 : vector<128x1xf32>
      %115 = math.rsqrt %114 : vector<128x1xf32>
      %116 = vector.broadcast %115 : vector<128x1xf32> to vector<128x64xf32>
      %117 = arith.mulf %112, %116 : vector<128x64xf32>
      %118 = vector.broadcast %74 : vector<1x64xf32> to vector<128x64xf32>
      %119 = arith.mulf %117, %118 : vector<128x64xf32>
      %120 = vector.broadcast %75 : vector<1x64xf32> to vector<128x64xf32>
      %121 = arith.addf %119, %120 : vector<128x64xf32>
      %cst_67 = arith.constant 5.000000e-01 : f32
      %122 = vector.broadcast %cst_67 : f32 to vector<128x64xf32>
      %123 = arith.mulf %122, %121 : vector<128x64xf32>
      %cst_68 = arith.constant 0.707106769 : f32
      %124 = vector.broadcast %cst_68 : f32 to vector<128x64xf32>
      %125 = arith.mulf %121, %124 : vector<128x64xf32>
      %126 = math.erf %125 : vector<128x64xf32>
      %cst_69 = arith.constant 1.000000e+00 : f32
      %127 = vector.broadcast %cst_69 : f32 to vector<128x64xf32>
      %128 = arith.addf %127, %126 : vector<128x64xf32>
      %129 = arith.mulf %123, %128 : vector<128x64xf32>
      %130 = arith.truncf %129 : vector<128x64xf32> to vector<128x64xbf16>
      %cst_70 = arith.constant dense<0.000000e+00> : vector<128x32xf32>
      %131 = tpu.matmul %130, %76, %cst_70 {dimension_numbers = #tpu.dot_dimension_numbers<[1], [0], [0], [1], [0, 0, 1, 1], [], []>} : vector<128x64xbf16>, vector<64x32xbf16>, vector<128x32xf32> -> vector<128x32xf32>
      %132 = vector.broadcast %77 : vector<1x32xf32> to vector<128x32xf32>
      %133 = arith.addf %131, %132 : vector<128x32xf32>
      %134 = arith.addf %82, %133 : vector<128x32xf32>
      %c0_71 = arith.constant 0 : index
      %135 = arith.index_cast %79 : i32 to index
      %c0_72 = arith.constant 0 : index
      %136 = vector.load %arg16[%c0_71, %135, %c0_72] : memref<1x128x32xf32, #tpu.memory_space<vmem>>, vector<1x128x32xf32>
      %137 = vector.shape_cast %136 : vector<1x128x32xf32> to vector<128x32xf32>
      %138 = vector.shape_cast %134 : vector<128x32xf32> to vector<1x128x32xf32>
      tpu.vector_store %arg16[%c0_71, %135, %c0_72], %138 {strides = array<i32>} : memref<1x128x32xf32, #tpu.memory_space<vmem>>, vector<1x128x32xf32>,
      %c1_i32_73 = arith.constant 1 : i32
    } else {
    }
    return
  }
  func.func @transform_0(%arg0: i32, %arg1: i32) -> (i32, i32, i32) {
    %c0_i32 = arith.constant 0 : i32
    %c0_i32_0 = arith.constant 0 : i32
    %c0_i32_1 = arith.constant 0 : i32
    return %arg0, %c0_i32, %c0_i32_0 : i32, i32, i32
  }
  func.func @transform_1(%arg0: i32, %arg1: i32) -> (i32, i32, i32) {
    %c0_i32 = arith.constant 0 : i32
    %c0_i32_0 = arith.constant 0 : i32
    %c0_i32_1 = arith.constant 0 : i32
    return %arg0, %c0_i32, %c0_i32_0 : i32, i32, i32
  }
  func.func @transform_2(%arg0: i32, %arg1: i32) -> (i32, i32, i32) {
    %c0_i32 = arith.constant 0 : i32
    %c0_i32_0 = arith.constant 0 : i32
    %c0_i32_1 = arith.constant 0 : i32
    return %arg0, %c0_i32, %c0_i32_0 : i32, i32, i32
  }
  func.func @transform_3(%arg0: i32, %arg1: i32) -> (i32, i32, i32) {
    %c0_i32 = arith.constant 0 : i32
    %c0_i32_0 = arith.constant 0 : i32
    %c0_i32_1 = arith.constant 0 : i32
    return %arg1, %c0_i32, %c0_i32_0 : i32, i32, i32
  }
  func.func @transform_4(%arg0: i32, %arg1: i32) -> (i32, i32, i32) {
    %c0_i32 = arith.constant 0 : i32
    %c0_i32_0 = arith.constant 0 : i32
    %c0_i32_1 = arith.constant 0 : i32
    return %arg1, %c0_i32, %c0_i32_0 : i32, i32, i32
  }
  func.func @transform_5(%arg0: i32, %arg1: i32) -> (i32, i32) {
    %c0_i32 = arith.constant 0 : i32
    %c0_i32_0 = arith.constant 0 : i32
    %c0_i32_1 = arith.constant 0 : i32
    return %c0_i32, %c0_i32_0 : i32, i32
  }
  func.func @transform_6(%arg0: i32, %arg1: i32) -> (i32, i32) {
    %c0_i32 = arith.constant 0 : i32
    %c0_i32_0 = arith.constant 0 : i32
    %c0_i32_1 = arith.constant 0 : i32
    return %c0_i32, %c0_i32_0 : i32, i32
  }
  func.func @transform_7(%arg0: i32, %arg1: i32) -> (i32, i32) {
    %c0_i32 = arith.constant 0 : i32
    %c0_i32_0 = arith.constant 0 : i32
    %c0_i32_1 = arith.constant 0 : i32
    return %c0_i32, %c0_i32_0 : i32, i32
  }
  func.func @transform_8(%arg0: i32, %arg1: i32) -> (i32, i32) {
    %c0_i32 = arith.constant 0 : i32
    %c0_i32_0 = arith.constant 0 : i32
    %c0_i32_1 = arith.constant 0 : i32
    return %c0_i32, %c0_i32_0 : i32, i32
  }
  func.func @transform_9(%arg0: i32, %arg1: i32) -> (i32, i32) {
    %c0_i32 = arith.constant 0 : i32
    %c0_i32_0 = arith.constant 0 : i32
    %c0_i32_1 = arith.constant 0 : i32
    return %c0_i32, %c0_i32_0 : i32, i32
  }
  func.func @transform_10(%arg0: i32, %arg1: i32) -> (i32, i32) {
    %c0_i32 = arith.constant 0 : i32
    %c0_i32_0 = arith.constant 0 : i32
    %c0_i32_1 = arith.constant 0 : i32
    return %c0_i32, %c0_i32_0 : i32, i32
  }
  func.func @transform_11(%arg0: i32, %arg1: i32) -> (i32, i32) {
    %c0_i32 = arith.constant 0 : i32
    %c0_i32_0 = arith.constant 0 : i32
    %c0_i32_1 = arith.constant 0 : i32
    return %c0_i32, %c0_i32_0 : i32, i32
  }
  func.func @transform_12(%arg0: i32, %arg1: i32) -> (i32, i32) {
    %c0_i32 = arith.constant 0 : i32
    %c0_i32_0 = arith.constant 0 : i32
    %c0_i32_1 = arith.constant 0 : i32
    return %c0_i32, %c0_i32_0 : i32, i32
  }
  func.func @transform_13(%arg0: i32, %arg1: i32) -> (i32, i32) {
    %c0_i32 = arith.constant 0 : i32
    %c0_i32_0 = arith.constant 0 : i32
    %c0_i32_1 = arith.constant 0 : i32
    return %c0_i32, %c0_i32_0 : i32, i32
  }
  func.func @transform_14(%arg0: i32, %arg1: i32) -> (i32, i32, i32) {
    %c0_i32 = arith.constant 0 : i32
    %c0_i32_0 = arith.constant 0 : i32
    %c0_i32_1 = arith.constant 0 : i32
    return %arg0, %c0_i32, %c0_i32_0 : i32, i32, i32
  }
}

</mosaic_0001>

<llo_original>
// kernel: tpu_custom_call.1
$region0: #{tpu_custom_call.1}
  #allocation0 [shape = 'u32[]', space=smem, size = 0x4, offset = 0x4, fixed_abs, tag = 'smem constant byte address 0x4 - core index']
  #allocation1 [shape = 'u32[144,128]{1,0:T(1,128)}', space=vmem, size = 0x12000, scoped, tag = 'internal scratch']
  #allocation2 [shape = 'bf16[2,128,16]{2,1,0:T(8,128)(2,1)}', space=vmem, size = 0x10000, scoped, tag = 'scratch operand']
  #allocation3 [shape = 'bf16[128,16]{1,0:T(8,128)(2,1)}', space=vmem, size = 0x8000, scoped, tag = 'scratch operand']
  #allocation4 [shape = 'bf16[16,128]{1,0:T(8,128)(2,1)}', space=vmem, size = 0x1000, scoped, tag = 'scratch operand']
  #allocation5 [shape = 'bf16[128,16]{1,0:T(8,128)(2,1)}', space=vmem, size = 0x8000, scoped, tag = 'scratch operand']
  %s0 = inlined_call_operand.vmem [shape: f32[4,128,32], index: 0, kind: input, shape index: {}]
  %s1 = inlined_call_operand.vmem [shape: f32[4,128,16], index: 1, kind: input, shape index: {}]
  %s2 = inlined_call_operand.vmem [shape: f32[4,128,16], index: 2, kind: input, shape index: {}]
  %s3 = inlined_call_operand.vmem [shape: bf16[2,32,128], index: 3, kind: input, shape index: {}]
  %s4 = inlined_call_operand.vmem [shape: f32[2,1,128], index: 4, kind: input, shape index: {}]
  %s5 = inlined_call_operand.vmem [shape: bf16[32,32], index: 5, kind: input, shape index: {}]
  %s6 = inlined_call_operand.vmem [shape: f32[1,32], index: 6, kind: input, shape index: {}]
  %s7 = inlined_call_operand.vmem [shape: bf16[32,64], index: 7, kind: input, shape index: {}]
  %s8 = inlined_call_operand.vmem [shape: bf16[32,64], index: 8, kind: input, shape index: {}]
  %s9 = inlined_call_operand.vmem [shape: f32[1,64], index: 9, kind: input, shape index: {}]
  %s10 = inlined_call_operand.vmem [shape: f32[1,64], index: 10, kind: input, shape index: {}]
  %s11 = inlined_call_operand.vmem [shape: f32[1,64], index: 11, kind: input, shape index: {}]
  %s12 = inlined_call_operand.vmem [shape: bf16[64,32], index: 12, kind: input, shape index: {}]
  %s13 = inlined_call_operand.vmem [shape: f32[1,32], index: 13, kind: input, shape index: {}]
  %s14 = inlined_call_operand.vmem [shape: f32[4,128,32], index: 14, kind: output, shape index: {}]
  %s15 = sld [smem:[#allocation0]]
  $region93: #{tpu_custom_call.1} parent=0
    _
  %s17 = ssub.s32 1, %s15
  %s18 = scalar_select 0, %s17, %s15
  loop: start=0, step=1, limit=10
  $region2: #{tpu_custom_call.1} parent=0 // loop_pre_header
    _
  $region3: #{tpu_custom_call.1} parent=0 // loop_header
    %s20 = sphi 0, %s24
    %p21 = scmp.ge.s32.totalorder %s20, 10
    %s27 = sphi 0, %s39
    %s28 = sphi 0, %s35
    %s29 = sphi 0, %s27
    %s30 = sphi 0, %s28
    %s31 = sphi 0, %s29
    %s32 = sphi 0, %s30
    %s42 = sphi 0, %s44
    %s45 = sphi 0, %s42
    %s46 = sphi 0, %s45
    %s62 = sphi 0, %s46
    %s68 = sphi 0, %s70
    %s71 = sphi 0, %s68
    %s72 = sphi 0, %s71
    %s88 = sphi 0, %s72
    %s94 = sphi 0, %s96
    %s97 = sphi 0, %s94
    %s98 = sphi 0, %s97
    %s114 = sphi 0, %s98
    %s120 = sphi 0, %s122
    %s123 = sphi 0, %s120
    %s124 = sphi 0, %s123
    %s140 = sphi 0, %s124
    %s146 = sphi 0, %s148
    %s149 = sphi 0, %s146
    %s150 = sphi 0, %s149
    %s166 = sphi 0, %s150
    %s170 = sphi 0, %s170
    %s172 = sphi 0, %s170
    %s173 = sphi 0, %s172
    %s187 = sphi 0, %s173
    %s191 = sphi 0, %s191
    %s193 = sphi 0, %s191
    %s194 = sphi 0, %s193
    %s208 = sphi 0, %s194
    %s212 = sphi 0, %s212
    %s214 = sphi 0, %s212
    %s215 = sphi 0, %s214
    %s229 = sphi 0, %s215
    %s233 = sphi 0, %s233
    %s235 = sphi 0, %s233
    %s236 = sphi 0, %s235
    %s250 = sphi 0, %s236
    %s254 = sphi 0, %s254
    %s256 = sphi 0, %s254
    %s257 = sphi 0, %s256
    %s271 = sphi 0, %s257
    %s275 = sphi 0, %s275
    %s277 = sphi 0, %s275
    %s278 = sphi 0, %s277
    %s292 = sphi 0, %s278
    %s296 = sphi 0, %s296
    %s298 = sphi 0, %s296
    %s299 = sphi 0, %s298
    %s313 = sphi 0, %s299
    %s317 = sphi 0, %s317
    %s319 = sphi 0, %s317
    %s320 = sphi 0, %s319
    %s334 = sphi 0, %s320
    %s338 = sphi 0, %s338
    %s340 = sphi 0, %s338
    %s341 = sphi 0, %s340
    %s355 = sphi 0, %s341
    %s361 = sphi 0, %s363
    %s364 = sphi 0, %s361
    %s365 = sphi 0, %s364
    %s381 = sphi 0, %s365
  $region4: #{tpu_custom_call.1} parent=0 // loop_header_branch
    %23 = sbr.rel (%p21) target = $region8
  $region5: #{tpu_custom_call.1} parent=0 // loop_body
    %s25 = ssub.s32 %s20, 1
    %s26 = ssub.s32 %s20, 2
    %s33 = sadd.s32 1, %s28
    %p34 = scmp.ge.s32.totalorder %s33, 2
    %s35 = scalar_select %p34, 0, %s33
    %s36 = sadd.s32 1, %s27
    %s37 = scalar_select %p34, %s36, %s27
    %p38 = scmp.ge.s32.totalorder %s37, 4
    %s39 = scalar_select %p38, 0, %s37
    %s40 = ssub.s32 %s27, %s39
    %p41 = scmp.eq.s32.totalorder %s40, 0
    %s43 = sadd.s32 %s42, 1
    %s44 = scalar_select %p41, %s42, %s43
    %p47 = pneg %p41
    %p48 = scmp.eq.s32.totalorder %s20, 7
    %p49 = por %p47, %p48
    %p50 = scmp.ne.s32.totalorder %s42, %s45
    %p51 = scmp.eq.s32.totalorder %s20, 0
    %p52 = por %p50, %p51
    %p53 = scmp.ne.s32.totalorder %s42, %s45
    %p54 = scmp.eq.s32.totalorder %s25, 7
    %p55 = por %p53, %p54
    %p56 = scmp.ne.s32.totalorder %s45, %s46
    %p57 = scmp.eq.s32.totalorder %s25, 0
    %p58 = por %p56, %p57
    %p59 = scmp.ne.s32.totalorder %s45, %s46
    %p60 = scmp.eq.s32.totalorder %s26, 7
    %p61 = por %p59, %p60
    %p63 = scmp.ne.s32.totalorder %s46, %s62
    %p64 = scmp.eq.s32.totalorder %s26, 0
    %p65 = por %p63, %p64
    %s66 = ssub.s32 %s27, %s39
    %p67 = scmp.eq.s32.totalorder %s66, 0
    %s69 = sadd.s32 %s68, 1
    %s70 = scalar_select %p67, %s68, %s69
    %p73 = pneg %p67
    %p74 = scmp.eq.s32.totalorder %s20, 7
    %p75 = por %p73, %p74
    %p76 = scmp.ne.s32.totalorder %s68, %s71
    %p77 = scmp.eq.s32.totalorder %s20, 0
    %p78 = por %p76, %p77
    %p79 = scmp.ne.s32.totalorder %s68, %s71
    %p80 = scmp.eq.s32.totalorder %s25, 7
    %p81 = por %p79, %p80
    %p82 = scmp.ne.s32.totalorder %s71, %s72
    %p83 = scmp.eq.s32.totalorder %s25, 0
    %p84 = por %p82, %p83
    %p85 = scmp.ne.s32.totalorder %s71, %s72
    %p86 = scmp.eq.s32.totalorder %s26, 7
    %p87 = por %p85, %p86
    %p89 = scmp.ne.s32.totalorder %s72, %s88
    %p90 = scmp.eq.s32.totalorder %s26, 0
    %p91 = por %p89, %p90
    %s92 = ssub.s32 %s27, %s39
    %p93 = scmp.eq.s32.totalorder %s92, 0
    %s95 = sadd.s32 %s94, 1
    %s96 = scalar_select %p93, %s94, %s95
    %p99 = pneg %p93
    %p100 = scmp.eq.s32.totalorder %s20, 7
    %p101 = por %p99, %p100
    %p102 = scmp.ne.s32.totalorder %s94, %s97
    %p103 = scmp.eq.s32.totalorder %s20, 0
    %p104 = por %p102, %p103
    %p105 = scmp.ne.s32.totalorder %s94, %s97
    %p106 = scmp.eq.s32.totalorder %s25, 7
    %p107 = por %p105, %p106
    %p108 = scmp.ne.s32.totalorder %s97, %s98
    %p109 = scmp.eq.s32.totalorder %s25, 0
    %p110 = por %p108, %p109
    %p111 = scmp.ne.s32.totalorder %s97, %s98
    %p112 = scmp.eq.s32.totalorder %s26, 7
    %p113 = por %p111, %p112
    %p115 = scmp.ne.s32.totalorder %s98, %s114
    %p116 = scmp.eq.s32.totalorder %s26, 0
    %p117 = por %p115, %p116
    %s118 = ssub.s32 %s28, %s35
    %p119 = scmp.eq.s32.totalorder %s118, 0
    %s121 = sadd.s32 %s120, 1
    %s122 = scalar_select %p119, %s120, %s121
    %p125 = pneg %p119
    %p126 = scmp.eq.s32.totalorder %s20, 7
    %p127 = por %p125, %p126
    %p128 = scmp.ne.s32.totalorder %s120, %s123
    %p129 = scmp.eq.s32.totalorder %s20, 0
    %p130 = por %p128, %p129
    %p131 = scmp.ne.s32.totalorder %s120, %s123
    %p132 = scmp.eq.s32.totalorder %s25, 7
    %p133 = por %p131, %p132
    %p134 = scmp.ne.s32.totalorder %s123, %s124
    %p135 = scmp.eq.s32.totalorder %s25, 0
    %p136 = por %p134, %p135
    %p137 = scmp.ne.s32.totalorder %s123, %s124
    %p138 = scmp.eq.s32.totalorder %s26, 7
    %p139 = por %p137, %p138
    %p141 = scmp.ne.s32.totalorder %s124, %s140
    %p142 = scmp.eq.s32.totalorder %s26, 0
    %p143 = por %p141, %p142
    %s144 = ssub.s32 %s28, %s35
    %p145 = scmp.eq.s32.totalorder %s144, 0
    %s147 = sadd.s32 %s146, 1
    %s148 = scalar_select %p145, %s146, %s147
    %p151 = pneg %p145
    %p152 = scmp.eq.s32.totalorder %s20, 7
    %p153 = por %p151, %p152
    %p154 = scmp.ne.s32.totalorder %s146, %s149
    %p155 = scmp.eq.s32.totalorder %s20, 0
    %p156 = por %p154, %p155
    %p157 = scmp.ne.s32.totalorder %s146, %s149
    %p158 = scmp.eq.s32.totalorder %s25, 7
    %p159 = por %p157, %p158
    %p160 = scmp.ne.s32.totalorder %s149, %s150
    %p161 = scmp.eq.s32.totalorder %s25, 0
    %p162 = por %p160, %p161
    %p163 = scmp.ne.s32.totalorder %s149, %s150
    %p164 = scmp.eq.s32.totalorder %s26, 7
    %p165 = por %p163, %p164
    %p167 = scmp.ne.s32.totalorder %s150, %s166
    %p168 = scmp.eq.s32.totalorder %s26, 0
    %p169 = por %p167, %p168
    %s171 = sadd.s32 %s170, 1
    %p174 = scmp.eq.s32.totalorder %s20, 7
    %p175 = scmp.ne.s32.totalorder %s170, %s172
    %p176 = scmp.eq.s32.totalorder %s20, 0
    %p177 = por %p175, %p176
    %p178 = scmp.ne.s32.totalorder %s170, %s172
    %p179 = scmp.eq.s32.totalorder %s25, 7
    %p180 = por %p178, %p179
    %p181 = scmp.ne.s32.totalorder %s172, %s173
    %p182 = scmp.eq.s32.totalorder %s25, 0
    %p183 = por %p181, %p182
    %p184 = scmp.ne.s32.totalorder %s172, %s173
    %p185 = scmp.eq.s32.totalorder %s26, 7
    %p186 = por %p184, %p185
    %p188 = scmp.ne.s32.totalorder %s173, %s187
    %p189 = scmp.eq.s32.totalorder %s26, 0
    %p190 = por %p188, %p189
    %s192 = sadd.s32 %s191, 1
    %p195 = scmp.eq.s32.totalorder %s20, 7
    %p196 = scmp.ne.s32.totalorder %s191, %s193
    %p197 = scmp.eq.s32.totalorder %s20, 0
    %p198 = por %p196, %p197
    %p199 = scmp.ne.s32.totalorder %s191, %s193
    %p200 = scmp.eq.s32.totalorder %s25, 7
    %p201 = por %p199, %p200
    %p202 = scmp.ne.s32.totalorder %s193, %s194
    %p203 = scmp.eq.s32.totalorder %s25, 0
    %p204 = por %p202, %p203
    %p205 = scmp.ne.s32.totalorder %s193, %s194
    %p206 = scmp.eq.s32.totalorder %s26, 7
    %p207 = por %p205, %p206
    %p209 = scmp.ne.s32.totalorder %s194, %s208
    %p210 = scmp.eq.s32.totalorder %s26, 0
    %p211 = por %p209, %p210
    %s213 = sadd.s32 %s212, 1
    %p216 = scmp.eq.s32.totalorder %s20, 7
    %p217 = scmp.ne.s32.totalorder %s212, %s214
    %p218 = scmp.eq.s32.totalorder %s20, 0
    %p219 = por %p217, %p218
    %p220 = scmp.ne.s32.totalorder %s212, %s214
    %p221 = scmp.eq.s32.totalorder %s25, 7
    %p222 = por %p220, %p221
    %p223 = scmp.ne.s32.totalorder %s214, %s215
    %p224 = scmp.eq.s32.totalorder %s25, 0
    %p225 = por %p223, %p224
    %p226 = scmp.ne.s32.totalorder %s214, %s215
    %p227 = scmp.eq.s32.totalorder %s26, 7
    %p228 = por %p226, %p227
    %p230 = scmp.ne.s32.totalorder %s215, %s229
    %p231 = scmp.eq.s32.totalorder %s26, 0
    %p232 = por %p230, %p231
    %s234 = sadd.s32 %s233, 1
    %p237 = scmp.eq.s32.totalorder %s20, 7
    %p238 = scmp.ne.s32.totalorder %s233, %s235
    %p239 = scmp.eq.s32.totalorder %s20, 0
    %p240 = por %p238, %p239
    %p241 = scmp.ne.s32.totalorder %s233, %s235
    %p242 = scmp.eq.s32.totalorder %s25, 7
    %p243 = por %p241, %p242
    %p244 = scmp.ne.s32.totalorder %s235, %s236
    %p245 = scmp.eq.s32.totalorder %s25, 0
    %p246 = por %p244, %p245
    %p247 = scmp.ne.s32.totalorder %s235, %s236
    %p248 = scmp.eq.s32.totalorder %s26, 7
    %p249 = por %p247, %p248
    %p251 = scmp.ne.s32.totalorder %s236, %s250
    %p252 = scmp.eq.s32.totalorder %s26, 0
    %p253 = por %p251, %p252
    %s255 = sadd.s32 %s254, 1
    %p258 = scmp.eq.s32.totalorder %s20, 7
    %p259 = scmp.ne.s32.totalorder %s254, %s256
    %p260 = scmp.eq.s32.totalorder %s20, 0
    %p261 = por %p259, %p260
    %p262 = scmp.ne.s32.totalorder %s254, %s256
    %p263 = scmp.eq.s32.totalorder %s25, 7
    %p264 = por %p262, %p263
    %p265 = scmp.ne.s32.totalorder %s256, %s257
    %p266 = scmp.eq.s32.totalorder %s25, 0
    %p267 = por %p265, %p266
    %p268 = scmp.ne.s32.totalorder %s256, %s257
    %p269 = scmp.eq.s32.totalorder %s26, 7
    %p270 = por %p268, %p269
    %p272 = scmp.ne.s32.totalorder %s257, %s271
    %p273 = scmp.eq.s32.totalorder %s26, 0
    %p274 = por %p272, %p273
    %s276 = sadd.s32 %s275, 1
    %p279 = scmp.eq.s32.totalorder %s20, 7
    %p280 = scmp.ne.s32.totalorder %s275, %s277
    %p281 = scmp.eq.s32.totalorder %s20, 0
    %p282 = por %p280, %p281
    %p283 = scmp.ne.s32.totalorder %s275, %s277
    %p284 = scmp.eq.s32.totalorder %s25, 7
    %p285 = por %p283, %p284
    %p286 = scmp.ne.s32.totalorder %s277, %s278
    %p287 = scmp.eq.s32.totalorder %s25, 0
    %p288 = por %p286, %p287
    %p289 = scmp.ne.s32.totalorder %s277, %s278
    %p290 = scmp.eq.s32.totalorder %s26, 7
    %p291 = por %p289, %p290
    %p293 = scmp.ne.s32.totalorder %s278, %s292
    %p294 = scmp.eq.s32.totalorder %s26, 0
    %p295 = por %p293, %p294
    %s297 = sadd.s32 %s296, 1
    %p300 = scmp.eq.s32.totalorder %s20, 7
    %p301 = scmp.ne.s32.totalorder %s296, %s298
    %p302 = scmp.eq.s32.totalorder %s20, 0
    %p303 = por %p301, %p302
    %p304 = scmp.ne.s32.totalorder %s296, %s298
    %p305 = scmp.eq.s32.totalorder %s25, 7
    %p306 = por %p304, %p305
    %p307 = scmp.ne.s32.totalorder %s298, %s299
    %p308 = scmp.eq.s32.totalorder %s25, 0
    %p309 = por %p307, %p308
    %p310 = scmp.ne.s32.totalorder %s298, %s299
    %p311 = scmp.eq.s32.totalorder %s26, 7
    %p312 = por %p310, %p311
    %p314 = scmp.ne.s32.totalorder %s299, %s313
    %p315 = scmp.eq.s32.totalorder %s26, 0
    %p316 = por %p314, %p315
    %s318 = sadd.s32 %s317, 1
    %p321 = scmp.eq.s32.totalorder %s20, 7
    %p322 = scmp.ne.s32.totalorder %s317, %s319
    %p323 = scmp.eq.s32.totalorder %s20, 0
    %p324 = por %p322, %p323
    %p325 = scmp.ne.s32.totalorder %s317, %s319
    %p326 = scmp.eq.s32.totalorder %s25, 7
    %p327 = por %p325, %p326
    %p328 = scmp.ne.s32.totalorder %s319, %s320
    %p329 = scmp.eq.s32.totalorder %s25, 0
    %p330 = por %p328, %p329
    %p331 = scmp.ne.s32.totalorder %s319, %s320
    %p332 = scmp.eq.s32.totalorder %s26, 7
    %p333 = por %p331, %p332
    %p335 = scmp.ne.s32.totalorder %s320, %s334
    %p336 = scmp.eq.s32.totalorder %s26, 0
    %p337 = por %p335, %p336
    %s339 = sadd.s32 %s338, 1
    %p342 = scmp.eq.s32.totalorder %s20, 7
    %p343 = scmp.ne.s32.totalorder %s338, %s340
    %p344 = scmp.eq.s32.totalorder %s20, 0
    %p345 = por %p343, %p344
    %p346 = scmp.ne.s32.totalorder %s338, %s340
    %p347 = scmp.eq.s32.totalorder %s25, 7
    %p348 = por %p346, %p347
    %p349 = scmp.ne.s32.totalorder %s340, %s341
    %p350 = scmp.eq.s32.totalorder %s25, 0
    %p351 = por %p349, %p350
    %p352 = scmp.ne.s32.totalorder %s340, %s341
    %p353 = scmp.eq.s32.totalorder %s26, 7
    %p354 = por %p352, %p353
    %p356 = scmp.ne.s32.totalorder %s341, %s355
    %p357 = scmp.eq.s32.totalorder %s26, 0
    %p358 = por %p356, %p357
    %s359 = ssub.s32 %s27, %s39
    %p360 = scmp.eq.s32.totalorder %s359, 0
    %s362 = sadd.s32 %s361, 1
    %s363 = scalar_select %p360, %s361, %s362
    %p366 = pneg %p360
    %p367 = scmp.eq.s32.totalorder %s20, 7
    %p368 = por %p366, %p367
    %p369 = scmp.ne.s32.totalorder %s361, %s364
    %p370 = scmp.eq.s32.totalorder %s20, 0
    %p371 = por %p369, %p370
    %p372 = scmp.ne.s32.totalorder %s361, %s364
    %p373 = scmp.eq.s32.totalorder %s25, 7
    %p374 = por %p372, %p373
    %p375 = scmp.ne.s32.totalorder %s364, %s365
    %p376 = scmp.eq.s32.totalorder %s25, 0
    %p377 = por %p375, %p376
    %p378 = scmp.ne.s32.totalorder %s364, %s365
    %p379 = scmp.eq.s32.totalorder %s26, 7
    %p380 = por %p378, %p379
    %p382 = scmp.ne.s32.totalorder %s365, %s381
    %p383 = scmp.eq.s32.totalorder %s26, 0
    %p384 = por %p382, %p383
    %p385 = scmp.le.s32.totalorder 1, %s20
    %p386 = scmp.lt.s32.totalorder %s20, 9
    %p387 = pnand %p385, %p386
    %p388 = pneg %p387
    // Predicated region
    $region9: #{tpu_custom_call.1} parent=5 // pred_check
      _
    $region10: #{tpu_custom_call.1} parent=5 // pred_check_branch
      %390 = sbr.rel (%p387) target = $region12
    $region11: #{tpu_custom_call.1} parent=5 // pred_region
      %s391 = ssub.s32 %s20, 1
      // Predicated region
      $region13: #{tpu_custom_call.1} parent=11 // pred_check
        %p392 = pneg %p183
      $region14: #{tpu_custom_call.1} parent=11 // pred_check_branch
        %394 = sbr.rel (%p392) target = $region16
      $region15: #{tpu_custom_call.1} parent=11 // pred_region
        _
      $region16: #{tpu_custom_call.1} parent=11 // pred_fallthru
        _
      // Predicated region
      $region17: #{tpu_custom_call.1} parent=11 // pred_check
        %p395 = pneg %p204
      $region18: #{tpu_custom_call.1} parent=11 // pred_check_branch
        %397 = sbr.rel (%p395) target = $region20
      $region19: #{tpu_custom_call.1} parent=11 // pred_region
        _
      $region20: #{tpu_custom_call.1} parent=11 // pred_fallthru
        _
      // Predicated region
      $region21: #{tpu_custom_call.1} parent=11 // pred_check
        %p398 = pneg %p225
      $region22: #{tpu_custom_call.1} parent=11 // pred_check_branch
        %400 = sbr.rel (%p398) target = $region24
      $region23: #{tpu_custom_call.1} parent=11 // pred_region
        _
      $region24: #{tpu_custom_call.1} parent=11 // pred_fallthru
        _
      // Predicated region
      $region25: #{tpu_custom_call.1} parent=11 // pred_check
        %p401 = pneg %p246
      $region26: #{tpu_custom_call.1} parent=11 // pred_check_branch
        %403 = sbr.rel (%p401) target = $region28
      $region27: #{tpu_custom_call.1} parent=11 // pred_region
        _
      $region28: #{tpu_custom_call.1} parent=11 // pred_fallthru
        _
      // Predicated region
      $region29: #{tpu_custom_call.1} parent=11 // pred_check
        %p404 = pneg %p267
      $region30: #{tpu_custom_call.1} parent=11 // pred_check_branch
        %406 = sbr.rel (%p404) target = $region32
      $region31: #{tpu_custom_call.1} parent=11 // pred_region
        _
      $region32: #{tpu_custom_call.1} parent=11 // pred_fallthru
        _
      // Predicated region
      $region33: #{tpu_custom_call.1} parent=11 // pred_check
        %p407 = pneg %p288
      $region34: #{tpu_custom_call.1} parent=11 // pred_check_branch
        %409 = sbr.rel (%p407) target = $region36
      $region35: #{tpu_custom_call.1} parent=11 // pred_region
        _
      $region36: #{tpu_custom_call.1} parent=11 // pred_fallthru
        _
      // Predicated region
      $region37: #{tpu_custom_call.1} parent=11 // pred_check
        %p410 = pneg %p309
      $region38: #{tpu_custom_call.1} parent=11 // pred_check_branch
        %412 = sbr.rel (%p410) target = $region40
      $region39: #{tpu_custom_call.1} parent=11 // pred_region
        _
      $region40: #{tpu_custom_call.1} parent=11 // pred_fallthru
        _
      // Predicated region
      $region41: #{tpu_custom_call.1} parent=11 // pred_check
        %p413 = pneg %p330
      $region42: #{tpu_custom_call.1} parent=11 // pred_check_branch
        %415 = sbr.rel (%p413) target = $region44
      $region43: #{tpu_custom_call.1} parent=11 // pred_region
        _
      $region44: #{tpu_custom_call.1} parent=11 // pred_fallthru
        _
      // Predicated region
      $region45: #{tpu_custom_call.1} parent=11 // pred_check
        %p416 = pneg %p351
      $region46: #{tpu_custom_call.1} parent=11 // pred_check_branch
        %418 = sbr.rel (%p416) target = $region48
      $region47: #{tpu_custom_call.1} parent=11 // pred_region
        _
      $region48: #{tpu_custom_call.1} parent=11 // pred_fallthru
        _
    $region12: #{tpu_custom_call.1} parent=5 // pred_fallthru
      _
    %p419 = scmp.lt.s32.totalorder %s20, 8
    // Predicated region
    $region49: #{tpu_custom_call.1} parent=5 // pred_check
      %p420 = pneg %p419
    $region50: #{tpu_custom_call.1} parent=5 // pred_check_branch
      %422 = sbr.rel (%p420) target = $region52
    $region51: #{tpu_custom_call.1} parent=5 // pred_region
      // Predicated region
      $region53: #{tpu_custom_call.1} parent=51 // pred_check
        %p423 = pneg %p52
      $region54: #{tpu_custom_call.1} parent=51 // pred_check_branch
        %425 = sbr.rel (%p423) target = $region56
      $region55: #{tpu_custom_call.1} parent=51 // pred_region
        %p426 = scmp.lt.s32.totalorder %s27, 3
        %s427 = scalar_select %p426, %s27, 3
        %s428 = smul.addr %s427, 16
        %s429 = smul.addr %s428, 8
        %s430 = scalar_lea.vmem %s0, %s429
      $region56: #{tpu_custom_call.1} parent=51 // pred_fallthru
        _
      // Predicated region
      $region57: #{tpu_custom_call.1} parent=51 // pred_check
        %p431 = pneg %p78
      $region58: #{tpu_custom_call.1} parent=51 // pred_check_branch
        %433 = sbr.rel (%p431) target = $region60
      $region59: #{tpu_custom_call.1} parent=51 // pred_region
        %p434 = scmp.lt.s32.totalorder %s27, 3
        %s435 = scalar_select %p434, %s27, 3
        %s436 = smul.addr %s435, 16
        %s437 = smul.addr %s436, 8
        %s438 = scalar_lea.vmem %s1, %s437
      $region60: #{tpu_custom_call.1} parent=51 // pred_fallthru
        _
      // Predicated region
      $region61: #{tpu_custom_call.1} parent=51 // pred_check
        %p439 = pneg %p104
      $region62: #{tpu_custom_call.1} parent=51 // pred_check_branch
        %441 = sbr.rel (%p439) target = $region64
      $region63: #{tpu_custom_call.1} parent=51 // pred_region
        %p442 = scmp.lt.s32.totalorder %s27, 3
        %s443 = scalar_select %p442, %s27, 3
        %s444 = smul.addr %s443, 16
        %s445 = smul.addr %s444, 8
        %s446 = scalar_lea.vmem %s2, %s445
      $region64: #{tpu_custom_call.1} parent=51 // pred_fallthru
        _
      // Predicated region
      $region65: #{tpu_custom_call.1} parent=51 // pred_check
        %p447 = pneg %p130
      $region66: #{tpu_custom_call.1} parent=51 // pred_check_branch
        %449 = sbr.rel (%p447) target = $region68
      $region67: #{tpu_custom_call.1} parent=51 // pred_region
        %p450 = scmp.lt.s32.totalorder %s28, 1
        %s451 = scalar_select %p450, %s28, 1
        %s452 = smul.addr %s451, 4
        %s453 = smul.addr %s452, 4
        %s454 = scalar_lea.vmem %s3, %s453
      $region68: #{tpu_custom_call.1} parent=51 // pred_fallthru
        _
      // Predicated region
      $region69: #{tpu_custom_call.1} parent=51 // pred_check
        %p455 = pneg %p156
      $region70: #{tpu_custom_call.1} parent=51 // pred_check_branch
        %457 = sbr.rel (%p455) target = $region72
      $region71: #{tpu_custom_call.1} parent=51 // pred_region
        %p458 = scmp.lt.s32.totalorder %s28, 1
        %s459 = scalar_select %p458, %s28, 1
        %s460 = scalar_lea.vmem %s4, %s459
      $region72: #{tpu_custom_call.1} parent=51 // pred_fallthru
        _
    $region52: #{tpu_custom_call.1} parent=5 // pred_fallthru
      _
    %p461 = scmp.le.s32.totalorder 1, %s20
    %p462 = scmp.lt.s32.totalorder %s20, 9
    %p463 = pnand %p461, %p462
    %p464 = pneg %p463
    // Predicated region
    $region73: #{tpu_custom_call.1} parent=5 // pred_check
      _
    $region74: #{tpu_custom_call.1} parent=5 // pred_check_branch
      %466 = sbr.rel (%p463) target = $region76
    $region75: #{tpu_custom_call.1} parent=5 // pred_region
      %s467 = ssub.s32 %s20, 1
      %p468 = scmp.lt.s32.totalorder %s29, 3
      %s469 = scalar_select %p468, %s29, 3
      %s470 = smul.addr %s469, 16
      %s471 = smul.addr %s470, 8
      %s472 = scalar_lea.vmem %s0, %s471
      %p473 = pneg %p58
      %p474 = pneg %p55
      %p475 = scmp.lt.s32.totalorder %s29, 3
      %s476 = scalar_select %p475, %s29, 3
      %s477 = smul.addr %s476, 16
      %s478 = smul.addr %s477, 8
      %s479 = scalar_lea.vmem %s1, %s478
      %p480 = pneg %p84
      %p481 = pneg %p81
      %p482 = scmp.lt.s32.totalorder %s29, 3
      %s483 = scalar_select %p482, %s29, 3
      %s484 = smul.addr %s483, 16
      %s485 = smul.addr %s484, 8
      %s486 = scalar_lea.vmem %s2, %s485
      %p487 = pneg %p110
      %p488 = pneg %p107
      %p489 = scmp.lt.s32.totalorder %s30, 1
      %s490 = scalar_select %p489, %s30, 1
      %s491 = smul.addr %s490, 4
      %s492 = smul.addr %s491, 4
      %s493 = scalar_lea.vmem %s3, %s492
      %p494 = pneg %p136
      %p495 = pneg %p133
      %p496 = scmp.lt.s32.totalorder %s30, 1
      %s497 = scalar_select %p496, %s30, 1
      %s498 = scalar_lea.vmem %s4, %s497
      %p499 = pneg %p162
      %p500 = pneg %p159
      %p501 = pneg %p183
      %p502 = pneg %p180
      %p503 = pneg %p204
      %p504 = pneg %p201
      %p505 = pneg %p225
      %p506 = pneg %p222
      %p507 = pneg %p246
      %p508 = pneg %p243
      %p509 = pneg %p267
      %p510 = pneg %p264
      %p511 = pneg %p288
      %p512 = pneg %p285
      %p513 = pneg %p309
      %p514 = pneg %p306
      %p515 = pneg %p330
      %p516 = pneg %p327
      %p517 = pneg %p351
      %p518 = pneg %p348
      %p519 = pneg %p377
      %p520 = pneg %p374
      %p521 = scmp.lt.s32.totalorder %s29, 3
      %s522 = scalar_select %p521, %s29, 3
      %s523 = smul.addr %s522, 16
      %s524 = smul.addr %s523, 8
      %s525 = scalar_lea.vmem %s14, %s524
      %p526 = scmp.lt.s32.totalorder %s29, 3
      %s527 = scalar_select %p526, %s29, 3
      %s528 = smul.addr %s527, 16
      %s529 = smul.addr %s528, 8
      %s530 = scalar_lea.vmem %s0, %s529
      %p531 = scmp.lt.s32.totalorder %s29, 3
      %s532 = scalar_select %p531, %s29, 3
      %s533 = smul.addr %s532, 16
      %s534 = smul.addr %s533, 8
      %s535 = scalar_lea.vmem %s1, %s534
      %p536 = scmp.lt.s32.totalorder %s29, 3
      %s537 = scalar_select %p536, %s29, 3
      %s538 = smul.addr %s537, 16
      %s539 = smul.addr %s538, 8
      %s540 = scalar_lea.vmem %s2, %s539
      %p541 = scmp.lt.s32.totalorder %s30, 1
      %s542 = scalar_select %p541, %s30, 1
      %s543 = smul.addr %s542, 4
      %s544 = smul.addr %s543, 4
      %s545 = scalar_lea.vmem %s3, %s544
      %p546 = scmp.lt.s32.totalorder %s30, 1
      %s547 = scalar_select %p546, %s30, 1
      %s548 = scalar_lea.vmem %s4, %s547
      %p549 = scmp.lt.s32.totalorder %s29, 3
      %s550 = scalar_select %p549, %s29, 3
      %s551 = smul.addr %s550, 16
      %s552 = smul.addr %s551, 8
      %s553 = scalar_lea.vmem %s14, %s552
      %v555 = vld [vmem:[%s530] sm:$0xff]
      %v556 = vld [vmem:[%s530 + $0x8] sm:$0xff]
      %v557 = vld [vmem:[%s530 + $0x10] sm:$0xff]
      %v558 = vld [vmem:[%s530 + $0x18] sm:$0xff]
      %v559 = vld [vmem:[%s530 + $0x20] sm:$0xff]
      %v560 = vld [vmem:[%s530 + $0x28] sm:$0xff]
      %v561 = vld [vmem:[%s530 + $0x30] sm:$0xff]
      %v562 = vld [vmem:[%s530 + $0x38] sm:$0xff]
      %v563 = vld [vmem:[%s530 + $0x40] sm:$0xff]
      %v564 = vld [vmem:[%s530 + $0x48] sm:$0xff]
      %v565 = vld [vmem:[%s530 + $0x50] sm:$0xff]
      %v566 = vld [vmem:[%s530 + $0x58] sm:$0xff]
      %v567 = vld [vmem:[%s530 + $0x60] sm:$0xff]
      %v568 = vld [vmem:[%s530 + $0x68] sm:$0xff]
      %v569 = vld [vmem:[%s530 + $0x70] sm:$0xff]
      %v570 = vld [vmem:[%s530 + $0x78] sm:$0xff]
      %v571 = vpack.c.bf16 %v556, %v555
      %v572 = vpack.c.bf16 %v558, %v557
      %v573 = vpack.c.bf16 %v560, %v559
      %v574 = vpack.c.bf16 %v562, %v561
      %v575 = vpack.c.bf16 %v564, %v563
      %v576 = vpack.c.bf16 %v566, %v565
      %v577 = vpack.c.bf16 %v568, %v567
      %v578 = vpack.c.bf16 %v570, %v569
      %v579 = vld [vmem:[%s545] sm:$0xf]
      %v580 = vld [vmem:[%s545 + $0x4] sm:$0xf]
      %v581 = vld [vmem:[%s545 + $0x8] sm:$0xf]
      %v582 = vld [vmem:[%s545 + $0xc] sm:$0xf]
      %v583 = vld [vmem:[%s548] sm:$0x1]
      %v585 = vlaneseq
      %v586 = vshrl.u32 %v585, 7
      %v587 = vsub.s32 0, %v586
      %v588 = vrot.slane %v583, %v587
      %v594 = vunpack.c.l.b16 %v579
      %v595 = vunpack.c.l.b16 %v580
      %v596 = vunpack.c.l.b16 %v581
      %v597 = vunpack.c.l.b16 %v582
      %v598 = vpack.c.b16 %v595, %v594
      %v599 = vpack.c.b16 %v597, %v596
      %vm602 = vcmask 261120
      %v604 = vsel %vm602, %v571, 0
      %v607 = vsel %vm602, %v572, 0
      %v610 = vsel %vm602, %v573, 0
      %v613 = vsel %vm602, %v574, 0
      %v616 = vsel %vm602, %v575, 0
      %v619 = vsel %vm602, %v576, 0
      %v622 = vsel %vm602, %v577, 0
      %v625 = vsel %vm602, %v578, 0
      %627 = vmatprep.subr.bf16.mxu0 0
      %628 = vmatpush1.bf16.msra.mxu0 0
      %629 = vmatprep.subr.bf16.mxu0 0
      %630 = vmatpush1.bf16.msra.mxu0 0
      %631 = vmatprep.subr.bf16.mxu0 0
      %632 = vmatpush1.bf16.msra.mxu0 0
      %633 = vmatprep.subr.bf16.mxu0 0
      %634 = vmatpush1.bf16.msra.mxu0 0
      %635 = vmatprep.subr.bf16.mxu0 0
      %636 = vmatpush1.bf16.msra.mxu0 0
      %637 = vmatprep.subr.bf16.mxu0 0
      %638 = vmatpush1.bf16.msra.mxu0 0
      %639 = vmatprep.subr.bf16.mxu0 0
      %640 = vmatpush1.bf16.msra.mxu0 %v599
      %641 = vmatprep.subr.bf16.mxu0 0
      %642 = vmatpush1.bf16.msra.mxu0 %v598
      %643 = vmatprep.subr.bf16.mxu0 0
      %644 = vmatpush2.bf16.msra.mxu0 0
      %645 = vmatprep.subr.bf16.mxu0 0
      %646 = vmatpush2.bf16.msra.mxu0 0
      %647 = vmatprep.subr.bf16.mxu0 0
      %648 = vmatpush2.bf16.msra.mxu0 0
      %649 = vmatprep.subr.bf16.mxu0 0
      %650 = vmatpush2.bf16.msra.mxu0 0
      %651 = vmatprep.subr.bf16.mxu0 0
      %652 = vmatpush2.bf16.msra.mxu0 0
      %653 = vmatprep.subr.bf16.mxu0 0
      %654 = vmatpush2.bf16.msra.mxu0 0
      %655 = vmatprep.subr.bf16.mxu0 0
      %656 = vmatpush2.bf16.msra.mxu0 0
      %657 = vmatprep.subr.bf16.mxu0 0
      %658 = vmatpush2.bf16.msra.mxu0 0
      %659 = vmatprep.mubr.bf16.mxu0 0
      %660 = vmatmul.mubr.bf16.gmra.mxu0 %v604
      %v661 = vpop.f32.mrf.mxu0
      %v662 = vadd.f32 %v588, %v661
      %v663 = vpop.f32.mrf.mxu0
      %v664 = vpop.f32.mrf.mxu0
      %v665 = vadd.f32 %v588, %v664
      %v666 = vpop.f32.mrf.mxu0
      %667 = vmatprep.mubr.bf16.mxu0 0
      %668 = vmatmul.mubr.bf16.gmra.mxu0 %v607
      %v669 = vpop.f32.mrf.mxu0
      %v670 = vadd.f32 %v588, %v669
      %v671 = vpop.f32.mrf.mxu0
      %v672 = vpop.f32.mrf.mxu0
      %v673 = vadd.f32 %v588, %v672
      %v674 = vpop.f32.mrf.mxu0
      %675 = vmatprep.mubr.bf16.mxu0 0
      %676 = vmatmul.mubr.bf16.gmra.mxu0 %v610
      %v677 = vpop.f32.mrf.mxu0
      %v678 = vadd.f32 %v588, %v677
      %v679 = vpop.f32.mrf.mxu0
      %v680 = vpop.f32.mrf.mxu0
      %v681 = vadd.f32 %v588, %v680
      %v682 = vpop.f32.mrf.mxu0
      %683 = vmatprep.mubr.bf16.mxu0 0
      %684 = vmatmul.mubr.bf16.gmra.mxu0 %v613
      %v685 = vpop.f32.mrf.mxu0
      %v686 = vadd.f32 %v588, %v685
      %v687 = vpop.f32.mrf.mxu0
      %v688 = vpop.f32.mrf.mxu0
      %v689 = vadd.f32 %v588, %v688
      %v690 = vpop.f32.mrf.mxu0
      %691 = vmatprep.mubr.bf16.mxu0 0
      %692 = vmatmul.mubr.bf16.gmra.mxu0 %v616
      %v693 = vpop.f32.mrf.mxu0
      %v694 = vadd.f32 %v588, %v693
      %v695 = vpop.f32.mrf.mxu0
      %v696 = vpop.f32.mrf.mxu0
      %v697 = vadd.f32 %v588, %v696
      %v698 = vpop.f32.mrf.mxu0
      %699 = vmatprep.mubr.bf16.mxu0 0
      %700 = vmatmul.mubr.bf16.gmra.mxu0 %v619
      %v701 = vpop.f32.mrf.mxu0
      %v702 = vadd.f32 %v588, %v701
      %v703 = vpop.f32.mrf.mxu0
      %v704 = vpop.f32.mrf.mxu0
      %v705 = vadd.f32 %v588, %v704
      %v706 = vpop.f32.mrf.mxu0
      %707 = vmatprep.mubr.bf16.mxu0 0
      %708 = vmatmul.mubr.bf16.gmra.mxu0 %v622
      %v709 = vpop.f32.mrf.mxu0
      %v710 = vadd.f32 %v588, %v709
      %v711 = vpop.f32.mrf.mxu0
      %v712 = vpop.f32.mrf.mxu0
      %v713 = vadd.f32 %v588, %v712
      %v714 = vpop.f32.mrf.mxu0
      %715 = vmatprep.mubr.bf16.mxu0 0
      %716 = vmatmul.mubr.bf16.gmra.mxu0 %v625
      %v717 = vpop.f32.mrf.mxu0
      %v718 = vadd.f32 %v588, %v717
      %v719 = vpop.f32.mrf.mxu0
      %v720 = vpop.f32.mrf.mxu0
      %v721 = vadd.f32 %v588, %v720
      %v722 = vpop.f32.mrf.mxu0
      %723 = vdwg.mxu0
      %v724 = vld [vmem:[%s535] sm:$0xff]
      %v725 = vld [vmem:[%s535 + $0x8] sm:$0xff]
      %v726 = vld [vmem:[%s535 + $0x10] sm:$0xff]
      %v727 = vld [vmem:[%s535 + $0x18] sm:$0xff]
      %v728 = vld [vmem:[%s535 + $0x20] sm:$0xff]
      %v729 = vld [vmem:[%s535 + $0x28] sm:$0xff]
      %v730 = vld [vmem:[%s535 + $0x30] sm:$0xff]
      %v731 = vld [vmem:[%s535 + $0x38] sm:$0xff]
      %v732 = vld [vmem:[%s535 + $0x40] sm:$0xff]
      %v733 = vld [vmem:[%s535 + $0x48] sm:$0xff]
      %v734 = vld [vmem:[%s535 + $0x50] sm:$0xff]
      %v735 = vld [vmem:[%s535 + $0x58] sm:$0xff]
      %v736 = vld [vmem:[%s535 + $0x60] sm:$0xff]
      %v737 = vld [vmem:[%s535 + $0x68] sm:$0xff]
      %v738 = vld [vmem:[%s535 + $0x70] sm:$0xff]
      %v739 = vld [vmem:[%s535 + $0x78] sm:$0xff]
      %v740 = vld [vmem:[%s540] sm:$0xff]
      %v741 = vld [vmem:[%s540 + $0x8] sm:$0xff]
      %v742 = vld [vmem:[%s540 + $0x10] sm:$0xff]
      %v743 = vld [vmem:[%s540 + $0x18] sm:$0xff]
      %v744 = vld [vmem:[%s540 + $0x20] sm:$0xff]
      %v745 = vld [vmem:[%s540 + $0x28] sm:$0xff]
      %v746 = vld [vmem:[%s540 + $0x30] sm:$0xff]
      %v747 = vld [vmem:[%s540 + $0x38] sm:$0xff]
      %v748 = vld [vmem:[%s540 + $0x40] sm:$0xff]
      %v749 = vld [vmem:[%s540 + $0x48] sm:$0xff]
      %v750 = vld [vmem:[%s540 + $0x50] sm:$0xff]
      %v751 = vld [vmem:[%s540 + $0x58] sm:$0xff]
      %v752 = vld [vmem:[%s540 + $0x60] sm:$0xff]
      %v753 = vld [vmem:[%s540 + $0x68] sm:$0xff]
      %v754 = vld [vmem:[%s540 + $0x70] sm:$0xff]
      %v755 = vld [vmem:[%s540 + $0x78] sm:$0xff]
      %v756 = vmul.f32 %v662, %v724
      %v757 = vmul.f32 %v665, %v725
      %v758 = vmul.f32 %v670, %v726
      %v759 = vmul.f32 %v673, %v727
      %v760 = vmul.f32 %v678, %v728
      %v761 = vmul.f32 %v681, %v729
      %v762 = vmul.f32 %v686, %v730
      %v763 = vmul.f32 %v689, %v731
      %v764 = vmul.f32 %v694, %v732
      %v765 = vmul.f32 %v697, %v733
      %v766 = vmul.f32 %v702, %v734
      %v767 = vmul.f32 %v705, %v735
      %v768 = vmul.f32 %v710, %v736
      %v769 = vmul.f32 %v713, %v737
      %v770 = vmul.f32 %v718, %v738
      %v771 = vmul.f32 %v721, %v739
      %788 = vrot.lane.b32.xlu0 %v740, 16
      %v789 = vpop.permute.xlu0 %788
      %790 = vrot.lane.b32.xlu0 %v741, 16
      %v791 = vpop.permute.xlu0 %790
      %792 = vrot.lane.b32.xlu0 %v742, 16
      %v793 = vpop.permute.xlu0 %792
      %794 = vrot.lane.b32.xlu0 %v743, 16
      %v795 = vpop.permute.xlu0 %794
      %796 = vrot.lane.b32.xlu0 %v744, 16
      %v797 = vpop.permute.xlu0 %796
      %798 = vrot.lane.b32.xlu0 %v745, 16
      %v799 = vpop.permute.xlu0 %798
      %800 = vrot.lane.b32.xlu0 %v746, 16
      %v801 = vpop.permute.xlu0 %800
      %802 = vrot.lane.b32.xlu0 %v747, 16
      %v803 = vpop.permute.xlu0 %802
      %804 = vrot.lane.b32.xlu0 %v748, 16
      %v805 = vpop.permute.xlu0 %804
      %806 = vrot.lane.b32.xlu0 %v749, 16
      %v807 = vpop.permute.xlu0 %806
      %808 = vrot.lane.b32.xlu0 %v750, 16
      %v809 = vpop.permute.xlu0 %808
      %810 = vrot.lane.b32.xlu0 %v751, 16
      %v811 = vpop.permute.xlu0 %810
      %812 = vrot.lane.b32.xlu0 %v752, 16
      %v813 = vpop.permute.xlu0 %812
      %814 = vrot.lane.b32.xlu0 %v753, 16
      %v815 = vpop.permute.xlu0 %814
      %816 = vrot.lane.b32.xlu0 %v754, 16
      %v817 = vpop.permute.xlu0 %816
      %818 = vrot.lane.b32.xlu0 %v755, 16
      %v819 = vpop.permute.xlu0 %818
      %v836 = vmul.f32 %v662, %v789
      %v837 = vmul.f32 %v665, %v791
      %v838 = vmul.f32 %v670, %v793
      %v839 = vmul.f32 %v673, %v795
      %v840 = vmul.f32 %v678, %v797
      %v841 = vmul.f32 %v681, %v799
      %v842 = vmul.f32 %v686, %v801
      %v843 = vmul.f32 %v689, %v803
      %v844 = vmul.f32 %v694, %v805
      %v845 = vmul.f32 %v697, %v807
      %v846 = vmul.f32 %v702, %v809
      %v847 = vmul.f32 %v705, %v811
      %v848 = vmul.f32 %v710, %v813
      %v849 = vmul.f32 %v713, %v815
      %v850 = vmul.f32 %v718, %v817
      %v851 = vmul.f32 %v721, %v819
      %868 = vrot.lane.b32.xlu0 %v836, 112
      %v869 = vpop.permute.xlu0 %868
      %870 = vrot.lane.b32.xlu0 %v837, 112
      %v871 = vpop.permute.xlu0 %870
      %872 = vrot.lane.b32.xlu0 %v838, 112
      %v873 = vpop.permute.xlu0 %872
      %874 = vrot.lane.b32.xlu0 %v839, 112
      %v875 = vpop.permute.xlu0 %874
      %876 = vrot.lane.b32.xlu0 %v840, 112
      %v877 = vpop.permute.xlu0 %876
      %878 = vrot.lane.b32.xlu0 %v841, 112
      %v879 = vpop.permute.xlu0 %878
      %880 = vrot.lane.b32.xlu0 %v842, 112
      %v881 = vpop.permute.xlu0 %880
      %882 = vrot.lane.b32.xlu0 %v843, 112
      %v883 = vpop.permute.xlu0 %882
      %884 = vrot.lane.b32.xlu0 %v844, 112
      %v885 = vpop.permute.xlu0 %884
      %886 = vrot.lane.b32.xlu0 %v845, 112
      %v887 = vpop.permute.xlu0 %886
      %888 = vrot.lane.b32.xlu0 %v846, 112
      %v889 = vpop.permute.xlu0 %888
      %890 = vrot.lane.b32.xlu0 %v847, 112
      %v891 = vpop.permute.xlu0 %890
      %892 = vrot.lane.b32.xlu0 %v848, 112
      %v893 = vpop.permute.xlu0 %892
      %894 = vrot.lane.b32.xlu0 %v849, 112
      %v895 = vpop.permute.xlu0 %894
      %896 = vrot.lane.b32.xlu0 %v850, 112
      %v897 = vpop.permute.xlu0 %896
      %898 = vrot.lane.b32.xlu0 %v851, 112
      %v899 = vpop.permute.xlu0 %898
      %v916 = vadd.f32 %v756, %v869
      %v917 = vadd.f32 %v757, %v871
      %v918 = vadd.f32 %v758, %v873
      %v919 = vadd.f32 %v759, %v875
      %v920 = vadd.f32 %v760, %v877
      %v921 = vadd.f32 %v761, %v879
      %v922 = vadd.f32 %v762, %v881
      %v923 = vadd.f32 %v763, %v883
      %v924 = vadd.f32 %v764, %v885
      %v925 = vadd.f32 %v765, %v887
      %v926 = vadd.f32 %v766, %v889
      %v927 = vadd.f32 %v767, %v891
      %v928 = vadd.f32 %v768, %v893
      %v929 = vadd.f32 %v769, %v895
      %v930 = vadd.f32 %v770, %v897
      %v931 = vadd.f32 %v771, %v899
      %948 = vrot.lane.b32.xlu0 %v724, 32
      %v949 = vpop.permute.xlu0 %948
      %950 = vrot.lane.b32.xlu0 %v725, 32
      %v951 = vpop.permute.xlu0 %950
      %952 = vrot.lane.b32.xlu0 %v726, 32
      %v953 = vpop.permute.xlu0 %952
      %954 = vrot.lane.b32.xlu0 %v727, 32
      %v955 = vpop.permute.xlu0 %954
      %956 = vrot.lane.b32.xlu0 %v728, 32
      %v957 = vpop.permute.xlu0 %956
      %958 = vrot.lane.b32.xlu0 %v729, 32
      %v959 = vpop.permute.xlu0 %958
      %960 = vrot.lane.b32.xlu0 %v730, 32
      %v961 = vpop.permute.xlu0 %960
      %962 = vrot.lane.b32.xlu0 %v731, 32
      %v963 = vpop.permute.xlu0 %962
      %964 = vrot.lane.b32.xlu0 %v732, 32
      %v965 = vpop.permute.xlu0 %964
      %966 = vrot.lane.b32.xlu0 %v733, 32
      %v967 = vpop.permute.xlu0 %966
      %968 = vrot.lane.b32.xlu0 %v734, 32
      %v969 = vpop.permute.xlu0 %968
      %970 = vrot.lane.b32.xlu0 %v735, 32
      %v971 = vpop.permute.xlu0 %970
      %972 = vrot.lane.b32.xlu0 %v736, 32
      %v973 = vpop.permute.xlu0 %972
      %974 = vrot.lane.b32.xlu0 %v737, 32
      %v975 = vpop.permute.xlu0 %974
      %976 = vrot.lane.b32.xlu0 %v738, 32
      %v977 = vpop.permute.xlu0 %976
      %978 = vrot.lane.b32.xlu0 %v739, 32
      %v979 = vpop.permute.xlu0 %978
      %v996 = vmul.f32 %v662, %v949
      %v997 = vmul.f32 %v665, %v951
      %v998 = vmul.f32 %v670, %v953
      %v999 = vmul.f32 %v673, %v955
      %v1000 = vmul.f32 %v678, %v957
      %v1001 = vmul.f32 %v681, %v959
      %v1002 = vmul.f32 %v686, %v961
      %v1003 = vmul.f32 %v689, %v963
      %v1004 = vmul.f32 %v694, %v965
      %v1005 = vmul.f32 %v697, %v967
      %v1006 = vmul.f32 %v702, %v969
      %v1007 = vmul.f32 %v705, %v971
      %v1008 = vmul.f32 %v710, %v973
      %v1009 = vmul.f32 %v713, %v975
      %v1010 = vmul.f32 %v718, %v977
      %v1011 = vmul.f32 %v721, %v979
      %1012 = vrot.lane.b32.xlu0 %v740, 48
      %v1013 = vpop.permute.xlu0 %1012
      %1014 = vrot.lane.b32.xlu0 %v741, 48
      %v1015 = vpop.permute.xlu0 %1014
      %1016 = vrot.lane.b32.xlu0 %v742, 48
      %v1017 = vpop.permute.xlu0 %1016
      %1018 = vrot.lane.b32.xlu0 %v743, 48
      %v1019 = vpop.permute.xlu0 %1018
      %1020 = vrot.lane.b32.xlu0 %v744, 48
      %v1021 = vpop.permute.xlu0 %1020
      %1022 = vrot.lane.b32.xlu0 %v745, 48
      %v1023 = vpop.permute.xlu0 %1022
      %1024 = vrot.lane.b32.xlu0 %v746, 48
      %v1025 = vpop.permute.xlu0 %1024
      %1026 = vrot.lane.b32.xlu0 %v747, 48
      %v1027 = vpop.permute.xlu0 %1026
      %1028 = vrot.lane.b32.xlu0 %v748, 48
      %v1029 = vpop.permute.xlu0 %1028
      %1030 = vrot.lane.b32.xlu0 %v749, 48
      %v1031 = vpop.permute.xlu0 %1030
      %1032 = vrot.lane.b32.xlu0 %v750, 48
      %v1033 = vpop.permute.xlu0 %1032
      %1034 = vrot.lane.b32.xlu0 %v751, 48
      %v1035 = vpop.permute.xlu0 %1034
      %1036 = vrot.lane.b32.xlu0 %v752, 48
      %v1037 = vpop.permute.xlu0 %1036
      %1038 = vrot.lane.b32.xlu0 %v753, 48
      %v1039 = vpop.permute.xlu0 %1038
      %1040 = vrot.lane.b32.xlu0 %v754, 48
      %v1041 = vpop.permute.xlu0 %1040
      %1042 = vrot.lane.b32.xlu0 %v755, 48
      %v1043 = vpop.permute.xlu0 %1042
      %v1060 = vmul.f32 %v662, %v1013
      %v1061 = vmul.f32 %v665, %v1015
      %v1062 = vmul.f32 %v670, %v1017
      %v1063 = vmul.f32 %v673, %v1019
      %v1064 = vmul.f32 %v678, %v1021
      %v1065 = vmul.f32 %v681, %v1023
      %v1066 = vmul.f32 %v686, %v1025
      %v1067 = vmul.f32 %v689, %v1027
      %v1068 = vmul.f32 %v694, %v1029
      %v1069 = vmul.f32 %v697, %v1031
      %v1070 = vmul.f32 %v702, %v1033
      %v1071 = vmul.f32 %v705, %v1035
      %v1072 = vmul.f32 %v710, %v1037
      %v1073 = vmul.f32 %v713, %v1039
      %v1074 = vmul.f32 %v718, %v1041
      %v1075 = vmul.f32 %v721, %v1043
      %1092 = vrot.lane.b32.xlu0 %v1060, 112
      %v1093 = vpop.permute.xlu0 %1092
      %1094 = vrot.lane.b32.xlu0 %v1061, 112
      %v1095 = vpop.permute.xlu0 %1094
      %1096 = vrot.lane.b32.xlu0 %v1062, 112
      %v1097 = vpop.permute.xlu0 %1096
      %1098 = vrot.lane.b32.xlu0 %v1063, 112
      %v1099 = vpop.permute.xlu0 %1098
      %1100 = vrot.lane.b32.xlu0 %v1064, 112
      %v1101 = vpop.permute.xlu0 %1100
      %1102 = vrot.lane.b32.xlu0 %v1065, 112
      %v1103 = vpop.permute.xlu0 %1102
      %1104 = vrot.lane.b32.xlu0 %v1066, 112
      %v1105 = vpop.permute.xlu0 %1104
      %1106 = vrot.lane.b32.xlu0 %v1067, 112
      %v1107 = vpop.permute.xlu0 %1106
      %1108 = vrot.lane.b32.xlu0 %v1068, 112
      %v1109 = vpop.permute.xlu0 %1108
      %1110 = vrot.lane.b32.xlu0 %v1069, 112
      %v1111 = vpop.permute.xlu0 %1110
      %1112 = vrot.lane.b32.xlu0 %v1070, 112
      %v1113 = vpop.permute.xlu0 %1112
      %1114 = vrot.lane.b32.xlu0 %v1071, 112
      %v1115 = vpop.permute.xlu0 %1114
      %1116 = vrot.lane.b32.xlu0 %v1072, 112
      %v1117 = vpop.permute.xlu0 %1116
      %1118 = vrot.lane.b32.xlu0 %v1073, 112
      %v1119 = vpop.permute.xlu0 %1118
      %1120 = vrot.lane.b32.xlu0 %v1074, 112
      %v1121 = vpop.permute.xlu0 %1120
      %1122 = vrot.lane.b32.xlu0 %v1075, 112
      %v1123 = vpop.permute.xlu0 %1122
      %v1140 = vadd.f32 %v996, %v1093
      %v1141 = vadd.f32 %v997, %v1095
      %v1142 = vadd.f32 %v998, %v1097
      %v1143 = vadd.f32 %v999, %v1099
      %v1144 = vadd.f32 %v1000, %v1101
      %v1145 = vadd.f32 %v1001, %v1103
      %v1146 = vadd.f32 %v1002, %v1105
      %v1147 = vadd.f32 %v1003, %v1107
      %v1148 = vadd.f32 %v1004, %v1109
      %v1149 = vadd.f32 %v1005, %v1111
      %v1150 = vadd.f32 %v1006, %v1113
      %v1151 = vadd.f32 %v1007, %v1115
      %v1152 = vadd.f32 %v1008, %v1117
      %v1153 = vadd.f32 %v1009, %v1119
      %v1154 = vadd.f32 %v1010, %v1121
      %v1155 = vadd.f32 %v1011, %v1123
      %v1156 = vpack.c.bf16 %v917, %v916
      %v1157 = vpack.c.bf16 %v919, %v918
      %v1158 = vpack.c.bf16 %v921, %v920
      %v1159 = vpack.c.bf16 %v923, %v922
      %v1160 = vpack.c.bf16 %v925, %v924
      %v1161 = vpack.c.bf16 %v927, %v926
      %v1162 = vpack.c.bf16 %v929, %v928
      %v1163 = vpack.c.bf16 %v931, %v930
      %v1172 = vunpack.c.l.b16 %v1156
      %v1173 = vunpack.c.h.b16 %v1156
      %v1174 = vunpack.c.l.b16 %v1157
      %v1175 = vunpack.c.h.b16 %v1157
      %v1176 = vunpack.c.l.b16 %v1158
      %v1177 = vunpack.c.h.b16 %v1158
      %v1178 = vunpack.c.l.b16 %v1159
      %v1179 = vunpack.c.h.b16 %v1159
      %v1180 = vunpack.c.l.b16 %v1160
      %v1181 = vunpack.c.h.b16 %v1160
      %v1182 = vunpack.c.l.b16 %v1161
      %v1183 = vunpack.c.h.b16 %v1161
      %v1184 = vunpack.c.l.b16 %v1162
      %v1185 = vunpack.c.h.b16 %v1162
      %v1186 = vunpack.c.l.b16 %v1163
      %v1187 = vunpack.c.h.b16 %v1163
      %v1188 = vpack.c.b16 %v1172, %v1172
      %v1189 = vpack.c.b16 %v1173, %v1173
      %v1190 = vpack.c.b16 %v1174, %v1174
      %v1191 = vpack.c.b16 %v1175, %v1175
      %v1192 = vpack.c.b16 %v1176, %v1176
      %v1193 = vpack.c.b16 %v1177, %v1177
      %v1194 = vpack.c.b16 %v1178, %v1178
      %v1195 = vpack.c.b16 %v1179, %v1179
      %v1196 = vpack.c.b16 %v1180, %v1180
      %v1197 = vpack.c.b16 %v1181, %v1181
      %v1198 = vpack.c.b16 %v1182, %v1182
      %v1199 = vpack.c.b16 %v1183, %v1183
      %v1200 = vpack.c.b16 %v1184, %v1184
      %v1201 = vpack.c.b16 %v1185, %v1185
      %v1202 = vpack.c.b16 %v1186, %v1186
      %v1203 = vpack.c.b16 %v1187, %v1187
      %vm1220 = vcmask 125952
      %1221 = vst.msk [vmem:[#allocation3] sm:$0xf] %vm1220, %v1188
      %1222 = vst.msk [vmem:[#allocation3 + $0x4] sm:$0xf] %vm1220, %v1189
      %1223 = vst.msk [vmem:[#allocation3 + $0x8] sm:$0xf] %vm1220, %v1190
      %1224 = vst.msk [vmem:[#allocation3 + $0xc] sm:$0xf] %vm1220, %v1191
      %1225 = vst.msk [vmem:[#allocation3 + $0x10] sm:$0xf] %vm1220, %v1192
      %1226 = vst.msk [vmem:[#allocation3 + $0x14] sm:$0xf] %vm1220, %v1193
      %1227 = vst.msk [vmem:[#allocation3 + $0x18] sm:$0xf] %vm1220, %v1194
      %1228 = vst.msk [vmem:[#allocation3 + $0x1c] sm:$0xf] %vm1220, %v1195
      %1229 = vst.msk [vmem:[#allocation3 + $0x20] sm:$0xf] %vm1220, %v1196
      %1230 = vst.msk [vmem:[#allocation3 + $0x24] sm:$0xf] %vm1220, %v1197
      %1231 = vst.msk [vmem:[#allocation3 + $0x28] sm:$0xf] %vm1220, %v1198
      %1232 = vst.msk [vmem:[#allocation3 + $0x2c] sm:$0xf] %vm1220, %v1199
      %1233 = vst.msk [vmem:[#allocation3 + $0x30] sm:$0xf] %vm1220, %v1200
      %1234 = vst.msk [vmem:[#allocation3 + $0x34] sm:$0xf] %vm1220, %v1201
      %1235 = vst.msk [vmem:[#allocation3 + $0x38] sm:$0xf] %vm1220, %v1202
      %1236 = vst.msk [vmem:[#allocation3 + $0x3c] sm:$0xf] %vm1220, %v1203
      %1253 = vrot.lane.b32.xlu0 %v1140, 96
      %v1254 = vpop.permute.xlu0 %1253
      %1255 = vrot.lane.b32.xlu0 %v1141, 96
      %v1256 = vpop.permute.xlu0 %1255
      %1257 = vrot.lane.b32.xlu0 %v1142, 96
      %v1258 = vpop.permute.xlu0 %1257
      %1259 = vrot.lane.b32.xlu0 %v1143, 96
      %v1260 = vpop.permute.xlu0 %1259
      %1261 = vrot.lane.b32.xlu0 %v1144, 96
      %v1262 = vpop.permute.xlu0 %1261
      %1263 = vrot.lane.b32.xlu0 %v1145, 96
      %v1264 = vpop.permute.xlu0 %1263
      %1265 = vrot.lane.b32.xlu0 %v1146, 96
      %v1266 = vpop.permute.xlu0 %1265
      %1267 = vrot.lane.b32.xlu0 %v1147, 96
      %v1268 = vpop.permute.xlu0 %1267
      %1269 = vrot.lane.b32.xlu0 %v1148, 96
      %v1270 = vpop.permute.xlu0 %1269
      %1271 = vrot.lane.b32.xlu0 %v1149, 96
      %v1272 = vpop.permute.xlu0 %1271
      %1273 = vrot.lane.b32.xlu0 %v1150, 96
      %v1274 = vpop.permute.xlu0 %1273
      %1275 = vrot.lane.b32.xlu0 %v1151, 96
      %v1276 = vpop.permute.xlu0 %1275
      %1277 = vrot.lane.b32.xlu0 %v1152, 96
      %v1278 = vpop.permute.xlu0 %1277
      %1279 = vrot.lane.b32.xlu0 %v1153, 96
      %v1280 = vpop.permute.xlu0 %1279
      %1281 = vrot.lane.b32.xlu0 %v1154, 96
      %v1282 = vpop.permute.xlu0 %1281
      %1283 = vrot.lane.b32.xlu0 %v1155, 96
      %v1284 = vpop.permute.xlu0 %1283
      %1301 = vxpose.xlu0.b32.start [1/16] %v1254, 128
      %1302 = vxpose.xlu0.b32.cont [2/16] %v1256, 128
      %1303 = vxpose.xlu0.b32.cont [3/16] %v1258, 128
      %1304 = vxpose.xlu0.b32.cont [4/16] %v1260, 128
      %1305 = vxpose.xlu0.b32.cont [5/16] %v1262, 128
      %1306 = vxpose.xlu0.b32.cont [6/16] %v1264, 128
      %1307 = vxpose.xlu0.b32.cont [7/16] %v1266, 128
      %1308 = vxpose.xlu0.b32.cont [8/16] %v1268, 128
      %1309 = vxpose.xlu0.b32.cont [9/16] %v1270, 128
      %1310 = vxpose.xlu0.b32.cont [10/16] %v1272, 128
      %1311 = vxpose.xlu0.b32.cont [11/16] %v1274, 128
      %1312 = vxpose.xlu0.b32.cont [12/16] %v1276, 128
      %1313 = vxpose.xlu0.b32.cont [13/16] %v1278, 128
      %1314 = vxpose.xlu0.b32.cont [14/16] %v1280, 128
      %1315 = vxpose.xlu0.b32.cont [15/16] %v1282, 128
      %1316 = vxpose.xlu0.b32.end [16/16] %v1284, 128
      %v1317 = vpop.trf.xlu0
      %v1318 = vpop.trf.xlu0
      %v1319 = vpop.trf.xlu0
      %v1320 = vpop.trf.xlu0
      %v1321 = vpop.trf.xlu0
      %v1322 = vpop.trf.xlu0
      %v1323 = vpop.trf.xlu0
      %v1324 = vpop.trf.xlu0
      %v1325 = vpop.trf.xlu0
      %v1326 = vpop.trf.xlu0
      %v1327 = vpop.trf.xlu0
      %v1328 = vpop.trf.xlu0
      %v1329 = vpop.trf.xlu0
      %v1330 = vpop.trf.xlu0
      %v1331 = vpop.trf.xlu0
      %v1332 = vpop.trf.xlu0
      %v1333 = vpack.c.bf16 %v1318, %v1317
      %v1335 = vunpack.c.l.b16 %v1333
      %v1336 = vunpack.c.h.b16 %v1333
      %v1337 = vpack.c.b16 %v1335, %v1335
      %v1338 = vpack.c.b16 %v1336, %v1336
      %1341 = vst [vmem:[#allocation4] sm:$0xf] %v1337
      %1342 = vst [vmem:[#allocation4 + $0x4] sm:$0xf] %v1338
      %v1343 = vpack.c.bf16 %v665, %v662
      %v1344 = vpack.c.bf16 %v673, %v670
      %v1345 = vpack.c.bf16 %v681, %v678
      %v1346 = vpack.c.bf16 %v689, %v686
      %v1347 = vpack.c.bf16 %v697, %v694
      %v1348 = vpack.c.bf16 %v705, %v702
      %v1349 = vpack.c.bf16 %v713, %v710
      %v1350 = vpack.c.bf16 %v721, %v718
      %v1359 = vunpack.c.l.b16 %v1343
      %v1360 = vunpack.c.h.b16 %v1343
      %v1361 = vunpack.c.l.b16 %v1344
      %v1362 = vunpack.c.h.b16 %v1344
      %v1363 = vunpack.c.l.b16 %v1345
      %v1364 = vunpack.c.h.b16 %v1345
      %v1365 = vunpack.c.l.b16 %v1346
      %v1366 = vunpack.c.h.b16 %v1346
      %v1367 = vunpack.c.l.b16 %v1347
      %v1368 = vunpack.c.h.b16 %v1347
      %v1369 = vunpack.c.l.b16 %v1348
      %v1370 = vunpack.c.h.b16 %v1348
      %v1371 = vunpack.c.l.b16 %v1349
      %v1372 = vunpack.c.h.b16 %v1349
      %v1373 = vunpack.c.l.b16 %v1350
      %v1374 = vunpack.c.h.b16 %v1350
      %v1375 = vpack.c.b16 %v1359, %v1359
      %v1376 = vpack.c.b16 %v1360, %v1360
      %v1377 = vpack.c.b16 %v1361, %v1361
      %v1378 = vpack.c.b16 %v1362, %v1362
      %v1379 = vpack.c.b16 %v1363, %v1363
      %v1380 = vpack.c.b16 %v1364, %v1364
      %v1381 = vpack.c.b16 %v1365, %v1365
      %v1382 = vpack.c.b16 %v1366, %v1366
      %v1383 = vpack.c.b16 %v1367, %v1367
      %v1384 = vpack.c.b16 %v1368, %v1368
      %v1385 = vpack.c.b16 %v1369, %v1369
      %v1386 = vpack.c.b16 %v1370, %v1370
      %v1387 = vpack.c.b16 %v1371, %v1371
      %v1388 = vpack.c.b16 %v1372, %v1372
      %v1389 = vpack.c.b16 %v1373, %v1373
      %v1390 = vpack.c.b16 %v1374, %v1374
      %1391 = vrot.lane.b32.xlu0 %v1375, 64
      %v1392 = vpop.permute.xlu0 %1391
      %1393 = vrot.lane.b32.xlu0 %v1376, 64
      %v1394 = vpop.permute.xlu0 %1393
      %1395 = vrot.lane.b32.xlu0 %v1377, 64
      %v1396 = vpop.permute.xlu0 %1395
      %1397 = vrot.lane.b32.xlu0 %v1378, 64
      %v1398 = vpop.permute.xlu0 %1397
      %1399 = vrot.lane.b32.xlu0 %v1379, 64
      %v1400 = vpop.permute.xlu0 %1399
      %1401 = vrot.lane.b32.xlu0 %v1380, 64
      %v1402 = vpop.permute.xlu0 %1401
      %1403 = vrot.lane.b32.xlu0 %v1381, 64
      %v1404 = vpop.permute.xlu0 %1403
      %1405 = vrot.lane.b32.xlu0 %v1382, 64
      %v1406 = vpop.permute.xlu0 %1405
      %1407 = vrot.lane.b32.xlu0 %v1383, 64
      %v1408 = vpop.permute.xlu0 %1407
      %1409 = vrot.lane.b32.xlu0 %v1384, 64
      %v1410 = vpop.permute.xlu0 %1409
      %1411 = vrot.lane.b32.xlu0 %v1385, 64
      %v1412 = vpop.permute.xlu0 %1411
      %1413 = vrot.lane.b32.xlu0 %v1386, 64
      %v1414 = vpop.permute.xlu0 %1413
      %1415 = vrot.lane.b32.xlu0 %v1387, 64
      %v1416 = vpop.permute.xlu0 %1415
      %1417 = vrot.lane.b32.xlu0 %v1388, 64
      %v1418 = vpop.permute.xlu0 %1417
      %1419 = vrot.lane.b32.xlu0 %v1389, 64
      %v1420 = vpop.permute.xlu0 %1419
      %1421 = vrot.lane.b32.xlu0 %v1390, 64
      %v1422 = vpop.permute.xlu0 %1421
      %1439 = vst.msk [vmem:[#allocation5] sm:$0xf] %vm1220, %v1392
      %1440 = vst.msk [vmem:[#allocation5 + $0x4] sm:$0xf] %vm1220, %v1394
      %1441 = vst.msk [vmem:[#allocation5 + $0x8] sm:$0xf] %vm1220, %v1396
      %1442 = vst.msk [vmem:[#allocation5 + $0xc] sm:$0xf] %vm1220, %v1398
      %1443 = vst.msk [vmem:[#allocation5 + $0x10] sm:$0xf] %vm1220, %v1400
      %1444 = vst.msk [vmem:[#allocation5 + $0x14] sm:$0xf] %vm1220, %v1402
      %1445 = vst.msk [vmem:[#allocation5 + $0x18] sm:$0xf] %vm1220, %v1404
      %1446 = vst.msk [vmem:[#allocation5 + $0x1c] sm:$0xf] %vm1220, %v1406
      %1447 = vst.msk [vmem:[#allocation5 + $0x20] sm:$0xf] %vm1220, %v1408
      %1448 = vst.msk [vmem:[#allocation5 + $0x24] sm:$0xf] %vm1220, %v1410
      %1449 = vst.msk [vmem:[#allocation5 + $0x28] sm:$0xf] %vm1220, %v1412
      %1450 = vst.msk [vmem:[#allocation5 + $0x2c] sm:$0xf] %vm1220, %v1414
      %1451 = vst.msk [vmem:[#allocation5 + $0x30] sm:$0xf] %vm1220, %v1416
      %1452 = vst.msk [vmem:[#allocation5 + $0x34] sm:$0xf] %vm1220, %v1418
      %1453 = vst.msk [vmem:[#allocation5 + $0x38] sm:$0xf] %vm1220, %v1420
      %1454 = vst.msk [vmem:[#allocation5 + $0x3c] sm:$0xf] %vm1220, %v1422
      %v1455 = vlaneseq
      %v1456 = vand.u32 %v1455, 127
      %vm1457 = vcmp.lt.s32.totalorder %v1456, 8
      %v1458 = vsel %vm1457, 0.0, -1e+30
      %v1459 = vld [vmem:[#allocation3] sm:$0xf]
      %v1460 = vld [vmem:[#allocation3 + $0x4] sm:$0xf]
      %v1461 = vld [vmem:[#allocation3 + $0x8] sm:$0xf]
      %v1462 = vld [vmem:[#allocation3 + $0xc] sm:$0xf]
      %v1463 = vld [vmem:[#allocation3 + $0x10] sm:$0xf]
      %v1464 = vld [vmem:[#allocation3 + $0x14] sm:$0xf]
      %v1465 = vld [vmem:[#allocation3 + $0x18] sm:$0xf]
      %v1466 = vld [vmem:[#allocation3 + $0x1c] sm:$0xf]
      %v1467 = vld [vmem:[#allocation3 + $0x20] sm:$0xf]
      %v1468 = vld [vmem:[#allocation3 + $0x24] sm:$0xf]
      %v1469 = vld [vmem:[#allocation3 + $0x28] sm:$0xf]
      %v1470 = vld [vmem:[#allocation3 + $0x2c] sm:$0xf]
      %v1471 = vld [vmem:[#allocation3 + $0x30] sm:$0xf]
      %v1472 = vld [vmem:[#allocation3 + $0x34] sm:$0xf]
      %v1473 = vld [vmem:[#allocation3 + $0x38] sm:$0xf]
      %v1474 = vld [vmem:[#allocation3 + $0x3c] sm:$0xf]
      %v1475 = vld [vmem:[#allocation4] sm:$0xf]
      %v1476 = vld [vmem:[#allocation4 + $0x4] sm:$0xf]
      %v1493 = vunpack.c.l.b16 %v1459
      %v1494 = vunpack.c.l.b16 %v1460
      %v1495 = vunpack.c.l.b16 %v1461
      %v1496 = vunpack.c.l.b16 %v1462
      %v1497 = vunpack.c.l.b16 %v1463
      %v1498 = vunpack.c.l.b16 %v1464
      %v1499 = vunpack.c.l.b16 %v1465
      %v1500 = vunpack.c.l.b16 %v1466
      %v1501 = vunpack.c.l.b16 %v1467
      %v1502 = vunpack.c.l.b16 %v1468
      %v1503 = vunpack.c.l.b16 %v1469
      %v1504 = vunpack.c.l.b16 %v1470
      %v1505 = vunpack.c.l.b16 %v1471
      %v1506 = vunpack.c.l.b16 %v1472
      %v1507 = vunpack.c.l.b16 %v1473
      %v1508 = vunpack.c.l.b16 %v1474
      %v1509 = vpack.c.b16 %v1494, %v1493
      %v1510 = vpack.c.b16 %v1496, %v1495
      %v1511 = vpack.c.b16 %v1498, %v1497
      %v1512 = vpack.c.b16 %v1500, %v1499
      %v1513 = vpack.c.b16 %v1502, %v1501
      %v1514 = vpack.c.b16 %v1504, %v1503
      %v1515 = vpack.c.b16 %v1506, %v1505
      %v1516 = vpack.c.b16 %v1508, %v1507
      %v1519 = vunpack.c.l.b16 %v1475
      %v1520 = vunpack.c.l.b16 %v1476
      %v1521 = vpack.c.b16 %v1520, %v1519
      %vm1523 = vcmask 130048
      %v1525 = vsel %vm1523, %v1509, 0
      %v1528 = vsel %vm1523, %v1510, 0
      %v1531 = vsel %vm1523, %v1511, 0
      %v1534 = vsel %vm1523, %v1512, 0
      %v1537 = vsel %vm1523, %v1513, 0
      %v1540 = vsel %vm1523, %v1514, 0
      %v1543 = vsel %vm1523, %v1515, 0
      %v1546 = vsel %vm1523, %v1516, 0
      %1548 = vmatprep.subr.bf16.mxu0 0
      %1549 = vmatpush1.bf16.msra.mxu0 0
      %1550 = vmatprep.subr.bf16.mxu0 0
      %1551 = vmatpush1.bf16.msra.mxu0 0
      %1552 = vmatprep.subr.bf16.mxu0 0
      %1553 = vmatpush1.bf16.msra.mxu0 0
      %1554 = vmatprep.subr.bf16.mxu0 0
      %1555 = vmatpush1.bf16.msra.mxu0 0
      %1556 = vmatprep.subr.bf16.mxu0 0
      %1557 = vmatpush1.bf16.msra.mxu0 0
      %1558 = vmatprep.subr.bf16.mxu0 0
      %1559 = vmatpush1.bf16.msra.mxu0 0
      %1560 = vmatprep.subr.bf16.mxu0 0
      %1561 = vmatpush1.bf16.msra.mxu0 0
      %1562 = vmatprep.subr.bf16.mxu0 0
      %1563 = vmatpush1.bf16.msra.mxu0 %v1521
      %1564 = vmatprep.subr.bf16.mxu0 0
      %1565 = vmatpush2.bf16.msra.mxu0 0
      %1566 = vmatprep.subr.bf16.mxu0 0
      %1567 = vmatpush2.bf16.msra.mxu0 0
      %1568 = vmatprep.subr.bf16.mxu0 0
      %1569 = vmatpush2.bf16.msra.mxu0 0
      %1570 = vmatprep.subr.bf16.mxu0 0
      %1571 = vmatpush2.bf16.msra.mxu0 0
      %1572 = vmatprep.subr.bf16.mxu0 0
      %1573 = vmatpush2.bf16.msra.mxu0 0
      %1574 = vmatprep.subr.bf16.mxu0 0
      %1575 = vmatpush2.bf16.msra.mxu0 0
      %1576 = vmatprep.subr.bf16.mxu0 0
      %1577 = vmatpush2.bf16.msra.mxu0 0
      %1578 = vmatprep.subr.bf16.mxu0 0
      %1579 = vmatpush2.bf16.msra.mxu0 0
      %1580 = vmatprep.mubr.bf16.mxu0 0
      %1581 = vmatmul.mubr.bf16.gmra.mxu0 %v1525
      %v1582 = vpop.f32.mrf.mxu0
      %v1583 = vadd.f32 %v1458, %v1582
      %v1584 = vpop.f32.mrf.mxu0
      %v1585 = vpop.f32.mrf.mxu0
      %v1586 = vadd.f32 %v1458, %v1585
      %v1587 = vpop.f32.mrf.mxu0
      %1588 = vmatprep.mubr.bf16.mxu0 0
      %1589 = vmatmul.mubr.bf16.gmra.mxu0 %v1528
      %v1590 = vpop.f32.mrf.mxu0
      %v1591 = vadd.f32 %v1458, %v1590
      %v1592 = vpop.f32.mrf.mxu0
      %v1593 = vpop.f32.mrf.mxu0
      %v1594 = vadd.f32 %v1458, %v1593
      %v1595 = vpop.f32.mrf.mxu0
      %1596 = vmatprep.mubr.bf16.mxu0 0
      %1597 = vmatmul.mubr.bf16.gmra.mxu0 %v1531
      %v1598 = vpop.f32.mrf.mxu0
      %v1599 = vadd.f32 %v1458, %v1598
      %v1600 = vpop.f32.mrf.mxu0
      %v1601 = vpop.f32.mrf.mxu0
      %v1602 = vadd.f32 %v1458, %v1601
      %v1603 = vpop.f32.mrf.mxu0
      %1604 = vmatprep.mubr.bf16.mxu0 0
      %1605 = vmatmul.mubr.bf16.gmra.mxu0 %v1534
      %v1606 = vpop.f32.mrf.mxu0
      %v1607 = vadd.f32 %v1458, %v1606
      %v1608 = vpop.f32.mrf.mxu0
      %v1609 = vpop.f32.mrf.mxu0
      %v1610 = vadd.f32 %v1458, %v1609
      %v1611 = vpop.f32.mrf.mxu0
      %1612 = vmatprep.mubr.bf16.mxu0 0
      %1613 = vmatmul.mubr.bf16.gmra.mxu0 %v1537
      %v1614 = vpop.f32.mrf.mxu0
      %v1615 = vadd.f32 %v1458, %v1614
      %v1616 = vpop.f32.mrf.mxu0
      %v1617 = vpop.f32.mrf.mxu0
      %v1618 = vadd.f32 %v1458, %v1617
      %v1619 = vpop.f32.mrf.mxu0
      %1620 = vmatprep.mubr.bf16.mxu0 0
      %1621 = vmatmul.mubr.bf16.gmra.mxu0 %v1540
      %v1622 = vpop.f32.mrf.mxu0
      %v1623 = vadd.f32 %v1458, %v1622
      %v1624 = vpop.f32.mrf.mxu0
      %v1625 = vpop.f32.mrf.mxu0
      %v1626 = vadd.f32 %v1458, %v1625
      %v1627 = vpop.f32.mrf.mxu0
      %1628 = vmatprep.mubr.bf16.mxu0 0
      %1629 = vmatmul.mubr.bf16.gmra.mxu0 %v1543
      %v1630 = vpop.f32.mrf.mxu0
      %v1631 = vadd.f32 %v1458, %v1630
      %v1632 = vpop.f32.mrf.mxu0
      %v1633 = vpop.f32.mrf.mxu0
      %v1634 = vadd.f32 %v1458, %v1633
      %v1635 = vpop.f32.mrf.mxu0
      %1636 = vmatprep.mubr.bf16.mxu0 0
      %1637 = vmatmul.mubr.bf16.gmra.mxu0 %v1546
      %v1638 = vpop.f32.mrf.mxu0
      %v1639 = vadd.f32 %v1458, %v1638
      %v1640 = vpop.f32.mrf.mxu0
      %v1641 = vpop.f32.mrf.mxu0
      %v1642 = vadd.f32 %v1458, %v1641
      %v1643 = vpop.f32.mrf.mxu0
      %1644 = vdwg.mxu0
      %1645 = vmax.xlane.f32.xlu0 %v1583
      %v1646 = vpop.xlane.xlu0 %1645
      %1647 = vmax.xlane.f32.xlu0 %v1586
      %v1648 = vpop.xlane.xlu0 %1647
      %1649 = vmax.xlane.f32.xlu0 %v1591
      %v1650 = vpop.xlane.xlu0 %1649
      %1651 = vmax.xlane.f32.xlu0 %v1594
      %v1652 = vpop.xlane.xlu0 %1651
      %1653 = vmax.xlane.f32.xlu0 %v1599
      %v1654 = vpop.xlane.xlu0 %1653
      %1655 = vmax.xlane.f32.xlu0 %v1602
      %v1656 = vpop.xlane.xlu0 %1655
      %1657 = vmax.xlane.f32.xlu0 %v1607
      %v1658 = vpop.xlane.xlu0 %1657
      %1659 = vmax.xlane.f32.xlu0 %v1610
      %v1660 = vpop.xlane.xlu0 %1659
      %1661 = vmax.xlane.f32.xlu0 %v1615
      %v1662 = vpop.xlane.xlu0 %1661
      %1663 = vmax.xlane.f32.xlu0 %v1618
      %v1664 = vpop.xlane.xlu0 %1663
      %1665 = vmax.xlane.f32.xlu0 %v1623
      %v1666 = vpop.xlane.xlu0 %1665
      %1667 = vmax.xlane.f32.xlu0 %v1626
      %v1668 = vpop.xlane.xlu0 %1667
      %1669 = vmax.xlane.f32.xlu0 %v1631
      %v1670 = vpop.xlane.xlu0 %1669
      %1671 = vmax.xlane.f32.xlu0 %v1634
      %v1672 = vpop.xlane.xlu0 %1671
      %1673 = vmax.xlane.f32.xlu0 %v1639
      %v1674 = vpop.xlane.xlu0 %1673
      %1675 = vmax.xlane.f32.xlu0 %v1642
      %v1676 = vpop.xlane.xlu0 %1675
      %v1677 = vsub.f32 %v1583, %v1646
      %v1678 = vsub.f32 %v1586, %v1648
      %v1679 = vsub.f32 %v1591, %v1650
      %v1680 = vsub.f32 %v1594, %v1652
      %v1681 = vsub.f32 %v1599, %v1654
      %v1682 = vsub.f32 %v1602, %v1656
      %v1683 = vsub.f32 %v1607, %v1658
      %v1684 = vsub.f32 %v1610, %v1660
      %v1685 = vsub.f32 %v1615, %v1662
      %v1686 = vsub.f32 %v1618, %v1664
      %v1687 = vsub.f32 %v1623, %v1666
      %v1688 = vsub.f32 %v1626, %v1668
      %v1689 = vsub.f32 %v1631, %v1670
      %v1690 = vsub.f32 %v1634, %v1672
      %v1691 = vsub.f32 %v1639, %v1674
      %v1692 = vsub.f32 %v1642, %v1676
      %v1693 = vpack.c.bf16 %v1678, %v1677
      %v1694 = vpack.c.bf16 %v1680, %v1679
      %v1695 = vpack.c.bf16 %v1682, %v1681
      %v1696 = vpack.c.bf16 %v1684, %v1683
      %v1697 = vpack.c.bf16 %v1686, %v1685
      %v1698 = vpack.c.bf16 %v1688, %v1687
      %v1699 = vpack.c.bf16 %v1690, %v1689
      %v1700 = vpack.c.bf16 %v1692, %v1691
      %v1702 = vmul.bf16 %v1693, 1069105081
      %v1703 = vpow.bf16.pop %v1702
      %v1705 = vmul.bf16 %v1694, 1069105081
      %v1706 = vpow.bf16.pop %v1705
      %v1708 = vmul.bf16 %v1695, 1069105081
      %v1709 = vpow.bf16.pop %v1708
      %v1711 = vmul.bf16 %v1696, 1069105081
      %v1712 = vpow.bf16.pop %v1711
      %v1714 = vmul.bf16 %v1697, 1069105081
      %v1715 = vpow.bf16.pop %v1714
      %v1717 = vmul.bf16 %v1698, 1069105081
      %v1718 = vpow.bf16.pop %v1717
      %v1720 = vmul.bf16 %v1699, 1069105081
      %v1721 = vpow.bf16.pop %v1720
      %v1723 = vmul.bf16 %v1700, 1069105081
      %v1724 = vpow.bf16.pop %v1723
      %v1725 = vunpack.c.l.bf16 %v1703
      %v1726 = vunpack.c.h.bf16 %v1703
      %v1727 = vunpack.c.l.bf16 %v1706
      %v1728 = vunpack.c.h.bf16 %v1706
      %v1729 = vunpack.c.l.bf16 %v1709
      %v1730 = vunpack.c.h.bf16 %v1709
      %v1731 = vunpack.c.l.bf16 %v1712
      %v1732 = vunpack.c.h.bf16 %v1712
      %v1733 = vunpack.c.l.bf16 %v1715
      %v1734 = vunpack.c.h.bf16 %v1715
      %v1735 = vunpack.c.l.bf16 %v1718
      %v1736 = vunpack.c.h.bf16 %v1718
      %v1737 = vunpack.c.l.bf16 %v1721
      %v1738 = vunpack.c.h.bf16 %v1721
      %v1739 = vunpack.c.l.bf16 %v1724
      %v1740 = vunpack.c.h.bf16 %v1724
      %1741 = vadd.xlane.f32.xlu0 %v1725
      %v1742 = vpop.xlane.xlu0 %1741
      %1743 = vadd.xlane.f32.xlu0 %v1726
      %v1744 = vpop.xlane.xlu0 %1743
      %1745 = vadd.xlane.f32.xlu0 %v1727
      %v1746 = vpop.xlane.xlu0 %1745
      %1747 = vadd.xlane.f32.xlu0 %v1728
      %v1748 = vpop.xlane.xlu0 %1747
      %1749 = vadd.xlane.f32.xlu0 %v1729
      %v1750 = vpop.xlane.xlu0 %1749
      %1751 = vadd.xlane.f32.xlu0 %v1730
      %v1752 = vpop.xlane.xlu0 %1751
      %1753 = vadd.xlane.f32.xlu0 %v1731
      %v1754 = vpop.xlane.xlu0 %1753
      %1755 = vadd.xlane.f32.xlu0 %v1732
      %v1756 = vpop.xlane.xlu0 %1755
      %1757 = vadd.xlane.f32.xlu0 %v1733
      %v1758 = vpop.xlane.xlu0 %1757
      %1759 = vadd.xlane.f32.xlu0 %v1734
      %v1760 = vpop.xlane.xlu0 %1759
      %1761 = vadd.xlane.f32.xlu0 %v1735
      %v1762 = vpop.xlane.xlu0 %1761
      %1763 = vadd.xlane.f32.xlu0 %v1736
      %v1764 = vpop.xlane.xlu0 %1763
      %1765 = vadd.xlane.f32.xlu0 %v1737
      %v1766 = vpop.xlane.xlu0 %1765
      %1767 = vadd.xlane.f32.xlu0 %v1738
      %v1768 = vpop.xlane.xlu0 %1767
      %1769 = vadd.xlane.f32.xlu0 %v1739
      %v1770 = vpop.xlane.xlu0 %1769
      %1771 = vadd.xlane.f32.xlu0 %v1740
      %v1772 = vpop.xlane.xlu0 %1771
      %v1773 = vld [vmem:[#allocation5] sm:$0xf]
      %v1774 = vld [vmem:[#allocation5 + $0x4] sm:$0xf]
      %v1775 = vld [vmem:[#allocation5 + $0x8] sm:$0xf]
      %v1776 = vld [vmem:[#allocation5 + $0xc] sm:$0xf]
      %v1777 = vld [vmem:[#allocation5 + $0x10] sm:$0xf]
      %v1778 = vld [vmem:[#allocation5 + $0x14] sm:$0xf]
      %v1779 = vld [vmem:[#allocation5 + $0x18] sm:$0xf]
      %v1780 = vld [vmem:[#allocation5 + $0x1c] sm:$0xf]
      %v1781 = vld [vmem:[#allocation5 + $0x20] sm:$0xf]
      %v1782 = vld [vmem:[#allocation5 + $0x24] sm:$0xf]
      %v1783 = vld [vmem:[#allocation5 + $0x28] sm:$0xf]
      %v1784 = vld [vmem:[#allocation5 + $0x2c] sm:$0xf]
      %v1785 = vld [vmem:[#allocation5 + $0x30] sm:$0xf]
      %v1786 = vld [vmem:[#allocation5 + $0x34] sm:$0xf]
      %v1787 = vld [vmem:[#allocation5 + $0x38] sm:$0xf]
      %v1788 = vld [vmem:[#allocation5 + $0x3c] sm:$0xf]
      %v1805 = vunpack.c.l.b16 %v1773
      %v1806 = vunpack.c.l.b16 %v1774
      %v1807 = vunpack.c.l.b16 %v1775
      %v1808 = vunpack.c.l.b16 %v1776
      %v1809 = vunpack.c.l.b16 %v1777
      %v1810 = vunpack.c.l.b16 %v1778
      %v1811 = vunpack.c.l.b16 %v1779
      %v1812 = vunpack.c.l.b16 %v1780
      %v1813 = vunpack.c.l.b16 %v1781
      %v1814 = vunpack.c.l.b16 %v1782
      %v1815 = vunpack.c.l.b16 %v1783
      %v1816 = vunpack.c.l.b16 %v1784
      %v1817 = vunpack.c.l.b16 %v1785
      %v1818 = vunpack.c.l.b16 %v1786
      %v1819 = vunpack.c.l.b16 %v1787
      %v1820 = vunpack.c.l.b16 %v1788
      %v1821 = vpack.c.b16 %v1806, %v1805
      %v1822 = vpack.c.b16 %v1808, %v1807
      %v1823 = vpack.c.b16 %v1810, %v1809
      %v1824 = vpack.c.b16 %v1812, %v1811
      %v1825 = vpack.c.b16 %v1814, %v1813
      %v1826 = vpack.c.b16 %v1816, %v1815
      %v1827 = vpack.c.b16 %v1818, %v1817
      %v1828 = vpack.c.b16 %v1820, %v1819
      %1837 = vmatprep.subr.bf16.mxu0 0
      %1838 = vmatpush1.bf16.msra.mxu0 %v1828
      %1839 = vmatprep.subr.bf16.mxu0 0
      %1840 = vmatpush1.bf16.msra.mxu0 %v1827
      %1841 = vmatprep.subr.bf16.mxu0 0
      %1842 = vmatpush1.bf16.msra.mxu0 %v1826
      %1843 = vmatprep.subr.bf16.mxu0 0
      %1844 = vmatpush1.bf16.msra.mxu0 %v1825
      %1845 = vmatprep.subr.bf16.mxu0 0
      %1846 = vmatpush1.bf16.msra.mxu0 %v1824
      %1847 = vmatprep.subr.bf16.mxu0 0
      %1848 = vmatpush1.bf16.msra.mxu0 %v1823
      %1849 = vmatprep.subr.bf16.mxu0 0
      %1850 = vmatpush1.bf16.msra.mxu0 %v1822
      %1851 = vmatprep.subr.bf16.mxu0 0
      %1852 = vmatpush1.bf16.msra.mxu0 %v1821
      %1853 = vmatprep.subr.bf16.mxu0 0
      %1854 = vmatpush2.bf16.msra.mxu0 0
      %1855 = vmatprep.subr.bf16.mxu0 0
      %1856 = vmatpush2.bf16.msra.mxu0 0
      %1857 = vmatprep.subr.bf16.mxu0 0
      %1858 = vmatpush2.bf16.msra.mxu0 0
      %1859 = vmatprep.subr.bf16.mxu0 0
      %1860 = vmatpush2.bf16.msra.mxu0 0
      %1861 = vmatprep.subr.bf16.mxu0 0
      %1862 = vmatpush2.bf16.msra.mxu0 0
      %1863 = vmatprep.subr.bf16.mxu0 0
      %1864 = vmatpush2.bf16.msra.mxu0 0
      %1865 = vmatprep.subr.bf16.mxu0 0
      %1866 = vmatpush2.bf16.msra.mxu0 0
      %1867 = vmatprep.subr.bf16.mxu0 0
      %1868 = vmatpush2.bf16.msra.mxu0 0
      %1869 = vmatprep.mubr.bf16.mxu0 0
      %1870 = vmatmul.mubr.bf16.gmra.mxu0 %v1703
      %v1871 = vpop.f32.mrf.mxu0
      %v1872 = vadd.f32 0.0, %v1871
      %v1873 = vpop.f32.mrf.mxu0
      %v1874 = vpop.f32.mrf.mxu0
      %v1875 = vadd.f32 0.0, %v1874
      %v1876 = vpop.f32.mrf.mxu0
      %1877 = vmatprep.mubr.bf16.mxu0 0
      %1878 = vmatmul.mubr.bf16.gmra.mxu0 %v1706
      %v1879 = vpop.f32.mrf.mxu0
      %v1880 = vadd.f32 0.0, %v1879
      %v1881 = vpop.f32.mrf.mxu0
      %v1882 = vpop.f32.mrf.mxu0
      %v1883 = vadd.f32 0.0, %v1882
      %v1884 = vpop.f32.mrf.mxu0
      %1885 = vmatprep.mubr.bf16.mxu0 0
      %1886 = vmatmul.mubr.bf16.gmra.mxu0 %v1709
      %v1887 = vpop.f32.mrf.mxu0
      %v1888 = vadd.f32 0.0, %v1887
      %v1889 = vpop.f32.mrf.mxu0
      %v1890 = vpop.f32.mrf.mxu0
      %v1891 = vadd.f32 0.0, %v1890
      %v1892 = vpop.f32.mrf.mxu0
      %1893 = vmatprep.mubr.bf16.mxu0 0
      %1894 = vmatmul.mubr.bf16.gmra.mxu0 %v1712
      %v1895 = vpop.f32.mrf.mxu0
      %v1896 = vadd.f32 0.0, %v1895
      %v1897 = vpop.f32.mrf.mxu0
      %v1898 = vpop.f32.mrf.mxu0
      %v1899 = vadd.f32 0.0, %v1898
      %v1900 = vpop.f32.mrf.mxu0
      %1901 = vmatprep.mubr.bf16.mxu0 0
      %1902 = vmatmul.mubr.bf16.gmra.mxu0 %v1715
      %v1903 = vpop.f32.mrf.mxu0
      %v1904 = vadd.f32 0.0, %v1903
      %v1905 = vpop.f32.mrf.mxu0
      %v1906 = vpop.f32.mrf.mxu0
      %v1907 = vadd.f32 0.0, %v1906
      %v1908 = vpop.f32.mrf.mxu0
      %1909 = vmatprep.mubr.bf16.mxu0 0
      %1910 = vmatmul.mubr.bf16.gmra.mxu0 %v1718
      %v1911 = vpop.f32.mrf.mxu0
      %v1912 = vadd.f32 0.0, %v1911
      %v1913 = vpop.f32.mrf.mxu0
      %v1914 = vpop.f32.mrf.mxu0
      %v1915 = vadd.f32 0.0, %v1914
      %v1916 = vpop.f32.mrf.mxu0
      %1917 = vmatprep.mubr.bf16.mxu0 0
      %1918 = vmatmul.mubr.bf16.gmra.mxu0 %v1721
      %v1919 = vpop.f32.mrf.mxu0
      %v1920 = vadd.f32 0.0, %v1919
      %v1921 = vpop.f32.mrf.mxu0
      %v1922 = vpop.f32.mrf.mxu0
      %v1923 = vadd.f32 0.0, %v1922
      %v1924 = vpop.f32.mrf.mxu0
      %1925 = vmatprep.mubr.bf16.mxu0 0
      %1926 = vmatmul.mubr.bf16.gmra.mxu0 %v1724
      %v1927 = vpop.f32.mrf.mxu0
      %v1928 = vadd.f32 0.0, %v1927
      %v1929 = vpop.f32.mrf.mxu0
      %v1930 = vpop.f32.mrf.mxu0
      %v1931 = vadd.f32 0.0, %v1930
      %v1932 = vpop.f32.mrf.mxu0
      %1933 = vdwg.mxu0
      %v1934 = vrcp.pop %v1742
      %v1935 = vrcp.pop %v1744
      %v1936 = vrcp.pop %v1746
      %v1937 = vrcp.pop %v1748
      %v1938 = vrcp.pop %v1750
      %v1939 = vrcp.pop %v1752
      %v1940 = vrcp.pop %v1754
      %v1941 = vrcp.pop %v1756
      %v1942 = vrcp.pop %v1758
      %v1943 = vrcp.pop %v1760
      %v1944 = vrcp.pop %v1762
      %v1945 = vrcp.pop %v1764
      %v1946 = vrcp.pop %v1766
      %v1947 = vrcp.pop %v1768
      %v1948 = vrcp.pop %v1770
      %v1949 = vrcp.pop %v1772
      %v1950 = vmul.f32 %v1872, %v1934
      %v1951 = vmul.f32 %v1875, %v1935
      %v1952 = vmul.f32 %v1880, %v1936
      %v1953 = vmul.f32 %v1883, %v1937
      %v1954 = vmul.f32 %v1888, %v1938
      %v1955 = vmul.f32 %v1891, %v1939
      %v1956 = vmul.f32 %v1896, %v1940
      %v1957 = vmul.f32 %v1899, %v1941
      %v1958 = vmul.f32 %v1904, %v1942
      %v1959 = vmul.f32 %v1907, %v1943
      %v1960 = vmul.f32 %v1912, %v1944
      %v1961 = vmul.f32 %v1915, %v1945
      %v1962 = vmul.f32 %v1920, %v1946
      %v1963 = vmul.f32 %v1923, %v1947
      %v1964 = vmul.f32 %v1928, %v1948
      %v1965 = vmul.f32 %v1931, %v1949
      %v1966 = vpack.c.bf16 %v1951, %v1950
      %v1967 = vpack.c.bf16 %v1953, %v1952
      %v1968 = vpack.c.bf16 %v1955, %v1954
      %v1969 = vpack.c.bf16 %v1957, %v1956
      %v1970 = vpack.c.bf16 %v1959, %v1958
      %v1971 = vpack.c.bf16 %v1961, %v1960
      %v1972 = vpack.c.bf16 %v1963, %v1962
      %v1973 = vpack.c.bf16 %v1965, %v1964
      %v1982 = vunpack.c.l.b16 %v1966
      %v1983 = vunpack.c.h.b16 %v1966
      %v1984 = vunpack.c.l.b16 %v1967
      %v1985 = vunpack.c.h.b16 %v1967
      %v1986 = vunpack.c.l.b16 %v1968
      %v1987 = vunpack.c.h.b16 %v1968
      %v1988 = vunpack.c.l.b16 %v1969
      %v1989 = vunpack.c.h.b16 %v1969
      %v1990 = vunpack.c.l.b16 %v1970
      %v1991 = vunpack.c.h.b16 %v1970
      %v1992 = vunpack.c.l.b16 %v1971
      %v1993 = vunpack.c.h.b16 %v1971
      %v1994 = vunpack.c.l.b16 %v1972
      %v1995 = vunpack.c.h.b16 %v1972
      %v1996 = vunpack.c.l.b16 %v1973
      %v1997 = vunpack.c.h.b16 %v1973
      %v1998 = vpack.c.b16 %v1982, %v1982
      %v1999 = vpack.c.b16 %v1983, %v1983
      %v2000 = vpack.c.b16 %v1984, %v1984
      %v2001 = vpack.c.b16 %v1985, %v1985
      %v2002 = vpack.c.b16 %v1986, %v1986
      %v2003 = vpack.c.b16 %v1987, %v1987
      %v2004 = vpack.c.b16 %v1988, %v1988
      %v2005 = vpack.c.b16 %v1989, %v1989
      %v2006 = vpack.c.b16 %v1990, %v1990
      %v2007 = vpack.c.b16 %v1991, %v1991
      %v2008 = vpack.c.b16 %v1992, %v1992
      %v2009 = vpack.c.b16 %v1993, %v1993
      %v2010 = vpack.c.b16 %v1994, %v1994
      %v2011 = vpack.c.b16 %v1995, %v1995
      %v2012 = vpack.c.b16 %v1996, %v1996
      %v2013 = vpack.c.b16 %v1997, %v1997
      %s2030 = smul.u32 %s30, 16
      %s2031 = sadd.s32 0, %s2030
      %s2032 = smul.addr %s2031, 4
      %s2033 = scalar_lea.vmem [#allocation2], %s2032
      %2034 = vst.msk [vmem:[%s2033] sm:$0xf] %vm1220, %v1998
      %2035 = vst.msk [vmem:[%s2033 + $0x4] sm:$0xf] %vm1220, %v1999
      %2036 = vst.msk [vmem:[%s2033 + $0x8] sm:$0xf] %vm1220, %v2000
      %2037 = vst.msk [vmem:[%s2033 + $0xc] sm:$0xf] %vm1220, %v2001
      %2038 = vst.msk [vmem:[%s2033 + $0x10] sm:$0xf] %vm1220, %v2002
      %2039 = vst.msk [vmem:[%s2033 + $0x14] sm:$0xf] %vm1220, %v2003
      %2040 = vst.msk [vmem:[%s2033 + $0x18] sm:$0xf] %vm1220, %v2004
      %2041 = vst.msk [vmem:[%s2033 + $0x1c] sm:$0xf] %vm1220, %v2005
      %2042 = vst.msk [vmem:[%s2033 + $0x20] sm:$0xf] %vm1220, %v2006
      %2043 = vst.msk [vmem:[%s2033 + $0x24] sm:$0xf] %vm1220, %v2007
      %2044 = vst.msk [vmem:[%s2033 + $0x28] sm:$0xf] %vm1220, %v2008
      %2045 = vst.msk [vmem:[%s2033 + $0x2c] sm:$0xf] %vm1220, %v2009
      %2046 = vst.msk [vmem:[%s2033 + $0x30] sm:$0xf] %vm1220, %v2010
      %2047 = vst.msk [vmem:[%s2033 + $0x34] sm:$0xf] %vm1220, %v2011
      %2048 = vst.msk [vmem:[%s2033 + $0x38] sm:$0xf] %vm1220, %v2012
      %2049 = vst.msk [vmem:[%s2033 + $0x3c] sm:$0xf] %vm1220, %v2013
      %p2050 = scmp.eq.s32.totalorder %s30, 1
      // Predicated region
      $region77: #{tpu_custom_call.1} parent=75 // pred_check
        %p2051 = pneg %p2050
      $region78: #{tpu_custom_call.1} parent=75 // pred_check_branch
        %2053 = sbr.rel (%p2051) target = $region80
      $region79: #{tpu_custom_call.1} parent=75 // pred_region
        %v2054 = vld [vmem:[%s5] sm:$0xf]
        %v2055 = vld [vmem:[%s5 + $0x4] sm:$0xf]
        %v2056 = vld [vmem:[%s5 + $0x8] sm:$0xf]
        %v2057 = vld [vmem:[%s5 + $0xc] sm:$0xf]
        %v2058 = vld [vmem:[%s6] sm:$0x1]
        %v2059 = vld [vmem:[%s7] sm:$0xf]
        %v2060 = vld [vmem:[%s7 + $0x4] sm:$0xf]
        %v2061 = vld [vmem:[%s7 + $0x8] sm:$0xf]
        %v2062 = vld [vmem:[%s7 + $0xc] sm:$0xf]
        %v2063 = vld [vmem:[%s8] sm:$0xf]
        %v2064 = vld [vmem:[%s8 + $0x4] sm:$0xf]
        %v2065 = vld [vmem:[%s8 + $0x8] sm:$0xf]
        %v2066 = vld [vmem:[%s8 + $0xc] sm:$0xf]
        %v2067 = vld [vmem:[%s9] sm:$0x1]
        %v2068 = vld [vmem:[%s10] sm:$0x1]
        %v2069 = vld [vmem:[%s11] sm:$0x1]
        %v2070 = vld [vmem:[%s12] sm:$0xf]
        %v2071 = vld [vmem:[%s12 + $0x4] sm:$0xf]
        %v2072 = vld [vmem:[%s12 + $0x8] sm:$0xf]
        %v2073 = vld [vmem:[%s12 + $0xc] sm:$0xf]
        %v2074 = vld [vmem:[%s12 + $0x10] sm:$0xf]
        %v2075 = vld [vmem:[%s12 + $0x14] sm:$0xf]
        %v2076 = vld [vmem:[%s12 + $0x18] sm:$0xf]
        %v2077 = vld [vmem:[%s12 + $0x1c] sm:$0xf]
        %v2078 = vld [vmem:[%s13] sm:$0x1]
        %v2079 = vld [vmem:[%s530] sm:$0xff]
        %v2080 = vld [vmem:[%s530 + $0x8] sm:$0xff]
        %v2081 = vld [vmem:[%s530 + $0x10] sm:$0xff]
        %v2082 = vld [vmem:[%s530 + $0x18] sm:$0xff]
        %v2083 = vld [vmem:[%s530 + $0x20] sm:$0xff]
        %v2084 = vld [vmem:[%s530 + $0x28] sm:$0xff]
        %v2085 = vld [vmem:[%s530 + $0x30] sm:$0xff]
        %v2086 = vld [vmem:[%s530 + $0x38] sm:$0xff]
        %v2087 = vld [vmem:[%s530 + $0x40] sm:$0xff]
        %v2088 = vld [vmem:[%s530 + $0x48] sm:$0xff]
        %v2089 = vld [vmem:[%s530 + $0x50] sm:$0xff]
        %v2090 = vld [vmem:[%s530 + $0x58] sm:$0xff]
        %v2091 = vld [vmem:[%s530 + $0x60] sm:$0xff]
        %v2092 = vld [vmem:[%s530 + $0x68] sm:$0xff]
        %v2093 = vld [vmem:[%s530 + $0x70] sm:$0xff]
        %v2094 = vld [vmem:[%s530 + $0x78] sm:$0xff]
        %v2095 = vld [vmem:[#allocation2] sm:$0xf]
        %v2096 = vld [vmem:[#allocation2 + $0x4] sm:$0xf]
        %v2097 = vld [vmem:[#allocation2 + $0x8] sm:$0xf]
        %v2098 = vld [vmem:[#allocation2 + $0xc] sm:$0xf]
        %v2099 = vld [vmem:[#allocation2 + $0x10] sm:$0xf]
        %v2100 = vld [vmem:[#allocation2 + $0x14] sm:$0xf]
        %v2101 = vld [vmem:[#allocation2 + $0x18] sm:$0xf]
        %v2102 = vld [vmem:[#allocation2 + $0x1c] sm:$0xf]
        %v2103 = vld [vmem:[#allocation2 + $0x20] sm:$0xf]
        %v2104 = vld [vmem:[#allocation2 + $0x24] sm:$0xf]
        %v2105 = vld [vmem:[#allocation2 + $0x28] sm:$0xf]
        %v2106 = vld [vmem:[#allocation2 + $0x2c] sm:$0xf]
        %v2107 = vld [vmem:[#allocation2 + $0x30] sm:$0xf]
        %v2108 = vld [vmem:[#allocation2 + $0x34] sm:$0xf]
        %v2109 = vld [vmem:[#allocation2 + $0x38] sm:$0xf]
        %v2110 = vld [vmem:[#allocation2 + $0x3c] sm:$0xf]
        %s2111 = sadd.s32 0, 16
        %s2112 = smul.addr %s2111, 4
        %s2113 = scalar_lea.vmem [#allocation2], %s2112
        %v2114 = vld [vmem:[%s2113] sm:$0xf]
        %v2115 = vld [vmem:[%s2113 + $0x4] sm:$0xf]
        %v2116 = vld [vmem:[%s2113 + $0x8] sm:$0xf]
        %v2117 = vld [vmem:[%s2113 + $0xc] sm:$0xf]
        %v2118 = vld [vmem:[%s2113 + $0x10] sm:$0xf]
        %v2119 = vld [vmem:[%s2113 + $0x14] sm:$0xf]
        %v2120 = vld [vmem:[%s2113 + $0x18] sm:$0xf]
        %v2121 = vld [vmem:[%s2113 + $0x1c] sm:$0xf]
        %v2122 = vld [vmem:[%s2113 + $0x20] sm:$0xf]
        %v2123 = vld [vmem:[%s2113 + $0x24] sm:$0xf]
        %v2124 = vld [vmem:[%s2113 + $0x28] sm:$0xf]
        %v2125 = vld [vmem:[%s2113 + $0x2c] sm:$0xf]
        %v2126 = vld [vmem:[%s2113 + $0x30] sm:$0xf]
        %v2127 = vld [vmem:[%s2113 + $0x34] sm:$0xf]
        %v2128 = vld [vmem:[%s2113 + $0x38] sm:$0xf]
        %v2129 = vld [vmem:[%s2113 + $0x3c] sm:$0xf]
        %v2146 = vunpack.c.l.b16 %v2095
        %v2147 = vunpack.c.l.b16 %v2096
        %v2148 = vunpack.c.l.b16 %v2097
        %v2149 = vunpack.c.l.b16 %v2098
        %v2150 = vunpack.c.l.b16 %v2099
        %v2151 = vunpack.c.l.b16 %v2100
        %v2152 = vunpack.c.l.b16 %v2101
        %v2153 = vunpack.c.l.b16 %v2102
        %v2154 = vunpack.c.l.b16 %v2103
        %v2155 = vunpack.c.l.b16 %v2104
        %v2156 = vunpack.c.l.b16 %v2105
        %v2157 = vunpack.c.l.b16 %v2106
        %v2158 = vunpack.c.l.b16 %v2107
        %v2159 = vunpack.c.l.b16 %v2108
        %v2160 = vunpack.c.l.b16 %v2109
        %v2161 = vunpack.c.l.b16 %v2110
        %v2162 = vpack.c.b16 %v2147, %v2146
        %v2163 = vpack.c.b16 %v2149, %v2148
        %v2164 = vpack.c.b16 %v2151, %v2150
        %v2165 = vpack.c.b16 %v2153, %v2152
        %v2166 = vpack.c.b16 %v2155, %v2154
        %v2167 = vpack.c.b16 %v2157, %v2156
        %v2168 = vpack.c.b16 %v2159, %v2158
        %v2169 = vpack.c.b16 %v2161, %v2160
        %v2186 = vunpack.c.l.b16 %v2114
        %v2187 = vunpack.c.l.b16 %v2115
        %v2188 = vunpack.c.l.b16 %v2116
        %v2189 = vunpack.c.l.b16 %v2117
        %v2190 = vunpack.c.l.b16 %v2118
        %v2191 = vunpack.c.l.b16 %v2119
        %v2192 = vunpack.c.l.b16 %v2120
        %v2193 = vunpack.c.l.b16 %v2121
        %v2194 = vunpack.c.l.b16 %v2122
        %v2195 = vunpack.c.l.b16 %v2123
        %v2196 = vunpack.c.l.b16 %v2124
        %v2197 = vunpack.c.l.b16 %v2125
        %v2198 = vunpack.c.l.b16 %v2126
        %v2199 = vunpack.c.l.b16 %v2127
        %v2200 = vunpack.c.l.b16 %v2128
        %v2201 = vunpack.c.l.b16 %v2129
        %v2202 = vpack.c.b16 %v2187, %v2186
        %v2203 = vpack.c.b16 %v2189, %v2188
        %v2204 = vpack.c.b16 %v2191, %v2190
        %v2205 = vpack.c.b16 %v2193, %v2192
        %v2206 = vpack.c.b16 %v2195, %v2194
        %v2207 = vpack.c.b16 %v2197, %v2196
        %v2208 = vpack.c.b16 %v2199, %v2198
        %v2209 = vpack.c.b16 %v2201, %v2200
        %2210 = vrot.lane.b32.xlu0 %v2202, 16
        %v2211 = vpop.permute.xlu0 %2210
        %2212 = vrot.lane.b32.xlu0 %v2203, 16
        %v2213 = vpop.permute.xlu0 %2212
        %2214 = vrot.lane.b32.xlu0 %v2204, 16
        %v2215 = vpop.permute.xlu0 %2214
        %2216 = vrot.lane.b32.xlu0 %v2205, 16
        %v2217 = vpop.permute.xlu0 %2216
        %2218 = vrot.lane.b32.xlu0 %v2206, 16
        %v2219 = vpop.permute.xlu0 %2218
        %2220 = vrot.lane.b32.xlu0 %v2207, 16
        %v2221 = vpop.permute.xlu0 %2220
        %2222 = vrot.lane.b32.xlu0 %v2208, 16
        %v2223 = vpop.permute.xlu0 %2222
        %2224 = vrot.lane.b32.xlu0 %v2209, 16
        %v2225 = vpop.permute.xlu0 %2224
        %v2228 = vsel %vm1523, %v2162, %v2211
        %v2231 = vsel %vm1523, %v2163, %v2213
        %v2234 = vsel %vm1523, %v2164, %v2215
        %v2237 = vsel %vm1523, %v2165, %v2217
        %v2240 = vsel %vm1523, %v2166, %v2219
        %v2243 = vsel %vm1523, %v2167, %v2221
        %v2246 = vsel %vm1523, %v2168, %v2223
        %v2249 = vsel %vm1523, %v2169, %v2225
        %v2251 = vlaneseq
        %v2252 = vshrl.u32 %v2251, 7
        %v2253 = vsub.s32 0, %v2252
        %v2254 = vrot.slane %v2058, %v2253
        %v2260 = vunpack.c.l.b16 %v2054
        %v2261 = vunpack.c.l.b16 %v2055
        %v2262 = vunpack.c.l.b16 %v2056
        %v2263 = vunpack.c.l.b16 %v2057
        %v2264 = vpack.c.b16 %v2261, %v2260
        %v2265 = vpack.c.b16 %v2263, %v2262
        %v2268 = vsel %vm602, %v2228, 0
        %v2270 = vsel %vm602, %v2231, 0
        %v2272 = vsel %vm602, %v2234, 0
        %v2274 = vsel %vm602, %v2237, 0
        %v2276 = vsel %vm602, %v2240, 0
        %v2278 = vsel %vm602, %v2243, 0
        %v2280 = vsel %vm602, %v2246, 0
        %v2282 = vsel %vm602, %v2249, 0
        %2284 = vmatprep.subr.bf16.mxu0 0
        %2285 = vmatpush1.bf16.msra.mxu0 0
        %2286 = vmatprep.subr.bf16.mxu0 0
        %2287 = vmatpush1.bf16.msra.mxu0 0
        %2288 = vmatprep.subr.bf16.mxu0 0
        %2289 = vmatpush1.bf16.msra.mxu0 0
        %2290 = vmatprep.subr.bf16.mxu0 0
        %2291 = vmatpush1.bf16.msra.mxu0 0
        %2292 = vmatprep.subr.bf16.mxu0 0
        %2293 = vmatpush1.bf16.msra.mxu0 0
        %2294 = vmatprep.subr.bf16.mxu0 0
        %2295 = vmatpush1.bf16.msra.mxu0 0
        %2296 = vmatprep.subr.bf16.mxu0 0
        %2297 = vmatpush1.bf16.msra.mxu0 %v2265
        %2298 = vmatprep.subr.bf16.mxu0 0
        %2299 = vmatpush1.bf16.msra.mxu0 %v2264
        %2300 = vmatprep.subr.bf16.mxu0 0
        %2301 = vmatpush2.bf16.msra.mxu0 0
        %2302 = vmatprep.subr.bf16.mxu0 0
        %2303 = vmatpush2.bf16.msra.mxu0 0
        %2304 = vmatprep.subr.bf16.mxu0 0
        %2305 = vmatpush2.bf16.msra.mxu0 0
        %2306 = vmatprep.subr.bf16.mxu0 0
        %2307 = vmatpush2.bf16.msra.mxu0 0
        %2308 = vmatprep.subr.bf16.mxu0 0
        %2309 = vmatpush2.bf16.msra.mxu0 0
        %2310 = vmatprep.subr.bf16.mxu0 0
        %2311 = vmatpush2.bf16.msra.mxu0 0
        %2312 = vmatprep.subr.bf16.mxu0 0
        %2313 = vmatpush2.bf16.msra.mxu0 0
        %2314 = vmatprep.subr.bf16.mxu0 0
        %2315 = vmatpush2.bf16.msra.mxu0 0
        %2316 = vmatprep.mubr.bf16.mxu0 0
        %2317 = vmatmul.mubr.bf16.gmra.mxu0 %v2268
        %v2318 = vpop.f32.mrf.mxu0
        %v2319 = vadd.f32 %v2254, %v2318
        %v2320 = vpop.f32.mrf.mxu0
        %v2321 = vpop.f32.mrf.mxu0
        %v2322 = vadd.f32 %v2254, %v2321
        %v2323 = vpop.f32.mrf.mxu0
        %2324 = vmatprep.mubr.bf16.mxu0 0
        %2325 = vmatmul.mubr.bf16.gmra.mxu0 %v2270
        %v2326 = vpop.f32.mrf.mxu0
        %v2327 = vadd.f32 %v2254, %v2326
        %v2328 = vpop.f32.mrf.mxu0
        %v2329 = vpop.f32.mrf.mxu0
        %v2330 = vadd.f32 %v2254, %v2329
        %v2331 = vpop.f32.mrf.mxu0
        %2332 = vmatprep.mubr.bf16.mxu0 0
        %2333 = vmatmul.mubr.bf16.gmra.mxu0 %v2272
        %v2334 = vpop.f32.mrf.mxu0
        %v2335 = vadd.f32 %v2254, %v2334
        %v2336 = vpop.f32.mrf.mxu0
        %v2337 = vpop.f32.mrf.mxu0
        %v2338 = vadd.f32 %v2254, %v2337
        %v2339 = vpop.f32.mrf.mxu0
        %2340 = vmatprep.mubr.bf16.mxu0 0
        %2341 = vmatmul.mubr.bf16.gmra.mxu0 %v2274
        %v2342 = vpop.f32.mrf.mxu0
        %v2343 = vadd.f32 %v2254, %v2342
        %v2344 = vpop.f32.mrf.mxu0
        %v2345 = vpop.f32.mrf.mxu0
        %v2346 = vadd.f32 %v2254, %v2345
        %v2347 = vpop.f32.mrf.mxu0
        %2348 = vmatprep.mubr.bf16.mxu0 0
        %2349 = vmatmul.mubr.bf16.gmra.mxu0 %v2276
        %v2350 = vpop.f32.mrf.mxu0
        %v2351 = vadd.f32 %v2254, %v2350
        %v2352 = vpop.f32.mrf.mxu0
        %v2353 = vpop.f32.mrf.mxu0
        %v2354 = vadd.f32 %v2254, %v2353
        %v2355 = vpop.f32.mrf.mxu0
        %2356 = vmatprep.mubr.bf16.mxu0 0
        %2357 = vmatmul.mubr.bf16.gmra.mxu0 %v2278
        %v2358 = vpop.f32.mrf.mxu0
        %v2359 = vadd.f32 %v2254, %v2358
        %v2360 = vpop.f32.mrf.mxu0
        %v2361 = vpop.f32.mrf.mxu0
        %v2362 = vadd.f32 %v2254, %v2361
        %v2363 = vpop.f32.mrf.mxu0
        %2364 = vmatprep.mubr.bf16.mxu0 0
        %2365 = vmatmul.mubr.bf16.gmra.mxu0 %v2280
        %v2366 = vpop.f32.mrf.mxu0
        %v2367 = vadd.f32 %v2254, %v2366
        %v2368 = vpop.f32.mrf.mxu0
        %v2369 = vpop.f32.mrf.mxu0
        %v2370 = vadd.f32 %v2254, %v2369
        %v2371 = vpop.f32.mrf.mxu0
        %2372 = vmatprep.mubr.bf16.mxu0 0
        %2373 = vmatmul.mubr.bf16.gmra.mxu0 %v2282
        %v2374 = vpop.f32.mrf.mxu0
        %v2375 = vadd.f32 %v2254, %v2374
        %v2376 = vpop.f32.mrf.mxu0
        %v2377 = vpop.f32.mrf.mxu0
        %v2378 = vadd.f32 %v2254, %v2377
        %v2379 = vpop.f32.mrf.mxu0
        %2380 = vdwg.mxu0
        %v2381 = vpack.c.bf16 %v2080, %v2079
        %v2382 = vpack.c.bf16 %v2082, %v2081
        %v2383 = vpack.c.bf16 %v2084, %v2083
        %v2384 = vpack.c.bf16 %v2086, %v2085
        %v2385 = vpack.c.bf16 %v2088, %v2087
        %v2386 = vpack.c.bf16 %v2090, %v2089
        %v2387 = vpack.c.bf16 %v2092, %v2091
        %v2388 = vpack.c.bf16 %v2094, %v2093
        %v2389 = vpack.c.bf16 %v2322, %v2319
        %v2390 = vpack.c.bf16 %v2330, %v2327
        %v2391 = vpack.c.bf16 %v2338, %v2335
        %v2392 = vpack.c.bf16 %v2346, %v2343
        %v2393 = vpack.c.bf16 %v2354, %v2351
        %v2394 = vpack.c.bf16 %v2362, %v2359
        %v2395 = vpack.c.bf16 %v2370, %v2367
        %v2396 = vpack.c.bf16 %v2378, %v2375
        %v2401 = vunpack.c.l.b16 %v2063
        %v2402 = vunpack.c.l.b16 %v2064
        %v2403 = vunpack.c.l.b16 %v2065
        %v2404 = vunpack.c.l.b16 %v2066
        %v2405 = vpack.c.b16 %v2402, %v2401
        %v2406 = vpack.c.b16 %v2404, %v2403
        %v2410 = vsel %vm602, %v2389, 0
        %v2413 = vsel %vm602, %v2390, 0
        %v2416 = vsel %vm602, %v2391, 0
        %v2419 = vsel %vm602, %v2392, 0
        %v2422 = vsel %vm602, %v2393, 0
        %v2425 = vsel %vm602, %v2394, 0
        %v2428 = vsel %vm602, %v2395, 0
        %v2431 = vsel %vm602, %v2396, 0
        %2433 = vmatprep.subr.bf16.mxu0 0
        %2434 = vmatpush1.bf16.msra.mxu0 0
        %2435 = vmatprep.subr.bf16.mxu0 0
        %2436 = vmatpush1.bf16.msra.mxu0 0
        %2437 = vmatprep.subr.bf16.mxu0 0
        %2438 = vmatpush1.bf16.msra.mxu0 0
        %2439 = vmatprep.subr.bf16.mxu0 0
        %2440 = vmatpush1.bf16.msra.mxu0 0
        %2441 = vmatprep.subr.bf16.mxu0 0
        %2442 = vmatpush1.bf16.msra.mxu0 0
        %2443 = vmatprep.subr.bf16.mxu0 0
        %2444 = vmatpush1.bf16.msra.mxu0 0
        %2445 = vmatprep.subr.bf16.mxu0 0
        %2446 = vmatpush1.bf16.msra.mxu0 %v2406
        %2447 = vmatprep.subr.bf16.mxu0 0
        %2448 = vmatpush1.bf16.msra.mxu0 %v2405
        %2449 = vmatprep.subr.bf16.mxu0 0
        %2450 = vmatpush2.bf16.msra.mxu0 0
        %2451 = vmatprep.subr.bf16.mxu0 0
        %2452 = vmatpush2.bf16.msra.mxu0 0
        %2453 = vmatprep.subr.bf16.mxu0 0
        %2454 = vmatpush2.bf16.msra.mxu0 0
        %2455 = vmatprep.subr.bf16.mxu0 0
        %2456 = vmatpush2.bf16.msra.mxu0 0
        %2457 = vmatprep.subr.bf16.mxu0 0
        %2458 = vmatpush2.bf16.msra.mxu0 0
        %2459 = vmatprep.subr.bf16.mxu0 0
        %2460 = vmatpush2.bf16.msra.mxu0 0
        %2461 = vmatprep.subr.bf16.mxu0 0
        %2462 = vmatpush2.bf16.msra.mxu0 0
        %2463 = vmatprep.subr.bf16.mxu0 0
        %2464 = vmatpush2.bf16.msra.mxu0 0
        %2465 = vmatprep.mubr.bf16.mxu0 0
        %2466 = vmatmul.mubr.bf16.gmra.mxu0 %v2410
        %v2467 = vpop.f32.mrf.mxu0
        %v2468 = vadd.f32 0.0, %v2467
        %v2469 = vpop.f32.mrf.mxu0
        %v2470 = vpop.f32.mrf.mxu0
        %v2471 = vadd.f32 0.0, %v2470
        %v2472 = vpop.f32.mrf.mxu0
        %2473 = vmatprep.mubr.bf16.mxu0 0
        %2474 = vmatmul.mubr.bf16.gmra.mxu0 %v2413
        %v2475 = vpop.f32.mrf.mxu0
        %v2476 = vadd.f32 0.0, %v2475
        %v2477 = vpop.f32.mrf.mxu0
        %v2478 = vpop.f32.mrf.mxu0
        %v2479 = vadd.f32 0.0, %v2478
        %v2480 = vpop.f32.mrf.mxu0
        %2481 = vmatprep.mubr.bf16.mxu0 0
        %2482 = vmatmul.mubr.bf16.gmra.mxu0 %v2416
        %v2483 = vpop.f32.mrf.mxu0
        %v2484 = vadd.f32 0.0, %v2483
        %v2485 = vpop.f32.mrf.mxu0
        %v2486 = vpop.f32.mrf.mxu0
        %v2487 = vadd.f32 0.0, %v2486
        %v2488 = vpop.f32.mrf.mxu0
        %2489 = vmatprep.mubr.bf16.mxu0 0
        %2490 = vmatmul.mubr.bf16.gmra.mxu0 %v2419
        %v2491 = vpop.f32.mrf.mxu0
        %v2492 = vadd.f32 0.0, %v2491
        %v2493 = vpop.f32.mrf.mxu0
        %v2494 = vpop.f32.mrf.mxu0
        %v2495 = vadd.f32 0.0, %v2494
        %v2496 = vpop.f32.mrf.mxu0
        %2497 = vmatprep.mubr.bf16.mxu0 0
        %2498 = vmatmul.mubr.bf16.gmra.mxu0 %v2422
        %v2499 = vpop.f32.mrf.mxu0
        %v2500 = vadd.f32 0.0, %v2499
        %v2501 = vpop.f32.mrf.mxu0
        %v2502 = vpop.f32.mrf.mxu0
        %v2503 = vadd.f32 0.0, %v2502
        %v2504 = vpop.f32.mrf.mxu0
        %2505 = vmatprep.mubr.bf16.mxu0 0
        %2506 = vmatmul.mubr.bf16.gmra.mxu0 %v2425
        %v2507 = vpop.f32.mrf.mxu0
        %v2508 = vadd.f32 0.0, %v2507
        %v2509 = vpop.f32.mrf.mxu0
        %v2510 = vpop.f32.mrf.mxu0
        %v2511 = vadd.f32 0.0, %v2510
        %v2512 = vpop.f32.mrf.mxu0
        %2513 = vmatprep.mubr.bf16.mxu0 0
        %2514 = vmatmul.mubr.bf16.gmra.mxu0 %v2428
        %v2515 = vpop.f32.mrf.mxu0
        %v2516 = vadd.f32 0.0, %v2515
        %v2517 = vpop.f32.mrf.mxu0
        %v2518 = vpop.f32.mrf.mxu0
        %v2519 = vadd.f32 0.0, %v2518
        %v2520 = vpop.f32.mrf.mxu0
        %2521 = vmatprep.mubr.bf16.mxu0 0
        %2522 = vmatmul.mubr.bf16.gmra.mxu0 %v2431
        %v2523 = vpop.f32.mrf.mxu0
        %v2524 = vadd.f32 0.0, %v2523
        %v2525 = vpop.f32.mrf.mxu0
        %v2526 = vpop.f32.mrf.mxu0
        %v2527 = vadd.f32 0.0, %v2526
        %v2528 = vpop.f32.mrf.mxu0
        %2529 = vdwg.mxu0
        %v2534 = vunpack.c.l.b16 %v2059
        %v2535 = vunpack.c.l.b16 %v2060
        %v2536 = vunpack.c.l.b16 %v2061
        %v2537 = vunpack.c.l.b16 %v2062
        %v2538 = vpack.c.b16 %v2535, %v2534
        %v2539 = vpack.c.b16 %v2537, %v2536
        %v2543 = vsel %vm602, %v2381, 0
        %v2546 = vsel %vm602, %v2382, 0
        %v2549 = vsel %vm602, %v2383, 0
        %v2552 = vsel %vm602, %v2384, 0
        %v2555 = vsel %vm602, %v2385, 0
        %v2558 = vsel %vm602, %v2386, 0
        %v2561 = vsel %vm602, %v2387, 0
        %v2564 = vsel %vm602, %v2388, 0
        %2566 = vmatprep.subr.bf16.mxu0 0
        %2567 = vmatpush1.bf16.msra.mxu0 0
        %2568 = vmatprep.subr.bf16.mxu0 0
        %2569 = vmatpush1.bf16.msra.mxu0 0
        %2570 = vmatprep.subr.bf16.mxu0 0
        %2571 = vmatpush1.bf16.msra.mxu0 0
        %2572 = vmatprep.subr.bf16.mxu0 0
        %2573 = vmatpush1.bf16.msra.mxu0 0
        %2574 = vmatprep.subr.bf16.mxu0 0
        %2575 = vmatpush1.bf16.msra.mxu0 0
        %2576 = vmatprep.subr.bf16.mxu0 0
        %2577 = vmatpush1.bf16.msra.mxu0 0
        %2578 = vmatprep.subr.bf16.mxu0 0
        %2579 = vmatpush1.bf16.msra.mxu0 %v2539
        %2580 = vmatprep.subr.bf16.mxu0 0
        %2581 = vmatpush1.bf16.msra.mxu0 %v2538
        %2582 = vmatprep.subr.bf16.mxu0 0
        %2583 = vmatpush2.bf16.msra.mxu0 0
        %2584 = vmatprep.subr.bf16.mxu0 0
        %2585 = vmatpush2.bf16.msra.mxu0 0
        %2586 = vmatprep.subr.bf16.mxu0 0
        %2587 = vmatpush2.bf16.msra.mxu0 0
        %2588 = vmatprep.subr.bf16.mxu0 0
        %2589 = vmatpush2.bf16.msra.mxu0 0
        %2590 = vmatprep.subr.bf16.mxu0 0
        %2591 = vmatpush2.bf16.msra.mxu0 0
        %2592 = vmatprep.subr.bf16.mxu0 0
        %2593 = vmatpush2.bf16.msra.mxu0 0
        %2594 = vmatprep.subr.bf16.mxu0 0
        %2595 = vmatpush2.bf16.msra.mxu0 0
        %2596 = vmatprep.subr.bf16.mxu0 0
        %2597 = vmatpush2.bf16.msra.mxu0 0
        %2598 = vmatprep.mubr.bf16.mxu0 0
        %2599 = vmatmul.mubr.bf16.gmra.mxu0 %v2543
        %v2600 = vpop.f32.mrf.mxu0
        %v2601 = vadd.f32 %v2468, %v2600
        %v2602 = vpop.f32.mrf.mxu0
        %v2603 = vpop.f32.mrf.mxu0
        %v2604 = vadd.f32 %v2471, %v2603
        %v2605 = vpop.f32.mrf.mxu0
        %2606 = vmatprep.mubr.bf16.mxu0 0
        %2607 = vmatmul.mubr.bf16.gmra.mxu0 %v2546
        %v2608 = vpop.f32.mrf.mxu0
        %v2609 = vadd.f32 %v2476, %v2608
        %v2610 = vpop.f32.mrf.mxu0
        %v2611 = vpop.f32.mrf.mxu0
        %v2612 = vadd.f32 %v2479, %v2611
        %v2613 = vpop.f32.mrf.mxu0
        %2614 = vmatprep.mubr.bf16.mxu0 0
        %2615 = vmatmul.mubr.bf16.gmra.mxu0 %v2549
        %v2616 = vpop.f32.mrf.mxu0
        %v2617 = vadd.f32 %v2484, %v2616
        %v2618 = vpop.f32.mrf.mxu0
        %v2619 = vpop.f32.mrf.mxu0
        %v2620 = vadd.f32 %v2487, %v2619
        %v2621 = vpop.f32.mrf.mxu0
        %2622 = vmatprep.mubr.bf16.mxu0 0
        %2623 = vmatmul.mubr.bf16.gmra.mxu0 %v2552
        %v2624 = vpop.f32.mrf.mxu0
        %v2625 = vadd.f32 %v2492, %v2624
        %v2626 = vpop.f32.mrf.mxu0
        %v2627 = vpop.f32.mrf.mxu0
        %v2628 = vadd.f32 %v2495, %v2627
        %v2629 = vpop.f32.mrf.mxu0
        %2630 = vmatprep.mubr.bf16.mxu0 0
        %2631 = vmatmul.mubr.bf16.gmra.mxu0 %v2555
        %v2632 = vpop.f32.mrf.mxu0
        %v2633 = vadd.f32 %v2500, %v2632
        %v2634 = vpop.f32.mrf.mxu0
        %v2635 = vpop.f32.mrf.mxu0
        %v2636 = vadd.f32 %v2503, %v2635
        %v2637 = vpop.f32.mrf.mxu0
        %2638 = vmatprep.mubr.bf16.mxu0 0
        %2639 = vmatmul.mubr.bf16.gmra.mxu0 %v2558
        %v2640 = vpop.f32.mrf.mxu0
        %v2641 = vadd.f32 %v2508, %v2640
        %v2642 = vpop.f32.mrf.mxu0
        %v2643 = vpop.f32.mrf.mxu0
        %v2644 = vadd.f32 %v2511, %v2643
        %v2645 = vpop.f32.mrf.mxu0
        %2646 = vmatprep.mubr.bf16.mxu0 0
        %2647 = vmatmul.mubr.bf16.gmra.mxu0 %v2561
        %v2648 = vpop.f32.mrf.mxu0
        %v2649 = vadd.f32 %v2516, %v2648
        %v2650 = vpop.f32.mrf.mxu0
        %v2651 = vpop.f32.mrf.mxu0
        %v2652 = vadd.f32 %v2519, %v2651
        %v2653 = vpop.f32.mrf.mxu0
        %2654 = vmatprep.mubr.bf16.mxu0 0
        %2655 = vmatmul.mubr.bf16.gmra.mxu0 %v2564
        %v2656 = vpop.f32.mrf.mxu0
        %v2657 = vadd.f32 %v2524, %v2656
        %v2658 = vpop.f32.mrf.mxu0
        %v2659 = vpop.f32.mrf.mxu0
        %v2660 = vadd.f32 %v2527, %v2659
        %v2661 = vpop.f32.mrf.mxu0
        %2662 = vdwg.mxu0
        %v2664 = vlaneseq
        %v2665 = vshrl.u32 %v2664, 7
        %v2666 = vsub.s32 0, %v2665
        %v2667 = vrot.slane %v2067, %v2666
        %v2669 = vadd.f32 %v2601, %v2667
        %v2670 = vadd.f32 %v2604, %v2667
        %v2671 = vadd.f32 %v2609, %v2667
        %v2672 = vadd.f32 %v2612, %v2667
        %v2673 = vadd.f32 %v2617, %v2667
        %v2674 = vadd.f32 %v2620, %v2667
        %v2675 = vadd.f32 %v2625, %v2667
        %v2676 = vadd.f32 %v2628, %v2667
        %v2677 = vadd.f32 %v2633, %v2667
        %v2678 = vadd.f32 %v2636, %v2667
        %v2679 = vadd.f32 %v2641, %v2667
        %v2680 = vadd.f32 %v2644, %v2667
        %v2681 = vadd.f32 %v2649, %v2667
        %v2682 = vadd.f32 %v2652, %v2667
        %v2683 = vadd.f32 %v2657, %v2667
        %v2684 = vadd.f32 %v2660, %v2667
        %vm2685 = vcmask 523264
        %v2686 = vsel %vm2685, %v2669, 0.0
        %2687 = vadd.xlane.f32.xlu0 %v2686
        %v2688 = vpop.xlane.xlu0 %2687
        %v2689 = vsel %vm2685, %v2670, 0.0
        %2690 = vadd.xlane.f32.xlu0 %v2689
        %v2691 = vpop.xlane.xlu0 %2690
        %v2692 = vsel %vm2685, %v2671, 0.0
        %2693 = vadd.xlane.f32.xlu0 %v2692
        %v2694 = vpop.xlane.xlu0 %2693
        %v2695 = vsel %vm2685, %v2672, 0.0
        %2696 = vadd.xlane.f32.xlu0 %v2695
        %v2697 = vpop.xlane.xlu0 %2696
        %v2698 = vsel %vm2685, %v2673, 0.0
        %2699 = vadd.xlane.f32.xlu0 %v2698
        %v2700 = vpop.xlane.xlu0 %2699
        %v2701 = vsel %vm2685, %v2674, 0.0
        %2702 = vadd.xlane.f32.xlu0 %v2701
        %v2703 = vpop.xlane.xlu0 %2702
        %v2704 = vsel %vm2685, %v2675, 0.0
        %2705 = vadd.xlane.f32.xlu0 %v2704
        %v2706 = vpop.xlane.xlu0 %2705
        %v2707 = vsel %vm2685, %v2676, 0.0
        %2708 = vadd.xlane.f32.xlu0 %v2707
        %v2709 = vpop.xlane.xlu0 %2708
        %v2710 = vsel %vm2685, %v2677, 0.0
        %2711 = vadd.xlane.f32.xlu0 %v2710
        %v2712 = vpop.xlane.xlu0 %2711
        %v2713 = vsel %vm2685, %v2678, 0.0
        %2714 = vadd.xlane.f32.xlu0 %v2713
        %v2715 = vpop.xlane.xlu0 %2714
        %v2716 = vsel %vm2685, %v2679, 0.0
        %2717 = vadd.xlane.f32.xlu0 %v2716
        %v2718 = vpop.xlane.xlu0 %2717
        %v2719 = vsel %vm2685, %v2680, 0.0
        %2720 = vadd.xlane.f32.xlu0 %v2719
        %v2721 = vpop.xlane.xlu0 %2720
        %v2722 = vsel %vm2685, %v2681, 0.0
        %2723 = vadd.xlane.f32.xlu0 %v2722
        %v2724 = vpop.xlane.xlu0 %2723
        %v2725 = vsel %vm2685, %v2682, 0.0
        %2726 = vadd.xlane.f32.xlu0 %v2725
        %v2727 = vpop.xlane.xlu0 %2726
        %v2728 = vsel %vm2685, %v2683, 0.0
        %2729 = vadd.xlane.f32.xlu0 %v2728
        %v2730 = vpop.xlane.xlu0 %2729
        %v2731 = vsel %vm2685, %v2684, 0.0
        %2732 = vadd.xlane.f32.xlu0 %v2731
        %v2733 = vpop.xlane.xlu0 %2732
        %v2734 = vrcp.pop 64.0
        %v2735 = vmul.f32 %v2688, %v2734
        %v2736 = vmul.f32 %v2691, %v2734
        %v2737 = vmul.f32 %v2694, %v2734
        %v2738 = vmul.f32 %v2697, %v2734
        %v2739 = vmul.f32 %v2700, %v2734
        %v2740 = vmul.f32 %v2703, %v2734
        %v2741 = vmul.f32 %v2706, %v2734
        %v2742 = vmul.f32 %v2709, %v2734
        %v2743 = vmul.f32 %v2712, %v2734
        %v2744 = vmul.f32 %v2715, %v2734
        %v2745 = vmul.f32 %v2718, %v2734
        %v2746 = vmul.f32 %v2721, %v2734
        %v2747 = vmul.f32 %v2724, %v2734
        %v2748 = vmul.f32 %v2727, %v2734
        %v2749 = vmul.f32 %v2730, %v2734
        %v2750 = vmul.f32 %v2733, %v2734
        %v2751 = vsub.f32 %v2669, %v2735
        %v2752 = vsub.f32 %v2670, %v2736
        %v2753 = vsub.f32 %v2671, %v2737
        %v2754 = vsub.f32 %v2672, %v2738
        %v2755 = vsub.f32 %v2673, %v2739
        %v2756 = vsub.f32 %v2674, %v2740
        %v2757 = vsub.f32 %v2675, %v2741
        %v2758 = vsub.f32 %v2676, %v2742
        %v2759 = vsub.f32 %v2677, %v2743
        %v2760 = vsub.f32 %v2678, %v2744
        %v2761 = vsub.f32 %v2679, %v2745
        %v2762 = vsub.f32 %v2680, %v2746
        %v2763 = vsub.f32 %v2681, %v2747
        %v2764 = vsub.f32 %v2682, %v2748
        %v2765 = vsub.f32 %v2683, %v2749
        %v2766 = vsub.f32 %v2684, %v2750
        %v2767 = vmul.f32 %v2751, %v2751
        %v2768 = vmul.f32 %v2752, %v2752
        %v2769 = vmul.f32 %v2753, %v2753
        %v2770 = vmul.f32 %v2754, %v2754
        %v2771 = vmul.f32 %v2755, %v2755
        %v2772 = vmul.f32 %v2756, %v2756
        %v2773 = vmul.f32 %v2757, %v2757
        %v2774 = vmul.f32 %v2758, %v2758
        %v2775 = vmul.f32 %v2759, %v2759
        %v2776 = vmul.f32 %v2760, %v2760
        %v2777 = vmul.f32 %v2761, %v2761
        %v2778 = vmul.f32 %v2762, %v2762
        %v2779 = vmul.f32 %v2763, %v2763
        %v2780 = vmul.f32 %v2764, %v2764
        %v2781 = vmul.f32 %v2765, %v2765
        %v2782 = vmul.f32 %v2766, %v2766
        %v2783 = vsel %vm2685, %v2767, 0.0
        %2784 = vadd.xlane.f32.xlu0 %v2783
        %v2785 = vpop.xlane.xlu0 %2784
        %v2786 = vsel %vm2685, %v2768, 0.0
        %2787 = vadd.xlane.f32.xlu0 %v2786
        %v2788 = vpop.xlane.xlu0 %2787
        %v2789 = vsel %vm2685, %v2769, 0.0
        %2790 = vadd.xlane.f32.xlu0 %v2789
        %v2791 = vpop.xlane.xlu0 %2790
        %v2792 = vsel %vm2685, %v2770, 0.0
        %2793 = vadd.xlane.f32.xlu0 %v2792
        %v2794 = vpop.xlane.xlu0 %2793
        %v2795 = vsel %vm2685, %v2771, 0.0
        %2796 = vadd.xlane.f32.xlu0 %v2795
        %v2797 = vpop.xlane.xlu0 %2796
        %v2798 = vsel %vm2685, %v2772, 0.0
        %2799 = vadd.xlane.f32.xlu0 %v2798
        %v2800 = vpop.xlane.xlu0 %2799
        %v2801 = vsel %vm2685, %v2773, 0.0
        %2802 = vadd.xlane.f32.xlu0 %v2801
        %v2803 = vpop.xlane.xlu0 %2802
        %v2804 = vsel %vm2685, %v2774, 0.0
        %2805 = vadd.xlane.f32.xlu0 %v2804
        %v2806 = vpop.xlane.xlu0 %2805
        %v2807 = vsel %vm2685, %v2775, 0.0
        %2808 = vadd.xlane.f32.xlu0 %v2807
        %v2809 = vpop.xlane.xlu0 %2808
        %v2810 = vsel %vm2685, %v2776, 0.0
        %2811 = vadd.xlane.f32.xlu0 %v2810
        %v2812 = vpop.xlane.xlu0 %2811
        %v2813 = vsel %vm2685, %v2777, 0.0
        %2814 = vadd.xlane.f32.xlu0 %v2813
        %v2815 = vpop.xlane.xlu0 %2814
        %v2816 = vsel %vm2685, %v2778, 0.0
        %2817 = vadd.xlane.f32.xlu0 %v2816
        %v2818 = vpop.xlane.xlu0 %2817
        %v2819 = vsel %vm2685, %v2779, 0.0
        %2820 = vadd.xlane.f32.xlu0 %v2819
        %v2821 = vpop.xlane.xlu0 %2820
        %v2822 = vsel %vm2685, %v2780, 0.0
        %2823 = vadd.xlane.f32.xlu0 %v2822
        %v2824 = vpop.xlane.xlu0 %2823
        %v2825 = vsel %vm2685, %v2781, 0.0
        %2826 = vadd.xlane.f32.xlu0 %v2825
        %v2827 = vpop.xlane.xlu0 %2826
        %v2828 = vsel %vm2685, %v2782, 0.0
        %2829 = vadd.xlane.f32.xlu0 %v2828
        %v2830 = vpop.xlane.xlu0 %2829
        %v2831 = vmul.f32 %v2785, %v2734
        %v2832 = vmul.f32 %v2788, %v2734
        %v2833 = vmul.f32 %v2791, %v2734
        %v2834 = vmul.f32 %v2794, %v2734
        %v2835 = vmul.f32 %v2797, %v2734
        %v2836 = vmul.f32 %v2800, %v2734
        %v2837 = vmul.f32 %v2803, %v2734
        %v2838 = vmul.f32 %v2806, %v2734
        %v2839 = vmul.f32 %v2809, %v2734
        %v2840 = vmul.f32 %v2812, %v2734
        %v2841 = vmul.f32 %v2815, %v2734
        %v2842 = vmul.f32 %v2818, %v2734
        %v2843 = vmul.f32 %v2821, %v2734
        %v2844 = vmul.f32 %v2824, %v2734
        %v2845 = vmul.f32 %v2827, %v2734
        %v2846 = vmul.f32 %v2830, %v2734
        %v2847 = vadd.f32 %v2831, 1e-05
        %v2848 = vadd.f32 %v2832, 1e-05
        %v2849 = vadd.f32 %v2833, 1e-05
        %v2850 = vadd.f32 %v2834, 1e-05
        %v2851 = vadd.f32 %v2835, 1e-05
        %v2852 = vadd.f32 %v2836, 1e-05
        %v2853 = vadd.f32 %v2837, 1e-05
        %v2854 = vadd.f32 %v2838, 1e-05
        %v2855 = vadd.f32 %v2839, 1e-05
        %v2856 = vadd.f32 %v2840, 1e-05
        %v2857 = vadd.f32 %v2841, 1e-05
        %v2858 = vadd.f32 %v2842, 1e-05
        %v2859 = vadd.f32 %v2843, 1e-05
        %v2860 = vadd.f32 %v2844, 1e-05
        %v2861 = vadd.f32 %v2845, 1e-05
        %v2862 = vadd.f32 %v2846, 1e-05
        %v2863 = vrsqrt.pop %v2847
        %v2864 = vrsqrt.pop %v2848
        %v2865 = vrsqrt.pop %v2849
        %v2866 = vrsqrt.pop %v2850
        %v2867 = vrsqrt.pop %v2851
        %v2868 = vrsqrt.pop %v2852
        %v2869 = vrsqrt.pop %v2853
        %v2870 = vrsqrt.pop %v2854
        %v2871 = vrsqrt.pop %v2855
        %v2872 = vrsqrt.pop %v2856
        %v2873 = vrsqrt.pop %v2857
        %v2874 = vrsqrt.pop %v2858
        %v2875 = vrsqrt.pop %v2859
        %v2876 = vrsqrt.pop %v2860
        %v2877 = vrsqrt.pop %v2861
        %v2878 = vrsqrt.pop %v2862
        %v2879 = vmul.f32 %v2751, %v2863
        %v2880 = vmul.f32 %v2752, %v2864
        %v2881 = vmul.f32 %v2753, %v2865
        %v2882 = vmul.f32 %v2754, %v2866
        %v2883 = vmul.f32 %v2755, %v2867
        %v2884 = vmul.f32 %v2756, %v2868
        %v2885 = vmul.f32 %v2757, %v2869
        %v2886 = vmul.f32 %v2758, %v2870
        %v2887 = vmul.f32 %v2759, %v2871
        %v2888 = vmul.f32 %v2760, %v2872
        %v2889 = vmul.f32 %v2761, %v2873
        %v2890 = vmul.f32 %v2762, %v2874
        %v2891 = vmul.f32 %v2763, %v2875
        %v2892 = vmul.f32 %v2764, %v2876
        %v2893 = vmul.f32 %v2765, %v2877
        %v2894 = vmul.f32 %v2766, %v2878
        %v2896 = vlaneseq
        %v2897 = vshrl.u32 %v2896, 7
        %v2898 = vsub.s32 0, %v2897
        %v2899 = vrot.slane %v2068, %v2898
        %v2901 = vmul.f32 %v2879, %v2899
        %v2902 = vmul.f32 %v2880, %v2899
        %v2903 = vmul.f32 %v2881, %v2899
        %v2904 = vmul.f32 %v2882, %v2899
        %v2905 = vmul.f32 %v2883, %v2899
        %v2906 = vmul.f32 %v2884, %v2899
        %v2907 = vmul.f32 %v2885, %v2899
        %v2908 = vmul.f32 %v2886, %v2899
        %v2909 = vmul.f32 %v2887, %v2899
        %v2910 = vmul.f32 %v2888, %v2899
        %v2911 = vmul.f32 %v2889, %v2899
        %v2912 = vmul.f32 %v2890, %v2899
        %v2913 = vmul.f32 %v2891, %v2899
        %v2914 = vmul.f32 %v2892, %v2899
        %v2915 = vmul.f32 %v2893, %v2899
        %v2916 = vmul.f32 %v2894, %v2899
        %v2918 = vlaneseq
        %v2919 = vshrl.u32 %v2918, 7
        %v2920 = vsub.s32 0, %v2919
        %v2921 = vrot.slane %v2069, %v2920
        %v2923 = vadd.f32 %v2901, %v2921
        %v2924 = vadd.f32 %v2902, %v2921
        %v2925 = vadd.f32 %v2903, %v2921
        %v2926 = vadd.f32 %v2904, %v2921
        %v2927 = vadd.f32 %v2905, %v2921
        %v2928 = vadd.f32 %v2906, %v2921
        %v2929 = vadd.f32 %v2907, %v2921
        %v2930 = vadd.f32 %v2908, %v2921
        %v2931 = vadd.f32 %v2909, %v2921
        %v2932 = vadd.f32 %v2910, %v2921
        %v2933 = vadd.f32 %v2911, %v2921
        %v2934 = vadd.f32 %v2912, %v2921
        %v2935 = vadd.f32 %v2913, %v2921
        %v2936 = vadd.f32 %v2914, %v2921
        %v2937 = vadd.f32 %v2915, %v2921
        %v2938 = vadd.f32 %v2916, %v2921
        %v2939 = vmul.f32 %v2923, 0.5
        %v2940 = vmul.f32 %v2924, 0.5
        %v2941 = vmul.f32 %v2925, 0.5
        %v2942 = vmul.f32 %v2926, 0.5
        %v2943 = vmul.f32 %v2927, 0.5
        %v2944 = vmul.f32 %v2928, 0.5
        %v2945 = vmul.f32 %v2929, 0.5
        %v2946 = vmul.f32 %v2930, 0.5
        %v2947 = vmul.f32 %v2931, 0.5
        %v2948 = vmul.f32 %v2932, 0.5
        %v2949 = vmul.f32 %v2933, 0.5
        %v2950 = vmul.f32 %v2934, 0.5
        %v2951 = vmul.f32 %v2935, 0.5
        %v2952 = vmul.f32 %v2936, 0.5
        %v2953 = vmul.f32 %v2937, 0.5
        %v2954 = vmul.f32 %v2938, 0.5
        %v2955 = vmul.f32 %v2923, 0.70710677
        %v2956 = vmul.f32 %v2924, 0.70710677
        %v2957 = vmul.f32 %v2925, 0.70710677
        %v2958 = vmul.f32 %v2926, 0.70710677
        %v2959 = vmul.f32 %v2927, 0.70710677
        %v2960 = vmul.f32 %v2928, 0.70710677
        %v2961 = vmul.f32 %v2929, 0.70710677
        %v2962 = vmul.f32 %v2930, 0.70710677
        %v2963 = vmul.f32 %v2931, 0.70710677
        %v2964 = vmul.f32 %v2932, 0.70710677
        %v2965 = vmul.f32 %v2933, 0.70710677
        %v2966 = vmul.f32 %v2934, 0.70710677
        %v2967 = vmul.f32 %v2935, 0.70710677
        %v2968 = vmul.f32 %v2936, 0.70710677
        %v2969 = vmul.f32 %v2937, 0.70710677
        %v2970 = vmul.f32 %v2938, 0.70710677
        %v2971 = verf.f32.pop %v2955
        %v2972 = verf.f32.pop %v2956
        %v2973 = verf.f32.pop %v2957
        %v2974 = verf.f32.pop %v2958
        %v2975 = verf.f32.pop %v2959
        %v2976 = verf.f32.pop %v2960
        %v2977 = verf.f32.pop %v2961
        %v2978 = verf.f32.pop %v2962
        %v2979 = verf.f32.pop %v2963
        %v2980 = verf.f32.pop %v2964
        %v2981 = verf.f32.pop %v2965
        %v2982 = verf.f32.pop %v2966
        %v2983 = verf.f32.pop %v2967
        %v2984 = verf.f32.pop %v2968
        %v2985 = verf.f32.pop %v2969
        %v2986 = verf.f32.pop %v2970
        %v2987 = vadd.f32 %v2971, 1.0
        %v2988 = vadd.f32 %v2972, 1.0
        %v2989 = vadd.f32 %v2973, 1.0
        %v2990 = vadd.f32 %v2974, 1.0
        %v2991 = vadd.f32 %v2975, 1.0
        %v2992 = vadd.f32 %v2976, 1.0
        %v2993 = vadd.f32 %v2977, 1.0
        %v2994 = vadd.f32 %v2978, 1.0
        %v2995 = vadd.f32 %v2979, 1.0
        %v2996 = vadd.f32 %v2980, 1.0
        %v2997 = vadd.f32 %v2981, 1.0
        %v2998 = vadd.f32 %v2982, 1.0
        %v2999 = vadd.f32 %v2983, 1.0
        %v3000 = vadd.f32 %v2984, 1.0
        %v3001 = vadd.f32 %v2985, 1.0
        %v3002 = vadd.f32 %v2986, 1.0
        %v3003 = vmul.f32 %v2939, %v2987
        %v3004 = vmul.f32 %v2940, %v2988
        %v3005 = vmul.f32 %v2941, %v2989
        %v3006 = vmul.f32 %v2942, %v2990
        %v3007 = vmul.f32 %v2943, %v2991
        %v3008 = vmul.f32 %v2944, %v2992
        %v3009 = vmul.f32 %v2945, %v2993
        %v3010 = vmul.f32 %v2946, %v2994
        %v3011 = vmul.f32 %v2947, %v2995
        %v3012 = vmul.f32 %v2948, %v2996
        %v3013 = vmul.f32 %v2949, %v2997
        %v3014 = vmul.f32 %v2950, %v2998
        %v3015 = vmul.f32 %v2951, %v2999
        %v3016 = vmul.f32 %v2952, %v3000
        %v3017 = vmul.f32 %v2953, %v3001
        %v3018 = vmul.f32 %v2954, %v3002
        %v3019 = vpack.c.bf16 %v3004, %v3003
        %v3020 = vpack.c.bf16 %v3006, %v3005
        %v3021 = vpack.c.bf16 %v3008, %v3007
        %v3022 = vpack.c.bf16 %v3010, %v3009
        %v3023 = vpack.c.bf16 %v3012, %v3011
        %v3024 = vpack.c.bf16 %v3014, %v3013
        %v3025 = vpack.c.bf16 %v3016, %v3015
        %v3026 = vpack.c.bf16 %v3018, %v3017
        %v3028 = vlaneseq
        %v3029 = vshrl.u32 %v3028, 7
        %v3030 = vsub.s32 0, %v3029
        %v3031 = vrot.slane %v2078, %v3030
        %v3041 = vunpack.c.l.b16 %v2070
        %v3042 = vunpack.c.l.b16 %v2071
        %v3043 = vunpack.c.l.b16 %v2072
        %v3044 = vunpack.c.l.b16 %v2073
        %v3045 = vunpack.c.l.b16 %v2074
        %v3046 = vunpack.c.l.b16 %v2075
        %v3047 = vunpack.c.l.b16 %v2076
        %v3048 = vunpack.c.l.b16 %v2077
        %v3049 = vpack.c.b16 %v3042, %v3041
        %v3050 = vpack.c.b16 %v3044, %v3043
        %v3051 = vpack.c.b16 %v3046, %v3045
        %v3052 = vpack.c.b16 %v3048, %v3047
        %v3058 = vsel %vm2685, %v3019, 0
        %v3061 = vsel %vm2685, %v3020, 0
        %v3064 = vsel %vm2685, %v3021, 0
        %v3067 = vsel %vm2685, %v3022, 0
        %v3070 = vsel %vm2685, %v3023, 0
        %v3073 = vsel %vm2685, %v3024, 0
        %v3076 = vsel %vm2685, %v3025, 0
        %v3079 = vsel %vm2685, %v3026, 0
        %3081 = vmatprep.subr.bf16.mxu0 0
        %3082 = vmatpush1.bf16.msra.mxu0 0
        %3083 = vmatprep.subr.bf16.mxu0 0
        %3084 = vmatpush1.bf16.msra.mxu0 0
        %3085 = vmatprep.subr.bf16.mxu0 0
        %3086 = vmatpush1.bf16.msra.mxu0 0
        %3087 = vmatprep.subr.bf16.mxu0 0
        %3088 = vmatpush1.bf16.msra.mxu0 0
        %3089 = vmatprep.subr.bf16.mxu0 0
        %3090 = vmatpush1.bf16.msra.mxu0 %v3052
        %3091 = vmatprep.subr.bf16.mxu0 0
        %3092 = vmatpush1.bf16.msra.mxu0 %v3051
        %3093 = vmatprep.subr.bf16.mxu0 0
        %3094 = vmatpush1.bf16.msra.mxu0 %v3050
        %3095 = vmatprep.subr.bf16.mxu0 0
        %3096 = vmatpush1.bf16.msra.mxu0 %v3049
        %3097 = vmatprep.subr.bf16.mxu0 0
        %3098 = vmatpush2.bf16.msra.mxu0 0
        %3099 = vmatprep.subr.bf16.mxu0 0
        %3100 = vmatpush2.bf16.msra.mxu0 0
        %3101 = vmatprep.subr.bf16.mxu0 0
        %3102 = vmatpush2.bf16.msra.mxu0 0
        %3103 = vmatprep.subr.bf16.mxu0 0
        %3104 = vmatpush2.bf16.msra.mxu0 0
        %3105 = vmatprep.subr.bf16.mxu0 0
        %3106 = vmatpush2.bf16.msra.mxu0 0
        %3107 = vmatprep.subr.bf16.mxu0 0
        %3108 = vmatpush2.bf16.msra.mxu0 0
        %3109 = vmatprep.subr.bf16.mxu0 0
        %3110 = vmatpush2.bf16.msra.mxu0 0
        %3111 = vmatprep.subr.bf16.mxu0 0
        %3112 = vmatpush2.bf16.msra.mxu0 0
        %3113 = vmatprep.mubr.bf16.mxu0 0
        %3114 = vmatmul.mubr.bf16.gmra.mxu0 %v3058
        %v3115 = vpop.f32.mrf.mxu0
        %v3116 = vadd.f32 %v3031, %v3115
        %v3117 = vpop.f32.mrf.mxu0
        %v3118 = vpop.f32.mrf.mxu0
        %v3119 = vadd.f32 %v3031, %v3118
        %v3120 = vpop.f32.mrf.mxu0
        %3121 = vmatprep.mubr.bf16.mxu0 0
        %3122 = vmatmul.mubr.bf16.gmra.mxu0 %v3061
        %v3123 = vpop.f32.mrf.mxu0
        %v3124 = vadd.f32 %v3031, %v3123
        %v3125 = vpop.f32.mrf.mxu0
        %v3126 = vpop.f32.mrf.mxu0
        %v3127 = vadd.f32 %v3031, %v3126
        %v3128 = vpop.f32.mrf.mxu0
        %3129 = vmatprep.mubr.bf16.mxu0 0
        %3130 = vmatmul.mubr.bf16.gmra.mxu0 %v3064
        %v3131 = vpop.f32.mrf.mxu0
        %v3132 = vadd.f32 %v3031, %v3131
        %v3133 = vpop.f32.mrf.mxu0
        %v3134 = vpop.f32.mrf.mxu0
        %v3135 = vadd.f32 %v3031, %v3134
        %v3136 = vpop.f32.mrf.mxu0
        %3137 = vmatprep.mubr.bf16.mxu0 0
        %3138 = vmatmul.mubr.bf16.gmra.mxu0 %v3067
        %v3139 = vpop.f32.mrf.mxu0
        %v3140 = vadd.f32 %v3031, %v3139
        %v3141 = vpop.f32.mrf.mxu0
        %v3142 = vpop.f32.mrf.mxu0
        %v3143 = vadd.f32 %v3031, %v3142
        %v3144 = vpop.f32.mrf.mxu0
        %3145 = vmatprep.mubr.bf16.mxu0 0
        %3146 = vmatmul.mubr.bf16.gmra.mxu0 %v3070
        %v3147 = vpop.f32.mrf.mxu0
        %v3148 = vadd.f32 %v3031, %v3147
        %v3149 = vpop.f32.mrf.mxu0
        %v3150 = vpop.f32.mrf.mxu0
        %v3151 = vadd.f32 %v3031, %v3150
        %v3152 = vpop.f32.mrf.mxu0
        %3153 = vmatprep.mubr.bf16.mxu0 0
        %3154 = vmatmul.mubr.bf16.gmra.mxu0 %v3073
        %v3155 = vpop.f32.mrf.mxu0
        %v3156 = vadd.f32 %v3031, %v3155
        %v3157 = vpop.f32.mrf.mxu0
        %v3158 = vpop.f32.mrf.mxu0
        %v3159 = vadd.f32 %v3031, %v3158
        %v3160 = vpop.f32.mrf.mxu0
        %3161 = vmatprep.mubr.bf16.mxu0 0
        %3162 = vmatmul.mubr.bf16.gmra.mxu0 %v3076
        %v3163 = vpop.f32.mrf.mxu0
        %v3164 = vadd.f32 %v3031, %v3163
        %v3165 = vpop.f32.mrf.mxu0
        %v3166 = vpop.f32.mrf.mxu0
        %v3167 = vadd.f32 %v3031, %v3166
        %v3168 = vpop.f32.mrf.mxu0
        %3169 = vmatprep.mubr.bf16.mxu0 0
        %3170 = vmatmul.mubr.bf16.gmra.mxu0 %v3079
        %v3171 = vpop.f32.mrf.mxu0
        %v3172 = vadd.f32 %v3031, %v3171
        %v3173 = vpop.f32.mrf.mxu0
        %v3174 = vpop.f32.mrf.mxu0
        %v3175 = vadd.f32 %v3031, %v3174
        %v3176 = vpop.f32.mrf.mxu0
        %3177 = vdwg.mxu0
        %v3178 = vadd.f32 %v2079, %v3116
        %v3179 = vadd.f32 %v2080, %v3119
        %v3180 = vadd.f32 %v2081, %v3124
        %v3181 = vadd.f32 %v2082, %v3127
        %v3182 = vadd.f32 %v2083, %v3132
        %v3183 = vadd.f32 %v2084, %v3135
        %v3184 = vadd.f32 %v2085, %v3140
        %v3185 = vadd.f32 %v2086, %v3143
        %v3186 = vadd.f32 %v2087, %v3148
        %v3187 = vadd.f32 %v2088, %v3151
        %v3188 = vadd.f32 %v2089, %v3156
        %v3189 = vadd.f32 %v2090, %v3159
        %v3190 = vadd.f32 %v2091, %v3164
        %v3191 = vadd.f32 %v2092, %v3167
        %v3192 = vadd.f32 %v2093, %v3172
        %v3193 = vadd.f32 %v2094, %v3175
        %3194 = vst.msk [vmem:[%s553] sm:$0xff] %vm602, %v3178
        %3195 = vst.msk [vmem:[%s553 + $0x8] sm:$0xff] %vm602, %v3179
        %3196 = vst.msk [vmem:[%s553 + $0x10] sm:$0xff] %vm602, %v3180
        %3197 = vst.msk [vmem:[%s553 + $0x18] sm:$0xff] %vm602, %v3181
        %3198 = vst.msk [vmem:[%s553 + $0x20] sm:$0xff] %vm602, %v3182
        %3199 = vst.msk [vmem:[%s553 + $0x28] sm:$0xff] %vm602, %v3183
        %3200 = vst.msk [vmem:[%s553 + $0x30] sm:$0xff] %vm602, %v3184
        %3201 = vst.msk [vmem:[%s553 + $0x38] sm:$0xff] %vm602, %v3185
        %3202 = vst.msk [vmem:[%s553 + $0x40] sm:$0xff] %vm602, %v3186
        %3203 = vst.msk [vmem:[%s553 + $0x48] sm:$0xff] %vm602, %v3187
        %3204 = vst.msk [vmem:[%s553 + $0x50] sm:$0xff] %vm602, %v3188
        %3205 = vst.msk [vmem:[%s553 + $0x58] sm:$0xff] %vm602, %v3189
        %3206 = vst.msk [vmem:[%s553 + $0x60] sm:$0xff] %vm602, %v3190
        %3207 = vst.msk [vmem:[%s553 + $0x68] sm:$0xff] %vm602, %v3191
        %3208 = vst.msk [vmem:[%s553 + $0x70] sm:$0xff] %vm602, %v3192
        %3209 = vst.msk [vmem:[%s553 + $0x78] sm:$0xff] %vm602, %v3193
      $region80: #{tpu_custom_call.1} parent=75 // pred_fallthru
        _
      %p3210 = scmp.lt.s32.totalorder %s29, 3
      %s3211 = scalar_select %p3210, %s29, 3
      %s3212 = smul.addr %s3211, 16
      %s3213 = smul.addr %s3212, 8
      %s3214 = scalar_lea.vmem %s14, %s3213
      // Predicated region
      $region81: #{tpu_custom_call.1} parent=75 // pred_check
        %p3215 = pneg %p374
      $region82: #{tpu_custom_call.1} parent=75 // pred_check_branch
        %3217 = sbr.rel (%p3215) target = $region84
      $region83: #{tpu_custom_call.1} parent=75 // pred_region
        _
      $region84: #{tpu_custom_call.1} parent=75 // pred_fallthru
        _
    $region76: #{tpu_custom_call.1} parent=5 // pred_fallthru
      _
    %p3218 = scmp.le.s32.totalorder 2, %s20
    // Predicated region
    $region85: #{tpu_custom_call.1} parent=5 // pred_check
      %p3219 = pneg %p3218
    $region86: #{tpu_custom_call.1} parent=5 // pred_check_branch
      %3221 = sbr.rel (%p3219) target = $region88
    $region87: #{tpu_custom_call.1} parent=5 // pred_region
      %s3222 = ssub.s32 %s20, 2
      // Predicated region
      $region89: #{tpu_custom_call.1} parent=87 // pred_check
        %p3223 = pneg %p380
      $region90: #{tpu_custom_call.1} parent=87 // pred_check_branch
        %3225 = sbr.rel (%p3223) target = $region92
      $region91: #{tpu_custom_call.1} parent=87 // pred_region
        %p3226 = scmp.lt.s32.totalorder %s31, 3
        %s3227 = scalar_select %p3226, %s31, 3
        %s3228 = smul.addr %s3227, 16
        %s3229 = smul.addr %s3228, 8
        %s3230 = scalar_lea.vmem %s14, %s3229
      $region92: #{tpu_custom_call.1} parent=87 // pred_fallthru
        _
    $region88: #{tpu_custom_call.1} parent=5 // pred_fallthru
      _
  $region6: #{tpu_custom_call.1} parent=0 // loop_footer
    %s24 = sadd.s32 1, %s20
  $region7: #{tpu_custom_call.1} parent=0 // loop_footer_branch
    %19 = sbr.rel target = $region3
  $region8: #{tpu_custom_call.1} parent=0 // loop_exit
    _

</llo_original>
